<compile_context>
chip_gen: v7x
topology: tpu7x:2x2x1
jax: 0.10.0
libtpu: 0.0.40
codegen_flags: <defaults>
</compile_context>

<pallas_src>
import functools

import jax
import jax.numpy as jnp
from jax.experimental import pallas as pl
from jax.experimental.pallas import tpu as pltpu


def _stn_kernel(z_ref, img_ref, out_ref, *, H_in, W_in, H_out, W_out, inverse):
    f32 = jnp.float32
    K = H_in * W_in        # flattened input spatial size
    J = H_out * W_out      # flattened output spatial size

    # --- per-sample affine params, vectorized over the BN batch block ------
    y = z_ref[:, 0:1].astype(f32) * 2.0 - 1.0      # (BN, 1)
    x = z_ref[:, 1:2].astype(f32) * 2.0 - 1.0
    h = z_ref[:, 2:3].astype(f32)
    w = z_ref[:, 3:4].astype(f32)
    if inverse:
        # theta_full = [[w,0,x],[0,h,y],[0,0,1]]; first 2 rows of its inverse.
        # NOTE: assumes h != 0 and w != 0 (same requirement as torch .inverse()).
        sx = 1.0 / w
        tx = -x / w
        sy = 1.0 / h
        ty = -y / h
    else:
        sx, tx, sy, ty = w, x, h, y
    sx = sx[:, :, None]; tx = tx[:, :, None]       # (BN, 1, 1)
    sy = sy[:, :, None]; ty = ty[:, :, None]

    # --- flattened-index helpers, built once per grid step -----------------
    rows = jax.lax.broadcasted_iota(jnp.int32, (K, 1), 0).astype(f32)  # (K,1)
    cols = jax.lax.broadcasted_iota(jnp.int32, (1, J), 1).astype(f32)  # (1,J)
    # Decompose flat indices with a float floor-divide (exact for these sizes).
    hi = jnp.floor((rows + 0.5) * (1.0 / W_in))    # (K,1) input row index
    wi = rows - hi * float(W_in)                   # (K,1) input col index
    ho = jnp.floor((cols + 0.5) * (1.0 / W_out))   # (1,J) output row index
    wo = cols - ho * float(W_out)                  # (1,J) output col index

    # affine_grid(align_corners=True): base coords are linspace(-1, 1, size).
    yden = float(max(H_out - 1, 1))
    xden = float(max(W_out - 1, 1))
    ybase = -1.0 + 2.0 * ho / yden                 # (1, J)
    xbase = -1.0 + 2.0 * wo / xden                 # (1, J)

    # grid_sample(align_corners=True, padding_mode='border'):
    #   src = clamp((g + 1)/2 * (size_in - 1), 0, size_in - 1)
    iy = (sy * ybase[None] + ty + 1.0) * (0.5 * (H_in - 1))   # (BN, 1, J)
    ix = (sx * xbase[None] + tx + 1.0) * (0.5 * (W_in - 1))   # (BN, 1, J)
    iy = jnp.clip(iy, 0.0, float(H_in - 1))
    ix = jnp.clip(ix, 0.0, float(W_in - 1))

    # Separable bilinear tent weights combined into one sampling matrix:
    #   Wk[n, (hi,wi), (ho,wo)] = max(0,1-|iy-hi|) * max(0,1-|ix-wi|)
    wy = jnp.maximum(0.0, 1.0 - jnp.abs(iy - hi[None]))       # (BN, K, J)
    wx = jnp.maximum(0.0, 1.0 - jnp.abs(ix - wi[None]))       # (BN, K, J)
    wk = wy * wx                                              # (BN, K, J)

    # --- one batched MXU matmul for all channels of the whole block --------
    img = img_ref[...].astype(f32)                            # (BN, C, K)
    out = jax.lax.dot_general(
        img, wk, (((2,), (1,)), ((0,), (0,))),
        preferred_element_type=jnp.float32)                   # (BN, C, J)
    out_ref[...] = out.astype(out_ref.dtype)


def stn_pallas(image, z_where, object_shape, inverse=False, block_n=8):
    """Pallas STN forward. image: [N,C,H,W], z_where: [N,4] -> [N, C*Ho*Wo]."""
    N, C, H_in, W_in = image.shape
    H_out, W_out = object_shape
    K, J = H_in * W_in, H_out * W_out

    # Block over batch. BLOCK_N is a multiple of 8 so the (BN, 4) z_where
    # block satisfies the sublane rule; pad N up to a multiple of BLOCK_N.
    # (Keep the default modest so VMEM stays small even on v5e / v7x; larger
    # blocks amortize per-step overhead further for big N.)
    bn = max(8, ((int(block_n) + 7) // 8) * 8)
    n_pad = ((N + bn - 1) // bn) * bn

    img_flat = image.reshape(N, C, K)              # contiguous -> no copy
    zw = z_where.astype(jnp.float32)
    if n_pad != N:
        pad = n_pad - N
        img_flat = jnp.concatenate(
            [img_flat, jnp.zeros((pad, C, K), img_flat.dtype)], axis=0)
        # Dummy boxes with h = w = 1 so inverse mode never divides by zero.
        z_fill = jnp.tile(jnp.array([[0.5, 0.5, 1.0, 1.0]], jnp.float32),
                          (pad, 1))
        zw = jnp.concatenate([zw, z_fill], axis=0)

    kernel = functools.partial(
        _stn_kernel, H_in=H_in, W_in=W_in, H_out=H_out, W_out=W_out,
        inverse=inverse)

    out = pl.pallas_call(
        kernel,
        out_shape=jax.ShapeDtypeStruct((n_pad, C, J), image.dtype),
        grid=(n_pad // bn,),
        in_specs=[
            pl.BlockSpec((bn, 4), lambda b: (b, 0)),        # z_where (VMEM)
            pl.BlockSpec((bn, C, K), lambda b: (b, 0, 0)),  # flattened image
        ],
        out_specs=pl.BlockSpec((bn, C, J), lambda b: (b, 0, 0)),
        compiler_params=pltpu.CompilerParams(
            dimension_semantics=("parallel",)),
    )(zw, img_flat)

    return out[:N].reshape(N, C * J)


def stn_reference(image, z_where, object_shape, inverse=False):
    """Pure-JAX gather-based reference (mirrors torch affine_grid+grid_sample)."""
    N, C, H_in, W_in = image.shape
    H_out, W_out = object_shape
    y = z_where[:, 0] * 2.0 - 1.0
    x = z_where[:, 1] * 2.0 - 1.0
    h = z_where[:, 2]
    w = z_where[:, 3]
    if inverse:
        sx, tx = 1.0 / w, -x / w
        sy, ty = 1.0 / h, -y / h
    else:
        sx, tx, sy, ty = w, x, h, y
    xbase = jnp.linspace(-1.0, 1.0, W_out)
    ybase = jnp.linspace(-1.0, 1.0, H_out)
    gx = sx[:, None] * xbase[None, :] + tx[:, None]
    gy = sy[:, None] * ybase[None, :] + ty[:, None]
    ix = jnp.clip((gx + 1.0) * 0.5 * (W_in - 1), 0.0, W_in - 1.0)
    iy = jnp.clip((gy + 1.0) * 0.5 * (H_in - 1), 0.0, H_in - 1.0)
    x0 = jnp.floor(ix); x1 = jnp.minimum(x0 + 1.0, W_in - 1.0)
    y0 = jnp.floor(iy); y1 = jnp.minimum(y0 + 1.0, H_in - 1.0)
    wx1 = ix - x0; wx0 = 1.0 - wx1
    wy1 = iy - y0; wy0 = 1.0 - wy1
    x0i, x1i = x0.astype(jnp.int32), x1.astype(jnp.int32)
    y0i, y1i = y0.astype(jnp.int32), y1.astype(jnp.int32)

    outs = []
    for n in range(N):
        img = image[n]  # (C, H, W)

        def pick(yi, xi):
            return img[:, yi[:, None], xi[None, :]]  # (C, H_out, W_out)

        v = (pick(y0i[n], x0i[n]) * (wy0[n][:, None] * wx0[n][None, :])
             + pick(y0i[n], x1i[n]) * (wy0[n][:, None] * wx1[n][None, :])
             + pick(y1i[n], x0i[n]) * (wy1[n][:, None] * wx0[n][None, :])
             + pick(y1i[n], x1i[n]) * (wy1[n][:, None] * wx1[n][None, :]))
        outs.append(v)
    return jnp.stack(outs).reshape(N, -1)


if __name__ == "__main__":
    # NOTE: STN has no learned parameters; only its input shapes matter.
    key = jax.random.PRNGKey(0)
    k_img, k_pos, k_size = jax.random.split(key, 3)

    N, C, H, W = 2, 4, 16, 16
    object_shape = (8, 8)

    image = jax.random.normal(k_img, (N, C, H, W), dtype=jnp.float32)
    pos = jax.random.uniform(k_pos, (N, 2), minval=0.2, maxval=0.8)    # y, x
    size = jax.random.uniform(k_size, (N, 2), minval=0.3, maxval=0.9)  # h, w
    z_where = jnp.concatenate([pos, size], axis=-1).astype(jnp.float32)

    for inverse in (False, True):
        out = stn_pallas(image, z_where, object_shape, inverse=inverse)
        out = jax.block_until_ready(out)
        ref = stn_reference(image, z_where, object_shape, inverse=inverse)
        assert out.shape == (N, C * object_shape[0] * object_shape[1])
        max_err = float(jnp.max(jnp.abs(out - ref)))
        assert max_err < 1e-4, f"mismatch (inverse={inverse}): max err {max_err}"

    print("KERNEL_OK")
</pallas_src>

<mosaic_0001>
module attributes {stable_mosaic.version = 11 : i64} {
  func.func @_stn_kernel(%arg0: i32, %arg1: memref<8x4xf32, #tpu.memory_space<vmem>>, %arg2: memref<8x4x256xf32, #tpu.memory_space<vmem>>, %arg3: memref<8x4x64xf32, #tpu.memory_space<vmem>>) attributes {dimension_semantics = [#tpu.dimension_semantics<parallel>], iteration_bounds = array<i64: 1>, scalar_prefetch = 0 : i64, scratch_operands = 0 : i64, tpu.core_type = #tpu.core_type<tc>, window_params = [{transform_indices = @transform_0, window_bounds = array<i64: 8, 4>}, {transform_indices = @transform_1, window_bounds = array<i64: 8, 4, 256>}, {transform_indices = @transform_2, window_bounds = array<i64: 8, 4, 64>}]} {
    %c0 = arith.constant 0 : index
    %c0_0 = arith.constant 0 : index
    %0 = vector.load %arg1[%c0, %c0_0] : memref<8x4xf32, #tpu.memory_space<vmem>>, vector<8x1xf32>
    %cst = arith.constant 2.000000e+00 : f32
    %1 = vector.broadcast %cst : f32 to vector<8x1xf32>
    %2 = arith.mulf %0, %1 : vector<8x1xf32>
    %cst_1 = arith.constant 1.000000e+00 : f32
    %3 = vector.broadcast %cst_1 : f32 to vector<8x1xf32>
    %4 = arith.subf %2, %3 : vector<8x1xf32>
    %c0_2 = arith.constant 0 : index
    %c1 = arith.constant 1 : index
    %5 = vector.load %arg1[%c0_2, %c1] : memref<8x4xf32, #tpu.memory_space<vmem>>, vector<8x1xf32>
    %cst_3 = arith.constant 2.000000e+00 : f32
    %6 = vector.broadcast %cst_3 : f32 to vector<8x1xf32>
    %7 = arith.mulf %5, %6 : vector<8x1xf32>
    %cst_4 = arith.constant 1.000000e+00 : f32
    %8 = vector.broadcast %cst_4 : f32 to vector<8x1xf32>
    %9 = arith.subf %7, %8 : vector<8x1xf32>
    %c0_5 = arith.constant 0 : index
    %c2 = arith.constant 2 : index
    %10 = vector.load %arg1[%c0_5, %c2] : memref<8x4xf32, #tpu.memory_space<vmem>>, vector<8x1xf32>
    %c0_6 = arith.constant 0 : index
    %c3 = arith.constant 3 : index
    %11 = vector.load %arg1[%c0_6, %c3] : memref<8x4xf32, #tpu.memory_space<vmem>>, vector<8x1xf32>
    %12 = vector.shape_cast %11 : vector<8x1xf32> to vector<8x1x1xf32>
    %13 = vector.shape_cast %9 : vector<8x1xf32> to vector<8x1x1xf32>
    %14 = vector.shape_cast %10 : vector<8x1xf32> to vector<8x1x1xf32>
    %15 = vector.shape_cast %4 : vector<8x1xf32> to vector<8x1x1xf32>
    %16 = tpu.iota {dimensions = array<i32: 0>} : vector<256x1xi32>
    %17 = arith.sitofp %16 : vector<256x1xi32> to vector<256x1xf32>
    %18 = tpu.iota {dimensions = array<i32: 1>} : vector<1x64xi32>
    %19 = arith.sitofp %18 : vector<1x64xi32> to vector<1x64xf32>
    %cst_7 = arith.constant 5.000000e-01 : f32
    %20 = vector.broadcast %cst_7 : f32 to vector<256x1xf32>
    %21 = arith.addf %17, %20 : vector<256x1xf32>
    %cst_8 = arith.constant 6.250000e-02 : f32
    %22 = vector.broadcast %cst_8 : f32 to vector<256x1xf32>
    %23 = arith.mulf %21, %22 : vector<256x1xf32>
    %24 = math.floor %23 : vector<256x1xf32>
    %cst_9 = arith.constant 1.600000e+01 : f32
    %25 = vector.broadcast %cst_9 : f32 to vector<256x1xf32>
    %26 = arith.mulf %24, %25 : vector<256x1xf32>
    %27 = arith.subf %17, %26 : vector<256x1xf32>
    %cst_10 = arith.constant 5.000000e-01 : f32
    %28 = vector.broadcast %cst_10 : f32 to vector<1x64xf32>
    %29 = arith.addf %19, %28 : vector<1x64xf32>
    %cst_11 = arith.constant 1.250000e-01 : f32
    %30 = vector.broadcast %cst_11 : f32 to vector<1x64xf32>
    %31 = arith.mulf %29, %30 : vector<1x64xf32>
    %32 = math.floor %31 : vector<1x64xf32>
    %cst_12 = arith.constant 8.000000e+00 : f32
    %33 = vector.broadcast %cst_12 : f32 to vector<1x64xf32>
    %34 = arith.mulf %32, %33 : vector<1x64xf32>
    %35 = arith.subf %19, %34 : vector<1x64xf32>
    %cst_13 = arith.constant 2.000000e+00 : f32
    %36 = vector.broadcast %cst_13 : f32 to vector<1x64xf32>
    %37 = arith.mulf %36, %32 : vector<1x64xf32>
    %cst_14 = arith.constant 7.000000e+00 : f32
    %38 = vector.broadcast %cst_14 : f32 to vector<1x64xf32>
    %39 = arith.divf %37, %38 : vector<1x64xf32>
    %cst_15 = arith.constant -1.000000e+00 : f32
    %40 = vector.broadcast %cst_15 : f32 to vector<1x64xf32>
    %41 = arith.addf %40, %39 : vector<1x64xf32>
    %cst_16 = arith.constant 2.000000e+00 : f32
    %42 = vector.broadcast %cst_16 : f32 to vector<1x64xf32>
    %43 = arith.mulf %42, %35 : vector<1x64xf32>
    %cst_17 = arith.constant 7.000000e+00 : f32
    %44 = vector.broadcast %cst_17 : f32 to vector<1x64xf32>
    %45 = arith.divf %43, %44 : vector<1x64xf32>
    %cst_18 = arith.constant -1.000000e+00 : f32
    %46 = vector.broadcast %cst_18 : f32 to vector<1x64xf32>
    %47 = arith.addf %46, %45 : vector<1x64xf32>
    %48 = vector.shape_cast %41 : vector<1x64xf32> to vector<1x1x64xf32>
    %49 = vector.broadcast %14 : vector<8x1x1xf32> to vector<8x1x64xf32>
    %50 = vector.broadcast %48 : vector<1x1x64xf32> to vector<8x1x64xf32>
    %51 = arith.mulf %49, %50 : vector<8x1x64xf32>
    %52 = vector.broadcast %15 : vector<8x1x1xf32> to vector<8x1x64xf32>
    %53 = arith.addf %51, %52 : vector<8x1x64xf32>
    %cst_19 = arith.constant 1.000000e+00 : f32
    %54 = vector.broadcast %cst_19 : f32 to vector<8x1x64xf32>
    %55 = arith.addf %53, %54 : vector<8x1x64xf32>
    %cst_20 = arith.constant 7.500000e+00 : f32
    %56 = vector.broadcast %cst_20 : f32 to vector<8x1x64xf32>
    %57 = arith.mulf %55, %56 : vector<8x1x64xf32>
    %58 = vector.shape_cast %47 : vector<1x64xf32> to vector<1x1x64xf32>
    %59 = vector.broadcast %12 : vector<8x1x1xf32> to vector<8x1x64xf32>
    %60 = vector.broadcast %58 : vector<1x1x64xf32> to vector<8x1x64xf32>
    %61 = arith.mulf %59, %60 : vector<8x1x64xf32>
    %62 = vector.broadcast %13 : vector<8x1x1xf32> to vector<8x1x64xf32>
    %63 = arith.addf %61, %62 : vector<8x1x64xf32>
    %cst_21 = arith.constant 1.000000e+00 : f32
    %64 = vector.broadcast %cst_21 : f32 to vector<8x1x64xf32>
    %65 = arith.addf %63, %64 : vector<8x1x64xf32>
    %cst_22 = arith.constant 7.500000e+00 : f32
    %66 = vector.broadcast %cst_22 : f32 to vector<8x1x64xf32>
    %67 = arith.mulf %65, %66 : vector<8x1x64xf32>
    %cst_23 = arith.constant 0.000000e+00 : f32
    %cst_24 = arith.constant 1.500000e+01 : f32
    %68 = vector.broadcast %cst_23 : f32 to vector<8x1x64xf32>
    %69 = arith.maximumf %68, %57 : vector<8x1x64xf32>
    %70 = vector.broadcast %cst_24 : f32 to vector<8x1x64xf32>
    %71 = arith.minimumf %70, %69 : vector<8x1x64xf32>
    %cst_25 = arith.constant 0.000000e+00 : f32
    %cst_26 = arith.constant 1.500000e+01 : f32
    %72 = vector.broadcast %cst_25 : f32 to vector<8x1x64xf32>
    %73 = arith.maximumf %72, %67 : vector<8x1x64xf32>
    %74 = vector.broadcast %cst_26 : f32 to vector<8x1x64xf32>
    %75 = arith.minimumf %74, %73 : vector<8x1x64xf32>
    %76 = vector.shape_cast %24 : vector<256x1xf32> to vector<1x256x1xf32>
    %77 = vector.broadcast %71 : vector<8x1x64xf32> to vector<8x256x64xf32>
    %78 = vector.broadcast %76 : vector<1x256x1xf32> to vector<8x256x64xf32>
    %79 = arith.subf %77, %78 : vector<8x256x64xf32>
    %80 = math.absf %79 : vector<8x256x64xf32>
    %cst_27 = arith.constant 1.000000e+00 : f32
    %81 = vector.broadcast %cst_27 : f32 to vector<8x256x64xf32>
    %82 = arith.subf %81, %80 : vector<8x256x64xf32>
    %cst_28 = arith.constant 0.000000e+00 : f32
    %83 = vector.broadcast %cst_28 : f32 to vector<8x256x64xf32>
    %84 = arith.maximumf %83, %82 : vector<8x256x64xf32>
    %85 = vector.shape_cast %27 : vector<256x1xf32> to vector<1x256x1xf32>
    %86 = vector.broadcast %75 : vector<8x1x64xf32> to vector<8x256x64xf32>
    %87 = vector.broadcast %85 : vector<1x256x1xf32> to vector<8x256x64xf32>
    %88 = arith.subf %86, %87 : vector<8x256x64xf32>
    %89 = math.absf %88 : vector<8x256x64xf32>
    %cst_29 = arith.constant 1.000000e+00 : f32
    %90 = vector.broadcast %cst_29 : f32 to vector<8x256x64xf32>
    %91 = arith.subf %90, %89 : vector<8x256x64xf32>
    %cst_30 = arith.constant 0.000000e+00 : f32
    %92 = vector.broadcast %cst_30 : f32 to vector<8x256x64xf32>
    %93 = arith.maximumf %92, %91 : vector<8x256x64xf32>
    %94 = arith.mulf %84, %93 : vector<8x256x64xf32>
    %c0_31 = arith.constant 0 : index
    %c0_32 = arith.constant 0 : index
    %c0_33 = arith.constant 0 : index
    %95 = vector.load %arg2[%c0_31, %c0_32, %c0_33] : memref<8x4x256xf32, #tpu.memory_space<vmem>>, vector<8x4x256xf32>
    %cst_34 = arith.constant dense<0.000000e+00> : vector<8x4x64xf32>
    %96 = tpu.matmul %95, %94, %cst_34 {dimension_numbers = #tpu.dot_dimension_numbers<[2], [1], [1], [2], [0, 0, 0, 1, 1, 2], [0], [0]>} : vector<8x4x256xf32>, vector<8x256x64xf32>, vector<8x4x64xf32> -> vector<8x4x64xf32>
    %c0_35 = arith.constant 0 : index
    %c0_36 = arith.constant 0 : index
    %c0_37 = arith.constant 0 : index
    %97 = vector.load %arg3[%c0_35, %c0_36, %c0_37] : memref<8x4x64xf32, #tpu.memory_space<vmem>>, vector<8x4x64xf32>
    tpu.vector_store %arg3[%c0_35, %c0_36, %c0_37], %96 {strides = array<i32>} : memref<8x4x64xf32, #tpu.memory_space<vmem>>, vector<8x4x64xf32>,
    return
  }
  func.func @transform_0(%arg0: i32) -> (i32, i32) {
    %c0_i32 = arith.constant 0 : i32
    %c0_i32_0 = arith.constant 0 : i32
    return %arg0, %c0_i32 : i32, i32
  }
  func.func @transform_1(%arg0: i32) -> (i32, i32, i32) {
    %c0_i32 = arith.constant 0 : i32
    %c0_i32_0 = arith.constant 0 : i32
    %c0_i32_1 = arith.constant 0 : i32
    return %arg0, %c0_i32, %c0_i32_0 : i32, i32, i32
  }
  func.func @transform_2(%arg0: i32) -> (i32, i32, i32) {
    %c0_i32 = arith.constant 0 : i32
    %c0_i32_0 = arith.constant 0 : i32
    %c0_i32_1 = arith.constant 0 : i32
    return %arg0, %c0_i32, %c0_i32_0 : i32, i32, i32
  }
}

</mosaic_0001>

<llo_original>
// kernel: tpu_custom_call.1
$region0: #{tpu_custom_call.1}
  #allocation0 [shape = 'u32[]', space=smem, size = 0x4, offset = 0x4, fixed_abs, tag = 'smem constant byte address 0x4 - core index']
  #allocation1 [shape = 'u32[144,128]{1,0:T(1,128)}', space=vmem, size = 0x12000, scoped, tag = 'internal scratch']
  %s0 = inlined_call_operand.vmem [shape: f32[8,4], index: 0, kind: input, shape index: {}]
  %s1 = inlined_call_operand.hbm [shape: f32[8,4,256], index: 1, kind: input, shape index: {}]
  %s2 = inlined_call_operand.hbm [shape: f32[8,4,64], index: 2, kind: output, shape index: {}]
  %s3 = sld [smem:[#allocation0]]
  $region22: #{tpu_custom_call.1} parent=0
    _
  %s5 = ssub.s32 1, %s3
  %s6 = scalar_select 0, %s5, %s3
  $region1: #{tpu_custom_call.1} parent=0
    #allocation2 [shape = 'u8[32768]{0}', space=vmem, size = 0x8000, scoped, tag = 'input window, operand 1, single buffered']
    #allocation3 [shape = 's32[1]{0}', space=sflag, size = 0x4, scoped, tag = 'scoped memory for tpu_custom_call.1']
    #allocation4 [shape = 's32[1]{0}', space=sflag, size = 0x4, scoped, tag = 'scoped memory for tpu_custom_call.1']
    #allocation5 [shape = 'u8[16384]{0}', space=vmem, size = 0x4000, scoped, tag = 'output window, operand 0, single buffered']
    %7 = vsyncpa [#allocation3], 0
    %8 = vsyncpa [#allocation4], 0
    // Predicated region
    $region2: #{tpu_custom_call.1} parent=1 // pred_check
      _
    $region3: #{tpu_custom_call.1} parent=1 // pred_check_branch
      %10 = sbr.rel (0) target = $region5
    $region4: #{tpu_custom_call.1} parent=1 // pred_region
      _
    $region5: #{tpu_custom_call.1} parent=1 // pred_fallthru
      _
    // Predicated region
    $region6: #{tpu_custom_call.1} parent=1 // pred_check
      _
    $region7: #{tpu_custom_call.1} parent=1 // pred_check_branch
      %12 = sbr.rel (0) target = $region9
    $region8: #{tpu_custom_call.1} parent=1 // pred_region
      %s14 = ssub.s32 1024, 1024
      %15 = vsyncadd [#allocation3], %s14
      %s16 = sshll.u32 [#allocation2], 4
      %s17 = int_to_ptr.vmem [resolvable:$true] %s16
      %22 = dma.hbm_to_vmem [thread:$0]  %s1, 1024, %s17, [#allocation3], 128, 128, 8
    $region9: #{tpu_custom_call.1} parent=1 // pred_fallthru
      _
    // Predicated region
    $region10: #{tpu_custom_call.1} parent=1 // pred_check
      _
    $region11: #{tpu_custom_call.1} parent=1 // pred_check_branch
      %24 = sbr.rel (0) target = $region13
    $region12: #{tpu_custom_call.1} parent=1 // pred_region
      %25 = dma.done [#allocation3], 1024
    $region13: #{tpu_custom_call.1} parent=1 // pred_fallthru
      _
    %v26 = vld [vmem:[%s0] sm:$0xff]
    %v27 = vmul.f32 %v26, 2.0
    %v28 = vsub.f32 %v27, 1.0
    %v30 = vcombine.high %v26, %v26
    %v32 = vunpack.c.l.s4 1966171168
    %v33 = vunpack.c.0.s8 %v32
    %v34 = vlaneseq
    %v35 = vshrl.u32 %v34, 7
    %v36 = vsub.s32 %v33, %v35
    %v37 = vrot.slane %v26, %v36
    %v39 = vunpack.c.l.s4 1966171168
    %v40 = vunpack.c.0.s8 %v39
    %v41 = vlaneseq
    %v42 = vshrl.u32 %v41, 7
    %v43 = vsub.s32 %v40, %v42
    %v44 = vrot.slane %v30, %v43
    %v45 = vcombine.high %v37, %v37
    %v46 = vcombine.high %v44, %v44
    %v48 = vunpack.c.l.s4 1966171168
    %v49 = vunpack.c.0.s8 %v48
    %v50 = vlaneseq
    %v51 = vshrl.u32 %v50, 7
    %v52 = vsub.s32 %v49, %v51
    %v53 = vrot.slane %v37, %v52
    %v55 = vunpack.c.l.s4 1966171168
    %v56 = vunpack.c.0.s8 %v55
    %v57 = vlaneseq
    %v58 = vshrl.u32 %v57, 7
    %v59 = vsub.s32 %v56, %v58
    %v60 = vrot.slane %v44, %v59
    %v62 = vunpack.c.l.s4 1966171168
    %v63 = vunpack.c.0.s8 %v62
    %v64 = vlaneseq
    %v65 = vshrl.u32 %v64, 7
    %v66 = vsub.s32 %v63, %v65
    %v67 = vrot.slane %v45, %v66
    %v69 = vunpack.c.l.s4 1966171168
    %v70 = vunpack.c.0.s8 %v69
    %v71 = vlaneseq
    %v72 = vshrl.u32 %v71, 7
    %v73 = vsub.s32 %v70, %v72
    %v74 = vrot.slane %v46, %v73
    %v75 = vcombine.high %v53, %v53
    %v76 = vcombine.high %v60, %v60
    %v77 = vcombine.high %v67, %v67
    %v78 = vcombine.high %v74, %v74
    %v80 = vcombine.high %v28, %v28
    %v82 = vunpack.c.l.s4 1966171168
    %v83 = vunpack.c.0.s8 %v82
    %v84 = vlaneseq
    %v85 = vshrl.u32 %v84, 7
    %v86 = vsub.s32 %v83, %v85
    %v87 = vrot.slane %v28, %v86
    %v89 = vunpack.c.l.s4 1966171168
    %v90 = vunpack.c.0.s8 %v89
    %v91 = vlaneseq
    %v92 = vshrl.u32 %v91, 7
    %v93 = vsub.s32 %v90, %v92
    %v94 = vrot.slane %v80, %v93
    %v95 = vcombine.high %v87, %v87
    %v96 = vcombine.high %v94, %v94
    %v98 = vunpack.c.l.s4 1966171168
    %v99 = vunpack.c.0.s8 %v98
    %v100 = vlaneseq
    %v101 = vshrl.u32 %v100, 7
    %v102 = vsub.s32 %v99, %v101
    %v103 = vrot.slane %v87, %v102
    %v105 = vunpack.c.l.s4 1966171168
    %v106 = vunpack.c.0.s8 %v105
    %v107 = vlaneseq
    %v108 = vshrl.u32 %v107, 7
    %v109 = vsub.s32 %v106, %v108
    %v110 = vrot.slane %v94, %v109
    %v112 = vunpack.c.l.s4 1966171168
    %v113 = vunpack.c.0.s8 %v112
    %v114 = vlaneseq
    %v115 = vshrl.u32 %v114, 7
    %v116 = vsub.s32 %v113, %v115
    %v117 = vrot.slane %v95, %v116
    %v119 = vunpack.c.l.s4 1966171168
    %v120 = vunpack.c.0.s8 %v119
    %v121 = vlaneseq
    %v122 = vshrl.u32 %v121, 7
    %v123 = vsub.s32 %v120, %v122
    %v124 = vrot.slane %v96, %v123
    %v125 = vcombine.high %v103, %v103
    %v126 = vcombine.high %v110, %v110
    %v127 = vcombine.high %v117, %v117
    %v128 = vcombine.high %v124, %v124
    %v129 = vlaneseq
    %v130 = vshrl.u32 %v129, 7
    %v131 = vadd.s32 %v130, 8
    %v132 = vadd.s32 %v130, 16
    %v133 = vadd.s32 %v130, 24
    %v134 = vadd.s32 %v130, 32
    %v135 = vadd.s32 %v130, 40
    %v136 = vadd.s32 %v130, 48
    %v137 = vadd.s32 %v130, 56
    %v138 = vadd.s32 %v130, 64
    %v139 = vadd.s32 %v130, 72
    %v140 = vadd.s32 %v130, 80
    %v141 = vadd.s32 %v130, 88
    %v142 = vadd.s32 %v130, 96
    %v143 = vadd.s32 %v130, 104
    %v144 = vadd.s32 %v130, 112
    %v145 = vadd.s32 %v130, 120
    %v146 = vadd.s32 %v130, 128
    %v147 = vadd.s32 %v130, 136
    %v148 = vadd.s32 %v130, 144
    %v149 = vadd.s32 %v130, 152
    %v150 = vadd.s32 %v130, 160
    %v151 = vadd.s32 %v130, 168
    %v152 = vadd.s32 %v130, 176
    %v153 = vadd.s32 %v130, 184
    %v154 = vadd.s32 %v130, 192
    %v155 = vadd.s32 %v130, 200
    %v156 = vadd.s32 %v130, 208
    %v157 = vadd.s32 %v130, 216
    %v158 = vadd.s32 %v130, 224
    %v159 = vadd.s32 %v130, 232
    %v160 = vadd.s32 %v130, 240
    %v161 = vadd.s32 %v130, 248
    %v162 = vcvt.s32.f32 %v130
    %v163 = vcvt.s32.f32 %v131
    %v164 = vcvt.s32.f32 %v132
    %v165 = vcvt.s32.f32 %v133
    %v166 = vcvt.s32.f32 %v134
    %v167 = vcvt.s32.f32 %v135
    %v168 = vcvt.s32.f32 %v136
    %v169 = vcvt.s32.f32 %v137
    %v170 = vcvt.s32.f32 %v138
    %v171 = vcvt.s32.f32 %v139
    %v172 = vcvt.s32.f32 %v140
    %v173 = vcvt.s32.f32 %v141
    %v174 = vcvt.s32.f32 %v142
    %v175 = vcvt.s32.f32 %v143
    %v176 = vcvt.s32.f32 %v144
    %v177 = vcvt.s32.f32 %v145
    %v178 = vcvt.s32.f32 %v146
    %v179 = vcvt.s32.f32 %v147
    %v180 = vcvt.s32.f32 %v148
    %v181 = vcvt.s32.f32 %v149
    %v182 = vcvt.s32.f32 %v150
    %v183 = vcvt.s32.f32 %v151
    %v184 = vcvt.s32.f32 %v152
    %v185 = vcvt.s32.f32 %v153
    %v186 = vcvt.s32.f32 %v154
    %v187 = vcvt.s32.f32 %v155
    %v188 = vcvt.s32.f32 %v156
    %v189 = vcvt.s32.f32 %v157
    %v190 = vcvt.s32.f32 %v158
    %v191 = vcvt.s32.f32 %v159
    %v192 = vcvt.s32.f32 %v160
    %v193 = vcvt.s32.f32 %v161
    %v194 = vlaneseq
    %v195 = vand.u32 %v194, 127
    %v196 = vcvt.s32.f32 %v195
    %v197 = vadd.f32 %v162, 0.5
    %v198 = vadd.f32 %v163, 0.5
    %v199 = vadd.f32 %v164, 0.5
    %v200 = vadd.f32 %v165, 0.5
    %v201 = vadd.f32 %v166, 0.5
    %v202 = vadd.f32 %v167, 0.5
    %v203 = vadd.f32 %v168, 0.5
    %v204 = vadd.f32 %v169, 0.5
    %v205 = vadd.f32 %v170, 0.5
    %v206 = vadd.f32 %v171, 0.5
    %v207 = vadd.f32 %v172, 0.5
    %v208 = vadd.f32 %v173, 0.5
    %v209 = vadd.f32 %v174, 0.5
    %v210 = vadd.f32 %v175, 0.5
    %v211 = vadd.f32 %v176, 0.5
    %v212 = vadd.f32 %v177, 0.5
    %v213 = vadd.f32 %v178, 0.5
    %v214 = vadd.f32 %v179, 0.5
    %v215 = vadd.f32 %v180, 0.5
    %v216 = vadd.f32 %v181, 0.5
    %v217 = vadd.f32 %v182, 0.5
    %v218 = vadd.f32 %v183, 0.5
    %v219 = vadd.f32 %v184, 0.5
    %v220 = vadd.f32 %v185, 0.5
    %v221 = vadd.f32 %v186, 0.5
    %v222 = vadd.f32 %v187, 0.5
    %v223 = vadd.f32 %v188, 0.5
    %v224 = vadd.f32 %v189, 0.5
    %v225 = vadd.f32 %v190, 0.5
    %v226 = vadd.f32 %v191, 0.5
    %v227 = vadd.f32 %v192, 0.5
    %v228 = vadd.f32 %v193, 0.5
    %v229 = vmul.f32 %v197, 0.0625
    %v230 = vmul.f32 %v198, 0.0625
    %v231 = vmul.f32 %v199, 0.0625
    %v232 = vmul.f32 %v200, 0.0625
    %v233 = vmul.f32 %v201, 0.0625
    %v234 = vmul.f32 %v202, 0.0625
    %v235 = vmul.f32 %v203, 0.0625
    %v236 = vmul.f32 %v204, 0.0625
    %v237 = vmul.f32 %v205, 0.0625
    %v238 = vmul.f32 %v206, 0.0625
    %v239 = vmul.f32 %v207, 0.0625
    %v240 = vmul.f32 %v208, 0.0625
    %v241 = vmul.f32 %v209, 0.0625
    %v242 = vmul.f32 %v210, 0.0625
    %v243 = vmul.f32 %v211, 0.0625
    %v244 = vmul.f32 %v212, 0.0625
    %v245 = vmul.f32 %v213, 0.0625
    %v246 = vmul.f32 %v214, 0.0625
    %v247 = vmul.f32 %v215, 0.0625
    %v248 = vmul.f32 %v216, 0.0625
    %v249 = vmul.f32 %v217, 0.0625
    %v250 = vmul.f32 %v218, 0.0625
    %v251 = vmul.f32 %v219, 0.0625
    %v252 = vmul.f32 %v220, 0.0625
    %v253 = vmul.f32 %v221, 0.0625
    %v254 = vmul.f32 %v222, 0.0625
    %v255 = vmul.f32 %v223, 0.0625
    %v256 = vmul.f32 %v224, 0.0625
    %v257 = vmul.f32 %v225, 0.0625
    %v258 = vmul.f32 %v226, 0.0625
    %v259 = vmul.f32 %v227, 0.0625
    %v260 = vmul.f32 %v228, 0.0625
    %v261 = vfloor.f32 %v229
    %v262 = vfloor.f32 %v230
    %v263 = vfloor.f32 %v231
    %v264 = vfloor.f32 %v232
    %v265 = vfloor.f32 %v233
    %v266 = vfloor.f32 %v234
    %v267 = vfloor.f32 %v235
    %v268 = vfloor.f32 %v236
    %v269 = vfloor.f32 %v237
    %v270 = vfloor.f32 %v238
    %v271 = vfloor.f32 %v239
    %v272 = vfloor.f32 %v240
    %v273 = vfloor.f32 %v241
    %v274 = vfloor.f32 %v242
    %v275 = vfloor.f32 %v243
    %v276 = vfloor.f32 %v244
    %v277 = vfloor.f32 %v245
    %v278 = vfloor.f32 %v246
    %v279 = vfloor.f32 %v247
    %v280 = vfloor.f32 %v248
    %v281 = vfloor.f32 %v249
    %v282 = vfloor.f32 %v250
    %v283 = vfloor.f32 %v251
    %v284 = vfloor.f32 %v252
    %v285 = vfloor.f32 %v253
    %v286 = vfloor.f32 %v254
    %v287 = vfloor.f32 %v255
    %v288 = vfloor.f32 %v256
    %v289 = vfloor.f32 %v257
    %v290 = vfloor.f32 %v258
    %v291 = vfloor.f32 %v259
    %v292 = vfloor.f32 %v260
    %v293 = vmul.f32 %v261, 16.0
    %v294 = vmul.f32 %v262, 16.0
    %v295 = vmul.f32 %v263, 16.0
    %v296 = vmul.f32 %v264, 16.0
    %v297 = vmul.f32 %v265, 16.0
    %v298 = vmul.f32 %v266, 16.0
    %v299 = vmul.f32 %v267, 16.0
    %v300 = vmul.f32 %v268, 16.0
    %v301 = vmul.f32 %v269, 16.0
    %v302 = vmul.f32 %v270, 16.0
    %v303 = vmul.f32 %v271, 16.0
    %v304 = vmul.f32 %v272, 16.0
    %v305 = vmul.f32 %v273, 16.0
    %v306 = vmul.f32 %v274, 16.0
    %v307 = vmul.f32 %v275, 16.0
    %v308 = vmul.f32 %v276, 16.0
    %v309 = vmul.f32 %v277, 16.0
    %v310 = vmul.f32 %v278, 16.0
    %v311 = vmul.f32 %v279, 16.0
    %v312 = vmul.f32 %v280, 16.0
    %v313 = vmul.f32 %v281, 16.0
    %v314 = vmul.f32 %v282, 16.0
    %v315 = vmul.f32 %v283, 16.0
    %v316 = vmul.f32 %v284, 16.0
    %v317 = vmul.f32 %v285, 16.0
    %v318 = vmul.f32 %v286, 16.0
    %v319 = vmul.f32 %v287, 16.0
    %v320 = vmul.f32 %v288, 16.0
    %v321 = vmul.f32 %v289, 16.0
    %v322 = vmul.f32 %v290, 16.0
    %v323 = vmul.f32 %v291, 16.0
    %v324 = vmul.f32 %v292, 16.0
    %v325 = vsub.f32 %v162, %v293
    %v326 = vsub.f32 %v163, %v294
    %v327 = vsub.f32 %v164, %v295
    %v328 = vsub.f32 %v165, %v296
    %v329 = vsub.f32 %v166, %v297
    %v330 = vsub.f32 %v167, %v298
    %v331 = vsub.f32 %v168, %v299
    %v332 = vsub.f32 %v169, %v300
    %v333 = vsub.f32 %v170, %v301
    %v334 = vsub.f32 %v171, %v302
    %v335 = vsub.f32 %v172, %v303
    %v336 = vsub.f32 %v173, %v304
    %v337 = vsub.f32 %v174, %v305
    %v338 = vsub.f32 %v175, %v306
    %v339 = vsub.f32 %v176, %v307
    %v340 = vsub.f32 %v177, %v308
    %v341 = vsub.f32 %v178, %v309
    %v342 = vsub.f32 %v179, %v310
    %v343 = vsub.f32 %v180, %v311
    %v344 = vsub.f32 %v181, %v312
    %v345 = vsub.f32 %v182, %v313
    %v346 = vsub.f32 %v183, %v314
    %v347 = vsub.f32 %v184, %v315
    %v348 = vsub.f32 %v185, %v316
    %v349 = vsub.f32 %v186, %v317
    %v350 = vsub.f32 %v187, %v318
    %v351 = vsub.f32 %v188, %v319
    %v352 = vsub.f32 %v189, %v320
    %v353 = vsub.f32 %v190, %v321
    %v354 = vsub.f32 %v191, %v322
    %v355 = vsub.f32 %v192, %v323
    %v356 = vsub.f32 %v193, %v324
    %v357 = vadd.f32 %v196, 0.5
    %v358 = vmul.f32 %v357, 0.125
    %v359 = vfloor.f32 %v358
    %v360 = vmul.f32 %v359, 8.0
    %v361 = vsub.f32 %v196, %v360
    %v362 = vmul.f32 %v359, 2.0
    %v363 = vrcp.pop 7.0
    %v364 = vmul.f32 %v362, %v363
    %v365 = vadd.f32 %v364, -1.0
    %v366 = vmul.f32 %v361, 2.0
    %v367 = vmul.f32 %v366, %v363
    %v368 = vadd.f32 %v367, -1.0
    %369 = vset.pattern.permute.xlu0 2
    %370 = vperm.xlu0 %369, %v53
    %v371 = vpop.permute.xlu0 %370
    %v373 = vlaneseq
    %v374 = vshrl.u32 %v373, 7
    %v375 = vsub.s32 0, %v374
    %v376 = vrot.slane %v371, %v375
    %377 = vset.pattern.permute.xlu0 2
    %378 = vperm.xlu0 %377, %v67
    %v379 = vpop.permute.xlu0 %378
    %v381 = vlaneseq
    %v382 = vshrl.u32 %v381, 7
    %v383 = vsub.s32 0, %v382
    %v384 = vrot.slane %v379, %v383
    %385 = vset.pattern.permute.xlu0 2
    %386 = vperm.xlu0 %385, %v75
    %v387 = vpop.permute.xlu0 %386
    %v389 = vlaneseq
    %v390 = vshrl.u32 %v389, 7
    %v391 = vsub.s32 0, %v390
    %v392 = vrot.slane %v387, %v391
    %393 = vset.pattern.permute.xlu0 2
    %394 = vperm.xlu0 %393, %v77
    %v395 = vpop.permute.xlu0 %394
    %v397 = vlaneseq
    %v398 = vshrl.u32 %v397, 7
    %v399 = vsub.s32 0, %v398
    %v400 = vrot.slane %v395, %v399
    %401 = vset.pattern.permute.xlu0 2
    %402 = vperm.xlu0 %401, %v60
    %v403 = vpop.permute.xlu0 %402
    %v405 = vlaneseq
    %v406 = vshrl.u32 %v405, 7
    %v407 = vsub.s32 0, %v406
    %v408 = vrot.slane %v403, %v407
    %409 = vset.pattern.permute.xlu0 2
    %410 = vperm.xlu0 %409, %v74
    %v411 = vpop.permute.xlu0 %410
    %v413 = vlaneseq
    %v414 = vshrl.u32 %v413, 7
    %v415 = vsub.s32 0, %v414
    %v416 = vrot.slane %v411, %v415
    %417 = vset.pattern.permute.xlu0 2
    %418 = vperm.xlu0 %417, %v76
    %v419 = vpop.permute.xlu0 %418
    %v421 = vlaneseq
    %v422 = vshrl.u32 %v421, 7
    %v423 = vsub.s32 0, %v422
    %v424 = vrot.slane %v419, %v423
    %425 = vset.pattern.permute.xlu0 2
    %426 = vperm.xlu0 %425, %v78
    %v427 = vpop.permute.xlu0 %426
    %v429 = vlaneseq
    %v430 = vshrl.u32 %v429, 7
    %v431 = vsub.s32 0, %v430
    %v432 = vrot.slane %v427, %v431
    %v433 = vmul.f32 %v376, %v365
    %v434 = vmul.f32 %v384, %v365
    %v435 = vmul.f32 %v392, %v365
    %v436 = vmul.f32 %v400, %v365
    %v437 = vmul.f32 %v408, %v365
    %v438 = vmul.f32 %v416, %v365
    %v439 = vmul.f32 %v424, %v365
    %v440 = vmul.f32 %v432, %v365
    %441 = vset.pattern.permute.xlu0 0
    %442 = vperm.xlu0 %441, %v103
    %v443 = vpop.permute.xlu0 %442
    %v445 = vlaneseq
    %v446 = vshrl.u32 %v445, 7
    %v447 = vsub.s32 0, %v446
    %v448 = vrot.slane %v443, %v447
    %449 = vset.pattern.permute.xlu0 0
    %450 = vperm.xlu0 %449, %v117
    %v451 = vpop.permute.xlu0 %450
    %v453 = vlaneseq
    %v454 = vshrl.u32 %v453, 7
    %v455 = vsub.s32 0, %v454
    %v456 = vrot.slane %v451, %v455
    %457 = vset.pattern.permute.xlu0 0
    %458 = vperm.xlu0 %457, %v125
    %v459 = vpop.permute.xlu0 %458
    %v461 = vlaneseq
    %v462 = vshrl.u32 %v461, 7
    %v463 = vsub.s32 0, %v462
    %v464 = vrot.slane %v459, %v463
    %465 = vset.pattern.permute.xlu0 0
    %466 = vperm.xlu0 %465, %v127
    %v467 = vpop.permute.xlu0 %466
    %v469 = vlaneseq
    %v470 = vshrl.u32 %v469, 7
    %v471 = vsub.s32 0, %v470
    %v472 = vrot.slane %v467, %v471
    %473 = vset.pattern.permute.xlu0 0
    %474 = vperm.xlu0 %473, %v110
    %v475 = vpop.permute.xlu0 %474
    %v477 = vlaneseq
    %v478 = vshrl.u32 %v477, 7
    %v479 = vsub.s32 0, %v478
    %v480 = vrot.slane %v475, %v479
    %481 = vset.pattern.permute.xlu0 0
    %482 = vperm.xlu0 %481, %v124
    %v483 = vpop.permute.xlu0 %482
    %v485 = vlaneseq
    %v486 = vshrl.u32 %v485, 7
    %v487 = vsub.s32 0, %v486
    %v488 = vrot.slane %v483, %v487
    %489 = vset.pattern.permute.xlu0 0
    %490 = vperm.xlu0 %489, %v126
    %v491 = vpop.permute.xlu0 %490
    %v493 = vlaneseq
    %v494 = vshrl.u32 %v493, 7
    %v495 = vsub.s32 0, %v494
    %v496 = vrot.slane %v491, %v495
    %497 = vset.pattern.permute.xlu0 0
    %498 = vperm.xlu0 %497, %v128
    %v499 = vpop.permute.xlu0 %498
    %v501 = vlaneseq
    %v502 = vshrl.u32 %v501, 7
    %v503 = vsub.s32 0, %v502
    %v504 = vrot.slane %v499, %v503
    %v505 = vadd.f32 %v433, %v448
    %v506 = vadd.f32 %v434, %v456
    %v507 = vadd.f32 %v435, %v464
    %v508 = vadd.f32 %v436, %v472
    %v509 = vadd.f32 %v437, %v480
    %v510 = vadd.f32 %v438, %v488
    %v511 = vadd.f32 %v439, %v496
    %v512 = vadd.f32 %v440, %v504
    %v513 = vadd.f32 %v505, 1.0
    %v514 = vadd.f32 %v506, 1.0
    %v515 = vadd.f32 %v507, 1.0
    %v516 = vadd.f32 %v508, 1.0
    %v517 = vadd.f32 %v509, 1.0
    %v518 = vadd.f32 %v510, 1.0
    %v519 = vadd.f32 %v511, 1.0
    %v520 = vadd.f32 %v512, 1.0
    %v521 = vmul.f32 %v513, 7.5
    %v522 = vmul.f32 %v514, 7.5
    %v523 = vmul.f32 %v515, 7.5
    %v524 = vmul.f32 %v516, 7.5
    %v525 = vmul.f32 %v517, 7.5
    %v526 = vmul.f32 %v518, 7.5
    %v527 = vmul.f32 %v519, 7.5
    %v528 = vmul.f32 %v520, 7.5
    %529 = vset.pattern.permute.xlu0 3
    %530 = vperm.xlu0 %529, %v53
    %v531 = vpop.permute.xlu0 %530
    %v533 = vlaneseq
    %v534 = vshrl.u32 %v533, 7
    %v535 = vsub.s32 0, %v534
    %v536 = vrot.slane %v531, %v535
    %537 = vset.pattern.permute.xlu0 3
    %538 = vperm.xlu0 %537, %v67
    %v539 = vpop.permute.xlu0 %538
    %v541 = vlaneseq
    %v542 = vshrl.u32 %v541, 7
    %v543 = vsub.s32 0, %v542
    %v544 = vrot.slane %v539, %v543
    %545 = vset.pattern.permute.xlu0 3
    %546 = vperm.xlu0 %545, %v75
    %v547 = vpop.permute.xlu0 %546
    %v549 = vlaneseq
    %v550 = vshrl.u32 %v549, 7
    %v551 = vsub.s32 0, %v550
    %v552 = vrot.slane %v547, %v551
    %553 = vset.pattern.permute.xlu0 3
    %554 = vperm.xlu0 %553, %v77
    %v555 = vpop.permute.xlu0 %554
    %v557 = vlaneseq
    %v558 = vshrl.u32 %v557, 7
    %v559 = vsub.s32 0, %v558
    %v560 = vrot.slane %v555, %v559
    %561 = vset.pattern.permute.xlu0 3
    %562 = vperm.xlu0 %561, %v60
    %v563 = vpop.permute.xlu0 %562
    %v565 = vlaneseq
    %v566 = vshrl.u32 %v565, 7
    %v567 = vsub.s32 0, %v566
    %v568 = vrot.slane %v563, %v567
    %569 = vset.pattern.permute.xlu0 3
    %570 = vperm.xlu0 %569, %v74
    %v571 = vpop.permute.xlu0 %570
    %v573 = vlaneseq
    %v574 = vshrl.u32 %v573, 7
    %v575 = vsub.s32 0, %v574
    %v576 = vrot.slane %v571, %v575
    %577 = vset.pattern.permute.xlu0 3
    %578 = vperm.xlu0 %577, %v76
    %v579 = vpop.permute.xlu0 %578
    %v581 = vlaneseq
    %v582 = vshrl.u32 %v581, 7
    %v583 = vsub.s32 0, %v582
    %v584 = vrot.slane %v579, %v583
    %585 = vset.pattern.permute.xlu0 3
    %586 = vperm.xlu0 %585, %v78
    %v587 = vpop.permute.xlu0 %586
    %v589 = vlaneseq
    %v590 = vshrl.u32 %v589, 7
    %v591 = vsub.s32 0, %v590
    %v592 = vrot.slane %v587, %v591
    %v593 = vmul.f32 %v536, %v368
    %v594 = vmul.f32 %v544, %v368
    %v595 = vmul.f32 %v552, %v368
    %v596 = vmul.f32 %v560, %v368
    %v597 = vmul.f32 %v568, %v368
    %v598 = vmul.f32 %v576, %v368
    %v599 = vmul.f32 %v584, %v368
    %v600 = vmul.f32 %v592, %v368
    %601 = vset.pattern.permute.xlu0 1
    %602 = vperm.xlu0 %601, %v103
    %v603 = vpop.permute.xlu0 %602
    %v605 = vlaneseq
    %v606 = vshrl.u32 %v605, 7
    %v607 = vsub.s32 0, %v606
    %v608 = vrot.slane %v603, %v607
    %609 = vset.pattern.permute.xlu0 1
    %610 = vperm.xlu0 %609, %v117
    %v611 = vpop.permute.xlu0 %610
    %v613 = vlaneseq
    %v614 = vshrl.u32 %v613, 7
    %v615 = vsub.s32 0, %v614
    %v616 = vrot.slane %v611, %v615
    %617 = vset.pattern.permute.xlu0 1
    %618 = vperm.xlu0 %617, %v125
    %v619 = vpop.permute.xlu0 %618
    %v621 = vlaneseq
    %v622 = vshrl.u32 %v621, 7
    %v623 = vsub.s32 0, %v622
    %v624 = vrot.slane %v619, %v623
    %625 = vset.pattern.permute.xlu0 1
    %626 = vperm.xlu0 %625, %v127
    %v627 = vpop.permute.xlu0 %626
    %v629 = vlaneseq
    %v630 = vshrl.u32 %v629, 7
    %v631 = vsub.s32 0, %v630
    %v632 = vrot.slane %v627, %v631
    %633 = vset.pattern.permute.xlu0 1
    %634 = vperm.xlu0 %633, %v110
    %v635 = vpop.permute.xlu0 %634
    %v637 = vlaneseq
    %v638 = vshrl.u32 %v637, 7
    %v639 = vsub.s32 0, %v638
    %v640 = vrot.slane %v635, %v639
    %641 = vset.pattern.permute.xlu0 1
    %642 = vperm.xlu0 %641, %v124
    %v643 = vpop.permute.xlu0 %642
    %v645 = vlaneseq
    %v646 = vshrl.u32 %v645, 7
    %v647 = vsub.s32 0, %v646
    %v648 = vrot.slane %v643, %v647
    %649 = vset.pattern.permute.xlu0 1
    %650 = vperm.xlu0 %649, %v126
    %v651 = vpop.permute.xlu0 %650
    %v653 = vlaneseq
    %v654 = vshrl.u32 %v653, 7
    %v655 = vsub.s32 0, %v654
    %v656 = vrot.slane %v651, %v655
    %657 = vset.pattern.permute.xlu0 1
    %658 = vperm.xlu0 %657, %v128
    %v659 = vpop.permute.xlu0 %658
    %v661 = vlaneseq
    %v662 = vshrl.u32 %v661, 7
    %v663 = vsub.s32 0, %v662
    %v664 = vrot.slane %v659, %v663
    %v665 = vadd.f32 %v593, %v608
    %v666 = vadd.f32 %v594, %v616
    %v667 = vadd.f32 %v595, %v624
    %v668 = vadd.f32 %v596, %v632
    %v669 = vadd.f32 %v597, %v640
    %v670 = vadd.f32 %v598, %v648
    %v671 = vadd.f32 %v599, %v656
    %v672 = vadd.f32 %v600, %v664
    %v673 = vadd.f32 %v665, 1.0
    %v674 = vadd.f32 %v666, 1.0
    %v675 = vadd.f32 %v667, 1.0
    %v676 = vadd.f32 %v668, 1.0
    %v677 = vadd.f32 %v669, 1.0
    %v678 = vadd.f32 %v670, 1.0
    %v679 = vadd.f32 %v671, 1.0
    %v680 = vadd.f32 %v672, 1.0
    %v681 = vmul.f32 %v673, 7.5
    %v682 = vmul.f32 %v674, 7.5
    %v683 = vmul.f32 %v675, 7.5
    %v684 = vmul.f32 %v676, 7.5
    %v685 = vmul.f32 %v677, 7.5
    %v686 = vmul.f32 %v678, 7.5
    %v687 = vmul.f32 %v679, 7.5
    %v688 = vmul.f32 %v680, 7.5
    %v689 = vmax.f32 %v521, 0.0
    %v690 = vmax.f32 %v522, 0.0
    %v691 = vmax.f32 %v523, 0.0
    %v692 = vmax.f32 %v524, 0.0
    %v693 = vmax.f32 %v525, 0.0
    %v694 = vmax.f32 %v526, 0.0
    %v695 = vmax.f32 %v527, 0.0
    %v696 = vmax.f32 %v528, 0.0
    %v697 = vmin.f32 %v689, 15.0
    %v698 = vmin.f32 %v690, 15.0
    %v699 = vmin.f32 %v691, 15.0
    %v700 = vmin.f32 %v692, 15.0
    %v701 = vmin.f32 %v693, 15.0
    %v702 = vmin.f32 %v694, 15.0
    %v703 = vmin.f32 %v695, 15.0
    %v704 = vmin.f32 %v696, 15.0
    %v705 = vmax.f32 %v681, 0.0
    %v706 = vmax.f32 %v682, 0.0
    %v707 = vmax.f32 %v683, 0.0
    %v708 = vmax.f32 %v684, 0.0
    %v709 = vmax.f32 %v685, 0.0
    %v710 = vmax.f32 %v686, 0.0
    %v711 = vmax.f32 %v687, 0.0
    %v712 = vmax.f32 %v688, 0.0
    %v713 = vmin.f32 %v705, 15.0
    %v714 = vmin.f32 %v706, 15.0
    %v715 = vmin.f32 %v707, 15.0
    %v716 = vmin.f32 %v708, 15.0
    %v717 = vmin.f32 %v709, 15.0
    %v718 = vmin.f32 %v710, 15.0
    %v719 = vmin.f32 %v711, 15.0
    %v720 = vmin.f32 %v712, 15.0
    %v721 = vsub.f32 %v697, %v261
    %v722 = vsub.f32 %v697, %v262
    %v723 = vsub.f32 %v697, %v263
    %v724 = vsub.f32 %v697, %v264
    %v725 = vsub.f32 %v697, %v265
    %v726 = vsub.f32 %v697, %v266
    %v727 = vsub.f32 %v697, %v267
    %v728 = vsub.f32 %v697, %v268
    %v729 = vsub.f32 %v697, %v269
    %v730 = vsub.f32 %v697, %v270
    %v731 = vsub.f32 %v697, %v271
    %v732 = vsub.f32 %v697, %v272
    %v733 = vsub.f32 %v697, %v273
    %v734 = vsub.f32 %v697, %v274
    %v735 = vsub.f32 %v697, %v275
    %v736 = vsub.f32 %v697, %v276
    %v737 = vsub.f32 %v697, %v277
    %v738 = vsub.f32 %v697, %v278
    %v739 = vsub.f32 %v697, %v279
    %v740 = vsub.f32 %v697, %v280
    %v741 = vsub.f32 %v697, %v281
    %v742 = vsub.f32 %v697, %v282
    %v743 = vsub.f32 %v697, %v283
    %v744 = vsub.f32 %v697, %v284
    %v745 = vsub.f32 %v697, %v285
    %v746 = vsub.f32 %v697, %v286
    %v747 = vsub.f32 %v697, %v287
    %v748 = vsub.f32 %v697, %v288
    %v749 = vsub.f32 %v697, %v289
    %v750 = vsub.f32 %v697, %v290
    %v751 = vsub.f32 %v697, %v291
    %v752 = vsub.f32 %v697, %v292
    %v753 = vsub.f32 %v698, %v261
    %v754 = vsub.f32 %v698, %v262
    %v755 = vsub.f32 %v698, %v263
    %v756 = vsub.f32 %v698, %v264
    %v757 = vsub.f32 %v698, %v265
    %v758 = vsub.f32 %v698, %v266
    %v759 = vsub.f32 %v698, %v267
    %v760 = vsub.f32 %v698, %v268
    %v761 = vsub.f32 %v698, %v269
    %v762 = vsub.f32 %v698, %v270
    %v763 = vsub.f32 %v698, %v271
    %v764 = vsub.f32 %v698, %v272
    %v765 = vsub.f32 %v698, %v273
    %v766 = vsub.f32 %v698, %v274
    %v767 = vsub.f32 %v698, %v275
    %v768 = vsub.f32 %v698, %v276
    %v769 = vsub.f32 %v698, %v277
    %v770 = vsub.f32 %v698, %v278
    %v771 = vsub.f32 %v698, %v279
    %v772 = vsub.f32 %v698, %v280
    %v773 = vsub.f32 %v698, %v281
    %v774 = vsub.f32 %v698, %v282
    %v775 = vsub.f32 %v698, %v283
    %v776 = vsub.f32 %v698, %v284
    %v777 = vsub.f32 %v698, %v285
    %v778 = vsub.f32 %v698, %v286
    %v779 = vsub.f32 %v698, %v287
    %v780 = vsub.f32 %v698, %v288
    %v781 = vsub.f32 %v698, %v289
    %v782 = vsub.f32 %v698, %v290
    %v783 = vsub.f32 %v698, %v291
    %v784 = vsub.f32 %v698, %v292
    %v785 = vsub.f32 %v699, %v261
    %v786 = vsub.f32 %v699, %v262
    %v787 = vsub.f32 %v699, %v263
    %v788 = vsub.f32 %v699, %v264
    %v789 = vsub.f32 %v699, %v265
    %v790 = vsub.f32 %v699, %v266
    %v791 = vsub.f32 %v699, %v267
    %v792 = vsub.f32 %v699, %v268
    %v793 = vsub.f32 %v699, %v269
    %v794 = vsub.f32 %v699, %v270
    %v795 = vsub.f32 %v699, %v271
    %v796 = vsub.f32 %v699, %v272
    %v797 = vsub.f32 %v699, %v273
    %v798 = vsub.f32 %v699, %v274
    %v799 = vsub.f32 %v699, %v275
    %v800 = vsub.f32 %v699, %v276
    %v801 = vsub.f32 %v699, %v277
    %v802 = vsub.f32 %v699, %v278
    %v803 = vsub.f32 %v699, %v279
    %v804 = vsub.f32 %v699, %v280
    %v805 = vsub.f32 %v699, %v281
    %v806 = vsub.f32 %v699, %v282
    %v807 = vsub.f32 %v699, %v283
    %v808 = vsub.f32 %v699, %v284
    %v809 = vsub.f32 %v699, %v285
    %v810 = vsub.f32 %v699, %v286
    %v811 = vsub.f32 %v699, %v287
    %v812 = vsub.f32 %v699, %v288
    %v813 = vsub.f32 %v699, %v289
    %v814 = vsub.f32 %v699, %v290
    %v815 = vsub.f32 %v699, %v291
    %v816 = vsub.f32 %v699, %v292
    %v817 = vsub.f32 %v700, %v261
    %v818 = vsub.f32 %v700, %v262
    %v819 = vsub.f32 %v700, %v263
    %v820 = vsub.f32 %v700, %v264
    %v821 = vsub.f32 %v700, %v265
    %v822 = vsub.f32 %v700, %v266
    %v823 = vsub.f32 %v700, %v267
    %v824 = vsub.f32 %v700, %v268
    %v825 = vsub.f32 %v700, %v269
    %v826 = vsub.f32 %v700, %v270
    %v827 = vsub.f32 %v700, %v271
    %v828 = vsub.f32 %v700, %v272
    %v829 = vsub.f32 %v700, %v273
    %v830 = vsub.f32 %v700, %v274
    %v831 = vsub.f32 %v700, %v275
    %v832 = vsub.f32 %v700, %v276
    %v833 = vsub.f32 %v700, %v277
    %v834 = vsub.f32 %v700, %v278
    %v835 = vsub.f32 %v700, %v279
    %v836 = vsub.f32 %v700, %v280
    %v837 = vsub.f32 %v700, %v281
    %v838 = vsub.f32 %v700, %v282
    %v839 = vsub.f32 %v700, %v283
    %v840 = vsub.f32 %v700, %v284
    %v841 = vsub.f32 %v700, %v285
    %v842 = vsub.f32 %v700, %v286
    %v843 = vsub.f32 %v700, %v287
    %v844 = vsub.f32 %v700, %v288
    %v845 = vsub.f32 %v700, %v289
    %v846 = vsub.f32 %v700, %v290
    %v847 = vsub.f32 %v700, %v291
    %v848 = vsub.f32 %v700, %v292
    %v849 = vsub.f32 %v701, %v261
    %v850 = vsub.f32 %v701, %v262
    %v851 = vsub.f32 %v701, %v263
    %v852 = vsub.f32 %v701, %v264
    %v853 = vsub.f32 %v701, %v265
    %v854 = vsub.f32 %v701, %v266
    %v855 = vsub.f32 %v701, %v267
    %v856 = vsub.f32 %v701, %v268
    %v857 = vsub.f32 %v701, %v269
    %v858 = vsub.f32 %v701, %v270
    %v859 = vsub.f32 %v701, %v271
    %v860 = vsub.f32 %v701, %v272
    %v861 = vsub.f32 %v701, %v273
    %v862 = vsub.f32 %v701, %v274
    %v863 = vsub.f32 %v701, %v275
    %v864 = vsub.f32 %v701, %v276
    %v865 = vsub.f32 %v701, %v277
    %v866 = vsub.f32 %v701, %v278
    %v867 = vsub.f32 %v701, %v279
    %v868 = vsub.f32 %v701, %v280
    %v869 = vsub.f32 %v701, %v281
    %v870 = vsub.f32 %v701, %v282
    %v871 = vsub.f32 %v701, %v283
    %v872 = vsub.f32 %v701, %v284
    %v873 = vsub.f32 %v701, %v285
    %v874 = vsub.f32 %v701, %v286
    %v875 = vsub.f32 %v701, %v287
    %v876 = vsub.f32 %v701, %v288
    %v877 = vsub.f32 %v701, %v289
    %v878 = vsub.f32 %v701, %v290
    %v879 = vsub.f32 %v701, %v291
    %v880 = vsub.f32 %v701, %v292
    %v881 = vsub.f32 %v702, %v261
    %v882 = vsub.f32 %v702, %v262
    %v883 = vsub.f32 %v702, %v263
    %v884 = vsub.f32 %v702, %v264
    %v885 = vsub.f32 %v702, %v265
    %v886 = vsub.f32 %v702, %v266
    %v887 = vsub.f32 %v702, %v267
    %v888 = vsub.f32 %v702, %v268
    %v889 = vsub.f32 %v702, %v269
    %v890 = vsub.f32 %v702, %v270
    %v891 = vsub.f32 %v702, %v271
    %v892 = vsub.f32 %v702, %v272
    %v893 = vsub.f32 %v702, %v273
    %v894 = vsub.f32 %v702, %v274
    %v895 = vsub.f32 %v702, %v275
    %v896 = vsub.f32 %v702, %v276
    %v897 = vsub.f32 %v702, %v277
    %v898 = vsub.f32 %v702, %v278
    %v899 = vsub.f32 %v702, %v279
    %v900 = vsub.f32 %v702, %v280
    %v901 = vsub.f32 %v702, %v281
    %v902 = vsub.f32 %v702, %v282
    %v903 = vsub.f32 %v702, %v283
    %v904 = vsub.f32 %v702, %v284
    %v905 = vsub.f32 %v702, %v285
    %v906 = vsub.f32 %v702, %v286
    %v907 = vsub.f32 %v702, %v287
    %v908 = vsub.f32 %v702, %v288
    %v909 = vsub.f32 %v702, %v289
    %v910 = vsub.f32 %v702, %v290
    %v911 = vsub.f32 %v702, %v291
    %v912 = vsub.f32 %v702, %v292
    %v913 = vsub.f32 %v703, %v261
    %v914 = vsub.f32 %v703, %v262
    %v915 = vsub.f32 %v703, %v263
    %v916 = vsub.f32 %v703, %v264
    %v917 = vsub.f32 %v703, %v265
    %v918 = vsub.f32 %v703, %v266
    %v919 = vsub.f32 %v703, %v267
    %v920 = vsub.f32 %v703, %v268
    %v921 = vsub.f32 %v703, %v269
    %v922 = vsub.f32 %v703, %v270
    %v923 = vsub.f32 %v703, %v271
    %v924 = vsub.f32 %v703, %v272
    %v925 = vsub.f32 %v703, %v273
    %v926 = vsub.f32 %v703, %v274
    %v927 = vsub.f32 %v703, %v275
    %v928 = vsub.f32 %v703, %v276
    %v929 = vsub.f32 %v703, %v277
    %v930 = vsub.f32 %v703, %v278
    %v931 = vsub.f32 %v703, %v279
    %v932 = vsub.f32 %v703, %v280
    %v933 = vsub.f32 %v703, %v281
    %v934 = vsub.f32 %v703, %v282
    %v935 = vsub.f32 %v703, %v283
    %v936 = vsub.f32 %v703, %v284
    %v937 = vsub.f32 %v703, %v285
    %v938 = vsub.f32 %v703, %v286
    %v939 = vsub.f32 %v703, %v287
    %v940 = vsub.f32 %v703, %v288
    %v941 = vsub.f32 %v703, %v289
    %v942 = vsub.f32 %v703, %v290
    %v943 = vsub.f32 %v703, %v291
    %v944 = vsub.f32 %v703, %v292
    %v945 = vsub.f32 %v704, %v261
    %v946 = vsub.f32 %v704, %v262
    %v947 = vsub.f32 %v704, %v263
    %v948 = vsub.f32 %v704, %v264
    %v949 = vsub.f32 %v704, %v265
    %v950 = vsub.f32 %v704, %v266
    %v951 = vsub.f32 %v704, %v267
    %v952 = vsub.f32 %v704, %v268
    %v953 = vsub.f32 %v704, %v269
    %v954 = vsub.f32 %v704, %v270
    %v955 = vsub.f32 %v704, %v271
    %v956 = vsub.f32 %v704, %v272
    %v957 = vsub.f32 %v704, %v273
    %v958 = vsub.f32 %v704, %v274
    %v959 = vsub.f32 %v704, %v275
    %v960 = vsub.f32 %v704, %v276
    %v961 = vsub.f32 %v704, %v277
    %v962 = vsub.f32 %v704, %v278
    %v963 = vsub.f32 %v704, %v279
    %v964 = vsub.f32 %v704, %v280
    %v965 = vsub.f32 %v704, %v281
    %v966 = vsub.f32 %v704, %v282
    %v967 = vsub.f32 %v704, %v283
    %v968 = vsub.f32 %v704, %v284
    %v969 = vsub.f32 %v704, %v285
    %v970 = vsub.f32 %v704, %v286
    %v971 = vsub.f32 %v704, %v287
    %v972 = vsub.f32 %v704, %v288
    %v973 = vsub.f32 %v704, %v289
    %v974 = vsub.f32 %v704, %v290
    %v975 = vsub.f32 %v704, %v291
    %v976 = vsub.f32 %v704, %v292
    %v977 = vand.u32 2147483647, %v721
    %v978 = vand.u32 2147483647, %v722
    %v979 = vand.u32 2147483647, %v723
    %v980 = vand.u32 2147483647, %v724
    %v981 = vand.u32 2147483647, %v725
    %v982 = vand.u32 2147483647, %v726
    %v983 = vand.u32 2147483647, %v727
    %v984 = vand.u32 2147483647, %v728
    %v985 = vand.u32 2147483647, %v729
    %v986 = vand.u32 2147483647, %v730
    %v987 = vand.u32 2147483647, %v731
    %v988 = vand.u32 2147483647, %v732
    %v989 = vand.u32 2147483647, %v733
    %v990 = vand.u32 2147483647, %v734
    %v991 = vand.u32 2147483647, %v735
    %v992 = vand.u32 2147483647, %v736
    %v993 = vand.u32 2147483647, %v737
    %v994 = vand.u32 2147483647, %v738
    %v995 = vand.u32 2147483647, %v739
    %v996 = vand.u32 2147483647, %v740
    %v997 = vand.u32 2147483647, %v741
    %v998 = vand.u32 2147483647, %v742
    %v999 = vand.u32 2147483647, %v743
    %v1000 = vand.u32 2147483647, %v744
    %v1001 = vand.u32 2147483647, %v745
    %v1002 = vand.u32 2147483647, %v746
    %v1003 = vand.u32 2147483647, %v747
    %v1004 = vand.u32 2147483647, %v748
    %v1005 = vand.u32 2147483647, %v749
    %v1006 = vand.u32 2147483647, %v750
    %v1007 = vand.u32 2147483647, %v751
    %v1008 = vand.u32 2147483647, %v752
    %v1009 = vand.u32 2147483647, %v753
    %v1010 = vand.u32 2147483647, %v754
    %v1011 = vand.u32 2147483647, %v755
    %v1012 = vand.u32 2147483647, %v756
    %v1013 = vand.u32 2147483647, %v757
    %v1014 = vand.u32 2147483647, %v758
    %v1015 = vand.u32 2147483647, %v759
    %v1016 = vand.u32 2147483647, %v760
    %v1017 = vand.u32 2147483647, %v761
    %v1018 = vand.u32 2147483647, %v762
    %v1019 = vand.u32 2147483647, %v763
    %v1020 = vand.u32 2147483647, %v764
    %v1021 = vand.u32 2147483647, %v765
    %v1022 = vand.u32 2147483647, %v766
    %v1023 = vand.u32 2147483647, %v767
    %v1024 = vand.u32 2147483647, %v768
    %v1025 = vand.u32 2147483647, %v769
    %v1026 = vand.u32 2147483647, %v770
    %v1027 = vand.u32 2147483647, %v771
    %v1028 = vand.u32 2147483647, %v772
    %v1029 = vand.u32 2147483647, %v773
    %v1030 = vand.u32 2147483647, %v774
    %v1031 = vand.u32 2147483647, %v775
    %v1032 = vand.u32 2147483647, %v776
    %v1033 = vand.u32 2147483647, %v777
    %v1034 = vand.u32 2147483647, %v778
    %v1035 = vand.u32 2147483647, %v779
    %v1036 = vand.u32 2147483647, %v780
    %v1037 = vand.u32 2147483647, %v781
    %v1038 = vand.u32 2147483647, %v782
    %v1039 = vand.u32 2147483647, %v783
    %v1040 = vand.u32 2147483647, %v784
    %v1041 = vand.u32 2147483647, %v785
    %v1042 = vand.u32 2147483647, %v786
    %v1043 = vand.u32 2147483647, %v787
    %v1044 = vand.u32 2147483647, %v788
    %v1045 = vand.u32 2147483647, %v789
    %v1046 = vand.u32 2147483647, %v790
    %v1047 = vand.u32 2147483647, %v791
    %v1048 = vand.u32 2147483647, %v792
    %v1049 = vand.u32 2147483647, %v793
    %v1050 = vand.u32 2147483647, %v794
    %v1051 = vand.u32 2147483647, %v795
    %v1052 = vand.u32 2147483647, %v796
    %v1053 = vand.u32 2147483647, %v797
    %v1054 = vand.u32 2147483647, %v798
    %v1055 = vand.u32 2147483647, %v799
    %v1056 = vand.u32 2147483647, %v800
    %v1057 = vand.u32 2147483647, %v801
    %v1058 = vand.u32 2147483647, %v802
    %v1059 = vand.u32 2147483647, %v803
    %v1060 = vand.u32 2147483647, %v804
    %v1061 = vand.u32 2147483647, %v805
    %v1062 = vand.u32 2147483647, %v806
    %v1063 = vand.u32 2147483647, %v807
    %v1064 = vand.u32 2147483647, %v808
    %v1065 = vand.u32 2147483647, %v809
    %v1066 = vand.u32 2147483647, %v810
    %v1067 = vand.u32 2147483647, %v811
    %v1068 = vand.u32 2147483647, %v812
    %v1069 = vand.u32 2147483647, %v813
    %v1070 = vand.u32 2147483647, %v814
    %v1071 = vand.u32 2147483647, %v815
    %v1072 = vand.u32 2147483647, %v816
    %v1073 = vand.u32 2147483647, %v817
    %v1074 = vand.u32 2147483647, %v818
    %v1075 = vand.u32 2147483647, %v819
    %v1076 = vand.u32 2147483647, %v820
    %v1077 = vand.u32 2147483647, %v821
    %v1078 = vand.u32 2147483647, %v822
    %v1079 = vand.u32 2147483647, %v823
    %v1080 = vand.u32 2147483647, %v824
    %v1081 = vand.u32 2147483647, %v825
    %v1082 = vand.u32 2147483647, %v826
    %v1083 = vand.u32 2147483647, %v827
    %v1084 = vand.u32 2147483647, %v828
    %v1085 = vand.u32 2147483647, %v829
    %v1086 = vand.u32 2147483647, %v830
    %v1087 = vand.u32 2147483647, %v831
    %v1088 = vand.u32 2147483647, %v832
    %v1089 = vand.u32 2147483647, %v833
    %v1090 = vand.u32 2147483647, %v834
    %v1091 = vand.u32 2147483647, %v835
    %v1092 = vand.u32 2147483647, %v836
    %v1093 = vand.u32 2147483647, %v837
    %v1094 = vand.u32 2147483647, %v838
    %v1095 = vand.u32 2147483647, %v839
    %v1096 = vand.u32 2147483647, %v840
    %v1097 = vand.u32 2147483647, %v841
    %v1098 = vand.u32 2147483647, %v842
    %v1099 = vand.u32 2147483647, %v843
    %v1100 = vand.u32 2147483647, %v844
    %v1101 = vand.u32 2147483647, %v845
    %v1102 = vand.u32 2147483647, %v846
    %v1103 = vand.u32 2147483647, %v847
    %v1104 = vand.u32 2147483647, %v848
    %v1105 = vand.u32 2147483647, %v849
    %v1106 = vand.u32 2147483647, %v850
    %v1107 = vand.u32 2147483647, %v851
    %v1108 = vand.u32 2147483647, %v852
    %v1109 = vand.u32 2147483647, %v853
    %v1110 = vand.u32 2147483647, %v854
    %v1111 = vand.u32 2147483647, %v855
    %v1112 = vand.u32 2147483647, %v856
    %v1113 = vand.u32 2147483647, %v857
    %v1114 = vand.u32 2147483647, %v858
    %v1115 = vand.u32 2147483647, %v859
    %v1116 = vand.u32 2147483647, %v860
    %v1117 = vand.u32 2147483647, %v861
    %v1118 = vand.u32 2147483647, %v862
    %v1119 = vand.u32 2147483647, %v863
    %v1120 = vand.u32 2147483647, %v864
    %v1121 = vand.u32 2147483647, %v865
    %v1122 = vand.u32 2147483647, %v866
    %v1123 = vand.u32 2147483647, %v867
    %v1124 = vand.u32 2147483647, %v868
    %v1125 = vand.u32 2147483647, %v869
    %v1126 = vand.u32 2147483647, %v870
    %v1127 = vand.u32 2147483647, %v871
    %v1128 = vand.u32 2147483647, %v872
    %v1129 = vand.u32 2147483647, %v873
    %v1130 = vand.u32 2147483647, %v874
    %v1131 = vand.u32 2147483647, %v875
    %v1132 = vand.u32 2147483647, %v876
    %v1133 = vand.u32 2147483647, %v877
    %v1134 = vand.u32 2147483647, %v878
    %v1135 = vand.u32 2147483647, %v879
    %v1136 = vand.u32 2147483647, %v880
    %v1137 = vand.u32 2147483647, %v881
    %v1138 = vand.u32 2147483647, %v882
    %v1139 = vand.u32 2147483647, %v883
    %v1140 = vand.u32 2147483647, %v884
    %v1141 = vand.u32 2147483647, %v885
    %v1142 = vand.u32 2147483647, %v886
    %v1143 = vand.u32 2147483647, %v887
    %v1144 = vand.u32 2147483647, %v888
    %v1145 = vand.u32 2147483647, %v889
    %v1146 = vand.u32 2147483647, %v890
    %v1147 = vand.u32 2147483647, %v891
    %v1148 = vand.u32 2147483647, %v892
    %v1149 = vand.u32 2147483647, %v893
    %v1150 = vand.u32 2147483647, %v894
    %v1151 = vand.u32 2147483647, %v895
    %v1152 = vand.u32 2147483647, %v896
    %v1153 = vand.u32 2147483647, %v897
    %v1154 = vand.u32 2147483647, %v898
    %v1155 = vand.u32 2147483647, %v899
    %v1156 = vand.u32 2147483647, %v900
    %v1157 = vand.u32 2147483647, %v901
    %v1158 = vand.u32 2147483647, %v902
    %v1159 = vand.u32 2147483647, %v903
    %v1160 = vand.u32 2147483647, %v904
    %v1161 = vand.u32 2147483647, %v905
    %v1162 = vand.u32 2147483647, %v906
    %v1163 = vand.u32 2147483647, %v907
    %v1164 = vand.u32 2147483647, %v908
    %v1165 = vand.u32 2147483647, %v909
    %v1166 = vand.u32 2147483647, %v910
    %v1167 = vand.u32 2147483647, %v911
    %v1168 = vand.u32 2147483647, %v912
    %v1169 = vand.u32 2147483647, %v913
    %v1170 = vand.u32 2147483647, %v914
    %v1171 = vand.u32 2147483647, %v915
    %v1172 = vand.u32 2147483647, %v916
    %v1173 = vand.u32 2147483647, %v917
    %v1174 = vand.u32 2147483647, %v918
    %v1175 = vand.u32 2147483647, %v919
    %v1176 = vand.u32 2147483647, %v920
    %v1177 = vand.u32 2147483647, %v921
    %v1178 = vand.u32 2147483647, %v922
    %v1179 = vand.u32 2147483647, %v923
    %v1180 = vand.u32 2147483647, %v924
    %v1181 = vand.u32 2147483647, %v925
    %v1182 = vand.u32 2147483647, %v926
    %v1183 = vand.u32 2147483647, %v927
    %v1184 = vand.u32 2147483647, %v928
    %v1185 = vand.u32 2147483647, %v929
    %v1186 = vand.u32 2147483647, %v930
    %v1187 = vand.u32 2147483647, %v931
    %v1188 = vand.u32 2147483647, %v932
    %v1189 = vand.u32 2147483647, %v933
    %v1190 = vand.u32 2147483647, %v934
    %v1191 = vand.u32 2147483647, %v935
    %v1192 = vand.u32 2147483647, %v936
    %v1193 = vand.u32 2147483647, %v937
    %v1194 = vand.u32 2147483647, %v938
    %v1195 = vand.u32 2147483647, %v939
    %v1196 = vand.u32 2147483647, %v940
    %v1197 = vand.u32 2147483647, %v941
    %v1198 = vand.u32 2147483647, %v942
    %v1199 = vand.u32 2147483647, %v943
    %v1200 = vand.u32 2147483647, %v944
    %v1201 = vand.u32 2147483647, %v945
    %v1202 = vand.u32 2147483647, %v946
    %v1203 = vand.u32 2147483647, %v947
    %v1204 = vand.u32 2147483647, %v948
    %v1205 = vand.u32 2147483647, %v949
    %v1206 = vand.u32 2147483647, %v950
    %v1207 = vand.u32 2147483647, %v951
    %v1208 = vand.u32 2147483647, %v952
    %v1209 = vand.u32 2147483647, %v953
    %v1210 = vand.u32 2147483647, %v954
    %v1211 = vand.u32 2147483647, %v955
    %v1212 = vand.u32 2147483647, %v956
    %v1213 = vand.u32 2147483647, %v957
    %v1214 = vand.u32 2147483647, %v958
    %v1215 = vand.u32 2147483647, %v959
    %v1216 = vand.u32 2147483647, %v960
    %v1217 = vand.u32 2147483647, %v961
    %v1218 = vand.u32 2147483647, %v962
    %v1219 = vand.u32 2147483647, %v963
    %v1220 = vand.u32 2147483647, %v964
    %v1221 = vand.u32 2147483647, %v965
    %v1222 = vand.u32 2147483647, %v966
    %v1223 = vand.u32 2147483647, %v967
    %v1224 = vand.u32 2147483647, %v968
    %v1225 = vand.u32 2147483647, %v969
    %v1226 = vand.u32 2147483647, %v970
    %v1227 = vand.u32 2147483647, %v971
    %v1228 = vand.u32 2147483647, %v972
    %v1229 = vand.u32 2147483647, %v973
    %v1230 = vand.u32 2147483647, %v974
    %v1231 = vand.u32 2147483647, %v975
    %v1232 = vand.u32 2147483647, %v976
    %v1233 = vsub.f32 1.0, %v977
    %v1234 = vsub.f32 1.0, %v978
    %v1235 = vsub.f32 1.0, %v979
    %v1236 = vsub.f32 1.0, %v980
    %v1237 = vsub.f32 1.0, %v981
    %v1238 = vsub.f32 1.0, %v982
    %v1239 = vsub.f32 1.0, %v983
    %v1240 = vsub.f32 1.0, %v984
    %v1241 = vsub.f32 1.0, %v985
    %v1242 = vsub.f32 1.0, %v986
    %v1243 = vsub.f32 1.0, %v987
    %v1244 = vsub.f32 1.0, %v988
    %v1245 = vsub.f32 1.0, %v989
    %v1246 = vsub.f32 1.0, %v990
    %v1247 = vsub.f32 1.0, %v991
    %v1248 = vsub.f32 1.0, %v992
    %v1249 = vsub.f32 1.0, %v993
    %v1250 = vsub.f32 1.0, %v994
    %v1251 = vsub.f32 1.0, %v995
    %v1252 = vsub.f32 1.0, %v996
    %v1253 = vsub.f32 1.0, %v997
    %v1254 = vsub.f32 1.0, %v998
    %v1255 = vsub.f32 1.0, %v999
    %v1256 = vsub.f32 1.0, %v1000
    %v1257 = vsub.f32 1.0, %v1001
    %v1258 = vsub.f32 1.0, %v1002
    %v1259 = vsub.f32 1.0, %v1003
    %v1260 = vsub.f32 1.0, %v1004
    %v1261 = vsub.f32 1.0, %v1005
    %v1262 = vsub.f32 1.0, %v1006
    %v1263 = vsub.f32 1.0, %v1007
    %v1264 = vsub.f32 1.0, %v1008
    %v1265 = vsub.f32 1.0, %v1009
    %v1266 = vsub.f32 1.0, %v1010
    %v1267 = vsub.f32 1.0, %v1011
    %v1268 = vsub.f32 1.0, %v1012
    %v1269 = vsub.f32 1.0, %v1013
    %v1270 = vsub.f32 1.0, %v1014
    %v1271 = vsub.f32 1.0, %v1015
    %v1272 = vsub.f32 1.0, %v1016
    %v1273 = vsub.f32 1.0, %v1017
    %v1274 = vsub.f32 1.0, %v1018
    %v1275 = vsub.f32 1.0, %v1019
    %v1276 = vsub.f32 1.0, %v1020
    %v1277 = vsub.f32 1.0, %v1021
    %v1278 = vsub.f32 1.0, %v1022
    %v1279 = vsub.f32 1.0, %v1023
    %v1280 = vsub.f32 1.0, %v1024
    %v1281 = vsub.f32 1.0, %v1025
    %v1282 = vsub.f32 1.0, %v1026
    %v1283 = vsub.f32 1.0, %v1027
    %v1284 = vsub.f32 1.0, %v1028
    %v1285 = vsub.f32 1.0, %v1029
    %v1286 = vsub.f32 1.0, %v1030
    %v1287 = vsub.f32 1.0, %v1031
    %v1288 = vsub.f32 1.0, %v1032
    %v1289 = vsub.f32 1.0, %v1033
    %v1290 = vsub.f32 1.0, %v1034
    %v1291 = vsub.f32 1.0, %v1035
    %v1292 = vsub.f32 1.0, %v1036
    %v1293 = vsub.f32 1.0, %v1037
    %v1294 = vsub.f32 1.0, %v1038
    %v1295 = vsub.f32 1.0, %v1039
    %v1296 = vsub.f32 1.0, %v1040
    %v1297 = vsub.f32 1.0, %v1041
    %v1298 = vsub.f32 1.0, %v1042
    %v1299 = vsub.f32 1.0, %v1043
    %v1300 = vsub.f32 1.0, %v1044
    %v1301 = vsub.f32 1.0, %v1045
    %v1302 = vsub.f32 1.0, %v1046
    %v1303 = vsub.f32 1.0, %v1047
    %v1304 = vsub.f32 1.0, %v1048
    %v1305 = vsub.f32 1.0, %v1049
    %v1306 = vsub.f32 1.0, %v1050
    %v1307 = vsub.f32 1.0, %v1051
    %v1308 = vsub.f32 1.0, %v1052
    %v1309 = vsub.f32 1.0, %v1053
    %v1310 = vsub.f32 1.0, %v1054
    %v1311 = vsub.f32 1.0, %v1055
    %v1312 = vsub.f32 1.0, %v1056
    %v1313 = vsub.f32 1.0, %v1057
    %v1314 = vsub.f32 1.0, %v1058
    %v1315 = vsub.f32 1.0, %v1059
    %v1316 = vsub.f32 1.0, %v1060
    %v1317 = vsub.f32 1.0, %v1061
    %v1318 = vsub.f32 1.0, %v1062
    %v1319 = vsub.f32 1.0, %v1063
    %v1320 = vsub.f32 1.0, %v1064
    %v1321 = vsub.f32 1.0, %v1065
    %v1322 = vsub.f32 1.0, %v1066
    %v1323 = vsub.f32 1.0, %v1067
    %v1324 = vsub.f32 1.0, %v1068
    %v1325 = vsub.f32 1.0, %v1069
    %v1326 = vsub.f32 1.0, %v1070
    %v1327 = vsub.f32 1.0, %v1071
    %v1328 = vsub.f32 1.0, %v1072
    %v1329 = vsub.f32 1.0, %v1073
    %v1330 = vsub.f32 1.0, %v1074
    %v1331 = vsub.f32 1.0, %v1075
    %v1332 = vsub.f32 1.0, %v1076
    %v1333 = vsub.f32 1.0, %v1077
    %v1334 = vsub.f32 1.0, %v1078
    %v1335 = vsub.f32 1.0, %v1079
    %v1336 = vsub.f32 1.0, %v1080
    %v1337 = vsub.f32 1.0, %v1081
    %v1338 = vsub.f32 1.0, %v1082
    %v1339 = vsub.f32 1.0, %v1083
    %v1340 = vsub.f32 1.0, %v1084
    %v1341 = vsub.f32 1.0, %v1085
    %v1342 = vsub.f32 1.0, %v1086
    %v1343 = vsub.f32 1.0, %v1087
    %v1344 = vsub.f32 1.0, %v1088
    %v1345 = vsub.f32 1.0, %v1089
    %v1346 = vsub.f32 1.0, %v1090
    %v1347 = vsub.f32 1.0, %v1091
    %v1348 = vsub.f32 1.0, %v1092
    %v1349 = vsub.f32 1.0, %v1093
    %v1350 = vsub.f32 1.0, %v1094
    %v1351 = vsub.f32 1.0, %v1095
    %v1352 = vsub.f32 1.0, %v1096
    %v1353 = vsub.f32 1.0, %v1097
    %v1354 = vsub.f32 1.0, %v1098
    %v1355 = vsub.f32 1.0, %v1099
    %v1356 = vsub.f32 1.0, %v1100
    %v1357 = vsub.f32 1.0, %v1101
    %v1358 = vsub.f32 1.0, %v1102
    %v1359 = vsub.f32 1.0, %v1103
    %v1360 = vsub.f32 1.0, %v1104
    %v1361 = vsub.f32 1.0, %v1105
    %v1362 = vsub.f32 1.0, %v1106
    %v1363 = vsub.f32 1.0, %v1107
    %v1364 = vsub.f32 1.0, %v1108
    %v1365 = vsub.f32 1.0, %v1109
    %v1366 = vsub.f32 1.0, %v1110
    %v1367 = vsub.f32 1.0, %v1111
    %v1368 = vsub.f32 1.0, %v1112
    %v1369 = vsub.f32 1.0, %v1113
    %v1370 = vsub.f32 1.0, %v1114
    %v1371 = vsub.f32 1.0, %v1115
    %v1372 = vsub.f32 1.0, %v1116
    %v1373 = vsub.f32 1.0, %v1117
    %v1374 = vsub.f32 1.0, %v1118
    %v1375 = vsub.f32 1.0, %v1119
    %v1376 = vsub.f32 1.0, %v1120
    %v1377 = vsub.f32 1.0, %v1121
    %v1378 = vsub.f32 1.0, %v1122
    %v1379 = vsub.f32 1.0, %v1123
    %v1380 = vsub.f32 1.0, %v1124
    %v1381 = vsub.f32 1.0, %v1125
    %v1382 = vsub.f32 1.0, %v1126
    %v1383 = vsub.f32 1.0, %v1127
    %v1384 = vsub.f32 1.0, %v1128
    %v1385 = vsub.f32 1.0, %v1129
    %v1386 = vsub.f32 1.0, %v1130
    %v1387 = vsub.f32 1.0, %v1131
    %v1388 = vsub.f32 1.0, %v1132
    %v1389 = vsub.f32 1.0, %v1133
    %v1390 = vsub.f32 1.0, %v1134
    %v1391 = vsub.f32 1.0, %v1135
    %v1392 = vsub.f32 1.0, %v1136
    %v1393 = vsub.f32 1.0, %v1137
    %v1394 = vsub.f32 1.0, %v1138
    %v1395 = vsub.f32 1.0, %v1139
    %v1396 = vsub.f32 1.0, %v1140
    %v1397 = vsub.f32 1.0, %v1141
    %v1398 = vsub.f32 1.0, %v1142
    %v1399 = vsub.f32 1.0, %v1143
    %v1400 = vsub.f32 1.0, %v1144
    %v1401 = vsub.f32 1.0, %v1145
    %v1402 = vsub.f32 1.0, %v1146
    %v1403 = vsub.f32 1.0, %v1147
    %v1404 = vsub.f32 1.0, %v1148
    %v1405 = vsub.f32 1.0, %v1149
    %v1406 = vsub.f32 1.0, %v1150
    %v1407 = vsub.f32 1.0, %v1151
    %v1408 = vsub.f32 1.0, %v1152
    %v1409 = vsub.f32 1.0, %v1153
    %v1410 = vsub.f32 1.0, %v1154
    %v1411 = vsub.f32 1.0, %v1155
    %v1412 = vsub.f32 1.0, %v1156
    %v1413 = vsub.f32 1.0, %v1157
    %v1414 = vsub.f32 1.0, %v1158
    %v1415 = vsub.f32 1.0, %v1159
    %v1416 = vsub.f32 1.0, %v1160
    %v1417 = vsub.f32 1.0, %v1161
    %v1418 = vsub.f32 1.0, %v1162
    %v1419 = vsub.f32 1.0, %v1163
    %v1420 = vsub.f32 1.0, %v1164
    %v1421 = vsub.f32 1.0, %v1165
    %v1422 = vsub.f32 1.0, %v1166
    %v1423 = vsub.f32 1.0, %v1167
    %v1424 = vsub.f32 1.0, %v1168
    %v1425 = vsub.f32 1.0, %v1169
    %v1426 = vsub.f32 1.0, %v1170
    %v1427 = vsub.f32 1.0, %v1171
    %v1428 = vsub.f32 1.0, %v1172
    %v1429 = vsub.f32 1.0, %v1173
    %v1430 = vsub.f32 1.0, %v1174
    %v1431 = vsub.f32 1.0, %v1175
    %v1432 = vsub.f32 1.0, %v1176
    %v1433 = vsub.f32 1.0, %v1177
    %v1434 = vsub.f32 1.0, %v1178
    %v1435 = vsub.f32 1.0, %v1179
    %v1436 = vsub.f32 1.0, %v1180
    %v1437 = vsub.f32 1.0, %v1181
    %v1438 = vsub.f32 1.0, %v1182
    %v1439 = vsub.f32 1.0, %v1183
    %v1440 = vsub.f32 1.0, %v1184
    %v1441 = vsub.f32 1.0, %v1185
    %v1442 = vsub.f32 1.0, %v1186
    %v1443 = vsub.f32 1.0, %v1187
    %v1444 = vsub.f32 1.0, %v1188
    %v1445 = vsub.f32 1.0, %v1189
    %v1446 = vsub.f32 1.0, %v1190
    %v1447 = vsub.f32 1.0, %v1191
    %v1448 = vsub.f32 1.0, %v1192
    %v1449 = vsub.f32 1.0, %v1193
    %v1450 = vsub.f32 1.0, %v1194
    %v1451 = vsub.f32 1.0, %v1195
    %v1452 = vsub.f32 1.0, %v1196
    %v1453 = vsub.f32 1.0, %v1197
    %v1454 = vsub.f32 1.0, %v1198
    %v1455 = vsub.f32 1.0, %v1199
    %v1456 = vsub.f32 1.0, %v1200
    %v1457 = vsub.f32 1.0, %v1201
    %v1458 = vsub.f32 1.0, %v1202
    %v1459 = vsub.f32 1.0, %v1203
    %v1460 = vsub.f32 1.0, %v1204
    %v1461 = vsub.f32 1.0, %v1205
    %v1462 = vsub.f32 1.0, %v1206
    %v1463 = vsub.f32 1.0, %v1207
    %v1464 = vsub.f32 1.0, %v1208
    %v1465 = vsub.f32 1.0, %v1209
    %v1466 = vsub.f32 1.0, %v1210
    %v1467 = vsub.f32 1.0, %v1211
    %v1468 = vsub.f32 1.0, %v1212
    %v1469 = vsub.f32 1.0, %v1213
    %v1470 = vsub.f32 1.0, %v1214
    %v1471 = vsub.f32 1.0, %v1215
    %v1472 = vsub.f32 1.0, %v1216
    %v1473 = vsub.f32 1.0, %v1217
    %v1474 = vsub.f32 1.0, %v1218
    %v1475 = vsub.f32 1.0, %v1219
    %v1476 = vsub.f32 1.0, %v1220
    %v1477 = vsub.f32 1.0, %v1221
    %v1478 = vsub.f32 1.0, %v1222
    %v1479 = vsub.f32 1.0, %v1223
    %v1480 = vsub.f32 1.0, %v1224
    %v1481 = vsub.f32 1.0, %v1225
    %v1482 = vsub.f32 1.0, %v1226
    %v1483 = vsub.f32 1.0, %v1227
    %v1484 = vsub.f32 1.0, %v1228
    %v1485 = vsub.f32 1.0, %v1229
    %v1486 = vsub.f32 1.0, %v1230
    %v1487 = vsub.f32 1.0, %v1231
    %v1488 = vsub.f32 1.0, %v1232
    %v1489 = vmax.f32 %v1233, 0.0
    %v1490 = vmax.f32 %v1234, 0.0
    %v1491 = vmax.f32 %v1235, 0.0
    %v1492 = vmax.f32 %v1236, 0.0
    %v1493 = vmax.f32 %v1237, 0.0
    %v1494 = vmax.f32 %v1238, 0.0
    %v1495 = vmax.f32 %v1239, 0.0
    %v1496 = vmax.f32 %v1240, 0.0
    %v1497 = vmax.f32 %v1241, 0.0
    %v1498 = vmax.f32 %v1242, 0.0
    %v1499 = vmax.f32 %v1243, 0.0
    %v1500 = vmax.f32 %v1244, 0.0
    %v1501 = vmax.f32 %v1245, 0.0
    %v1502 = vmax.f32 %v1246, 0.0
    %v1503 = vmax.f32 %v1247, 0.0
    %v1504 = vmax.f32 %v1248, 0.0
    %v1505 = vmax.f32 %v1249, 0.0
    %v1506 = vmax.f32 %v1250, 0.0
    %v1507 = vmax.f32 %v1251, 0.0
    %v1508 = vmax.f32 %v1252, 0.0
    %v1509 = vmax.f32 %v1253, 0.0
    %v1510 = vmax.f32 %v1254, 0.0
    %v1511 = vmax.f32 %v1255, 0.0
    %v1512 = vmax.f32 %v1256, 0.0
    %v1513 = vmax.f32 %v1257, 0.0
    %v1514 = vmax.f32 %v1258, 0.0
    %v1515 = vmax.f32 %v1259, 0.0
    %v1516 = vmax.f32 %v1260, 0.0
    %v1517 = vmax.f32 %v1261, 0.0
    %v1518 = vmax.f32 %v1262, 0.0
    %v1519 = vmax.f32 %v1263, 0.0
    %v1520 = vmax.f32 %v1264, 0.0
    %v1521 = vmax.f32 %v1265, 0.0
    %v1522 = vmax.f32 %v1266, 0.0
    %v1523 = vmax.f32 %v1267, 0.0
    %v1524 = vmax.f32 %v1268, 0.0
    %v1525 = vmax.f32 %v1269, 0.0
    %v1526 = vmax.f32 %v1270, 0.0
    %v1527 = vmax.f32 %v1271, 0.0
    %v1528 = vmax.f32 %v1272, 0.0
    %v1529 = vmax.f32 %v1273, 0.0
    %v1530 = vmax.f32 %v1274, 0.0
    %v1531 = vmax.f32 %v1275, 0.0
    %v1532 = vmax.f32 %v1276, 0.0
    %v1533 = vmax.f32 %v1277, 0.0
    %v1534 = vmax.f32 %v1278, 0.0
    %v1535 = vmax.f32 %v1279, 0.0
    %v1536 = vmax.f32 %v1280, 0.0
    %v1537 = vmax.f32 %v1281, 0.0
    %v1538 = vmax.f32 %v1282, 0.0
    %v1539 = vmax.f32 %v1283, 0.0
    %v1540 = vmax.f32 %v1284, 0.0
    %v1541 = vmax.f32 %v1285, 0.0
    %v1542 = vmax.f32 %v1286, 0.0
    %v1543 = vmax.f32 %v1287, 0.0
    %v1544 = vmax.f32 %v1288, 0.0
    %v1545 = vmax.f32 %v1289, 0.0
    %v1546 = vmax.f32 %v1290, 0.0
    %v1547 = vmax.f32 %v1291, 0.0
    %v1548 = vmax.f32 %v1292, 0.0
    %v1549 = vmax.f32 %v1293, 0.0
    %v1550 = vmax.f32 %v1294, 0.0
    %v1551 = vmax.f32 %v1295, 0.0
    %v1552 = vmax.f32 %v1296, 0.0
    %v1553 = vmax.f32 %v1297, 0.0
    %v1554 = vmax.f32 %v1298, 0.0
    %v1555 = vmax.f32 %v1299, 0.0
    %v1556 = vmax.f32 %v1300, 0.0
    %v1557 = vmax.f32 %v1301, 0.0
    %v1558 = vmax.f32 %v1302, 0.0
    %v1559 = vmax.f32 %v1303, 0.0
    %v1560 = vmax.f32 %v1304, 0.0
    %v1561 = vmax.f32 %v1305, 0.0
    %v1562 = vmax.f32 %v1306, 0.0
    %v1563 = vmax.f32 %v1307, 0.0
    %v1564 = vmax.f32 %v1308, 0.0
    %v1565 = vmax.f32 %v1309, 0.0
    %v1566 = vmax.f32 %v1310, 0.0
    %v1567 = vmax.f32 %v1311, 0.0
    %v1568 = vmax.f32 %v1312, 0.0
    %v1569 = vmax.f32 %v1313, 0.0
    %v1570 = vmax.f32 %v1314, 0.0
    %v1571 = vmax.f32 %v1315, 0.0
    %v1572 = vmax.f32 %v1316, 0.0
    %v1573 = vmax.f32 %v1317, 0.0
    %v1574 = vmax.f32 %v1318, 0.0
    %v1575 = vmax.f32 %v1319, 0.0
    %v1576 = vmax.f32 %v1320, 0.0
    %v1577 = vmax.f32 %v1321, 0.0
    %v1578 = vmax.f32 %v1322, 0.0
    %v1579 = vmax.f32 %v1323, 0.0
    %v1580 = vmax.f32 %v1324, 0.0
    %v1581 = vmax.f32 %v1325, 0.0
    %v1582 = vmax.f32 %v1326, 0.0
    %v1583 = vmax.f32 %v1327, 0.0
    %v1584 = vmax.f32 %v1328, 0.0
    %v1585 = vmax.f32 %v1329, 0.0
    %v1586 = vmax.f32 %v1330, 0.0
    %v1587 = vmax.f32 %v1331, 0.0
    %v1588 = vmax.f32 %v1332, 0.0
    %v1589 = vmax.f32 %v1333, 0.0
    %v1590 = vmax.f32 %v1334, 0.0
    %v1591 = vmax.f32 %v1335, 0.0
    %v1592 = vmax.f32 %v1336, 0.0
    %v1593 = vmax.f32 %v1337, 0.0
    %v1594 = vmax.f32 %v1338, 0.0
    %v1595 = vmax.f32 %v1339, 0.0
    %v1596 = vmax.f32 %v1340, 0.0
    %v1597 = vmax.f32 %v1341, 0.0
    %v1598 = vmax.f32 %v1342, 0.0
    %v1599 = vmax.f32 %v1343, 0.0
    %v1600 = vmax.f32 %v1344, 0.0
    %v1601 = vmax.f32 %v1345, 0.0
    %v1602 = vmax.f32 %v1346, 0.0
    %v1603 = vmax.f32 %v1347, 0.0
    %v1604 = vmax.f32 %v1348, 0.0
    %v1605 = vmax.f32 %v1349, 0.0
    %v1606 = vmax.f32 %v1350, 0.0
    %v1607 = vmax.f32 %v1351, 0.0
    %v1608 = vmax.f32 %v1352, 0.0
    %v1609 = vmax.f32 %v1353, 0.0
    %v1610 = vmax.f32 %v1354, 0.0
    %v1611 = vmax.f32 %v1355, 0.0
    %v1612 = vmax.f32 %v1356, 0.0
    %v1613 = vmax.f32 %v1357, 0.0
    %v1614 = vmax.f32 %v1358, 0.0
    %v1615 = vmax.f32 %v1359, 0.0
    %v1616 = vmax.f32 %v1360, 0.0
    %v1617 = vmax.f32 %v1361, 0.0
    %v1618 = vmax.f32 %v1362, 0.0
    %v1619 = vmax.f32 %v1363, 0.0
    %v1620 = vmax.f32 %v1364, 0.0
    %v1621 = vmax.f32 %v1365, 0.0
    %v1622 = vmax.f32 %v1366, 0.0
    %v1623 = vmax.f32 %v1367, 0.0
    %v1624 = vmax.f32 %v1368, 0.0
    %v1625 = vmax.f32 %v1369, 0.0
    %v1626 = vmax.f32 %v1370, 0.0
    %v1627 = vmax.f32 %v1371, 0.0
    %v1628 = vmax.f32 %v1372, 0.0
    %v1629 = vmax.f32 %v1373, 0.0
    %v1630 = vmax.f32 %v1374, 0.0
    %v1631 = vmax.f32 %v1375, 0.0
    %v1632 = vmax.f32 %v1376, 0.0
    %v1633 = vmax.f32 %v1377, 0.0
    %v1634 = vmax.f32 %v1378, 0.0
    %v1635 = vmax.f32 %v1379, 0.0
    %v1636 = vmax.f32 %v1380, 0.0
    %v1637 = vmax.f32 %v1381, 0.0
    %v1638 = vmax.f32 %v1382, 0.0
    %v1639 = vmax.f32 %v1383, 0.0
    %v1640 = vmax.f32 %v1384, 0.0
    %v1641 = vmax.f32 %v1385, 0.0
    %v1642 = vmax.f32 %v1386, 0.0
    %v1643 = vmax.f32 %v1387, 0.0
    %v1644 = vmax.f32 %v1388, 0.0
    %v1645 = vmax.f32 %v1389, 0.0
    %v1646 = vmax.f32 %v1390, 0.0
    %v1647 = vmax.f32 %v1391, 0.0
    %v1648 = vmax.f32 %v1392, 0.0
    %v1649 = vmax.f32 %v1393, 0.0
    %v1650 = vmax.f32 %v1394, 0.0
    %v1651 = vmax.f32 %v1395, 0.0
    %v1652 = vmax.f32 %v1396, 0.0
    %v1653 = vmax.f32 %v1397, 0.0
    %v1654 = vmax.f32 %v1398, 0.0
    %v1655 = vmax.f32 %v1399, 0.0
    %v1656 = vmax.f32 %v1400, 0.0
    %v1657 = vmax.f32 %v1401, 0.0
    %v1658 = vmax.f32 %v1402, 0.0
    %v1659 = vmax.f32 %v1403, 0.0
    %v1660 = vmax.f32 %v1404, 0.0
    %v1661 = vmax.f32 %v1405, 0.0
    %v1662 = vmax.f32 %v1406, 0.0
    %v1663 = vmax.f32 %v1407, 0.0
    %v1664 = vmax.f32 %v1408, 0.0
    %v1665 = vmax.f32 %v1409, 0.0
    %v1666 = vmax.f32 %v1410, 0.0
    %v1667 = vmax.f32 %v1411, 0.0
    %v1668 = vmax.f32 %v1412, 0.0
    %v1669 = vmax.f32 %v1413, 0.0
    %v1670 = vmax.f32 %v1414, 0.0
    %v1671 = vmax.f32 %v1415, 0.0
    %v1672 = vmax.f32 %v1416, 0.0
    %v1673 = vmax.f32 %v1417, 0.0
    %v1674 = vmax.f32 %v1418, 0.0
    %v1675 = vmax.f32 %v1419, 0.0
    %v1676 = vmax.f32 %v1420, 0.0
    %v1677 = vmax.f32 %v1421, 0.0
    %v1678 = vmax.f32 %v1422, 0.0
    %v1679 = vmax.f32 %v1423, 0.0
    %v1680 = vmax.f32 %v1424, 0.0
    %v1681 = vmax.f32 %v1425, 0.0
    %v1682 = vmax.f32 %v1426, 0.0
    %v1683 = vmax.f32 %v1427, 0.0
    %v1684 = vmax.f32 %v1428, 0.0
    %v1685 = vmax.f32 %v1429, 0.0
    %v1686 = vmax.f32 %v1430, 0.0
    %v1687 = vmax.f32 %v1431, 0.0
    %v1688 = vmax.f32 %v1432, 0.0
    %v1689 = vmax.f32 %v1433, 0.0
    %v1690 = vmax.f32 %v1434, 0.0
    %v1691 = vmax.f32 %v1435, 0.0
    %v1692 = vmax.f32 %v1436, 0.0
    %v1693 = vmax.f32 %v1437, 0.0
    %v1694 = vmax.f32 %v1438, 0.0
    %v1695 = vmax.f32 %v1439, 0.0
    %v1696 = vmax.f32 %v1440, 0.0
    %v1697 = vmax.f32 %v1441, 0.0
    %v1698 = vmax.f32 %v1442, 0.0
    %v1699 = vmax.f32 %v1443, 0.0
    %v1700 = vmax.f32 %v1444, 0.0
    %v1701 = vmax.f32 %v1445, 0.0
    %v1702 = vmax.f32 %v1446, 0.0
    %v1703 = vmax.f32 %v1447, 0.0
    %v1704 = vmax.f32 %v1448, 0.0
    %v1705 = vmax.f32 %v1449, 0.0
    %v1706 = vmax.f32 %v1450, 0.0
    %v1707 = vmax.f32 %v1451, 0.0
    %v1708 = vmax.f32 %v1452, 0.0
    %v1709 = vmax.f32 %v1453, 0.0
    %v1710 = vmax.f32 %v1454, 0.0
    %v1711 = vmax.f32 %v1455, 0.0
    %v1712 = vmax.f32 %v1456, 0.0
    %v1713 = vmax.f32 %v1457, 0.0
    %v1714 = vmax.f32 %v1458, 0.0
    %v1715 = vmax.f32 %v1459, 0.0
    %v1716 = vmax.f32 %v1460, 0.0
    %v1717 = vmax.f32 %v1461, 0.0
    %v1718 = vmax.f32 %v1462, 0.0
    %v1719 = vmax.f32 %v1463, 0.0
    %v1720 = vmax.f32 %v1464, 0.0
    %v1721 = vmax.f32 %v1465, 0.0
    %v1722 = vmax.f32 %v1466, 0.0
    %v1723 = vmax.f32 %v1467, 0.0
    %v1724 = vmax.f32 %v1468, 0.0
    %v1725 = vmax.f32 %v1469, 0.0
    %v1726 = vmax.f32 %v1470, 0.0
    %v1727 = vmax.f32 %v1471, 0.0
    %v1728 = vmax.f32 %v1472, 0.0
    %v1729 = vmax.f32 %v1473, 0.0
    %v1730 = vmax.f32 %v1474, 0.0
    %v1731 = vmax.f32 %v1475, 0.0
    %v1732 = vmax.f32 %v1476, 0.0
    %v1733 = vmax.f32 %v1477, 0.0
    %v1734 = vmax.f32 %v1478, 0.0
    %v1735 = vmax.f32 %v1479, 0.0
    %v1736 = vmax.f32 %v1480, 0.0
    %v1737 = vmax.f32 %v1481, 0.0
    %v1738 = vmax.f32 %v1482, 0.0
    %v1739 = vmax.f32 %v1483, 0.0
    %v1740 = vmax.f32 %v1484, 0.0
    %v1741 = vmax.f32 %v1485, 0.0
    %v1742 = vmax.f32 %v1486, 0.0
    %v1743 = vmax.f32 %v1487, 0.0
    %v1744 = vmax.f32 %v1488, 0.0
    %v1745 = vsub.f32 %v713, %v325
    %v1746 = vsub.f32 %v713, %v326
    %v1747 = vsub.f32 %v713, %v327
    %v1748 = vsub.f32 %v713, %v328
    %v1749 = vsub.f32 %v713, %v329
    %v1750 = vsub.f32 %v713, %v330
    %v1751 = vsub.f32 %v713, %v331
    %v1752 = vsub.f32 %v713, %v332
    %v1753 = vsub.f32 %v713, %v333
    %v1754 = vsub.f32 %v713, %v334
    %v1755 = vsub.f32 %v713, %v335
    %v1756 = vsub.f32 %v713, %v336
    %v1757 = vsub.f32 %v713, %v337
    %v1758 = vsub.f32 %v713, %v338
    %v1759 = vsub.f32 %v713, %v339
    %v1760 = vsub.f32 %v713, %v340
    %v1761 = vsub.f32 %v713, %v341
    %v1762 = vsub.f32 %v713, %v342
    %v1763 = vsub.f32 %v713, %v343
    %v1764 = vsub.f32 %v713, %v344
    %v1765 = vsub.f32 %v713, %v345
    %v1766 = vsub.f32 %v713, %v346
    %v1767 = vsub.f32 %v713, %v347
    %v1768 = vsub.f32 %v713, %v348
    %v1769 = vsub.f32 %v713, %v349
    %v1770 = vsub.f32 %v713, %v350
    %v1771 = vsub.f32 %v713, %v351
    %v1772 = vsub.f32 %v713, %v352
    %v1773 = vsub.f32 %v713, %v353
    %v1774 = vsub.f32 %v713, %v354
    %v1775 = vsub.f32 %v713, %v355
    %v1776 = vsub.f32 %v713, %v356
    %v1777 = vsub.f32 %v714, %v325
    %v1778 = vsub.f32 %v714, %v326
    %v1779 = vsub.f32 %v714, %v327
    %v1780 = vsub.f32 %v714, %v328
    %v1781 = vsub.f32 %v714, %v329
    %v1782 = vsub.f32 %v714, %v330
    %v1783 = vsub.f32 %v714, %v331
    %v1784 = vsub.f32 %v714, %v332
    %v1785 = vsub.f32 %v714, %v333
    %v1786 = vsub.f32 %v714, %v334
    %v1787 = vsub.f32 %v714, %v335
    %v1788 = vsub.f32 %v714, %v336
    %v1789 = vsub.f32 %v714, %v337
    %v1790 = vsub.f32 %v714, %v338
    %v1791 = vsub.f32 %v714, %v339
    %v1792 = vsub.f32 %v714, %v340
    %v1793 = vsub.f32 %v714, %v341
    %v1794 = vsub.f32 %v714, %v342
    %v1795 = vsub.f32 %v714, %v343
    %v1796 = vsub.f32 %v714, %v344
    %v1797 = vsub.f32 %v714, %v345
    %v1798 = vsub.f32 %v714, %v346
    %v1799 = vsub.f32 %v714, %v347
    %v1800 = vsub.f32 %v714, %v348
    %v1801 = vsub.f32 %v714, %v349
    %v1802 = vsub.f32 %v714, %v350
    %v1803 = vsub.f32 %v714, %v351
    %v1804 = vsub.f32 %v714, %v352
    %v1805 = vsub.f32 %v714, %v353
    %v1806 = vsub.f32 %v714, %v354
    %v1807 = vsub.f32 %v714, %v355
    %v1808 = vsub.f32 %v714, %v356
    %v1809 = vsub.f32 %v715, %v325
    %v1810 = vsub.f32 %v715, %v326
    %v1811 = vsub.f32 %v715, %v327
    %v1812 = vsub.f32 %v715, %v328
    %v1813 = vsub.f32 %v715, %v329
    %v1814 = vsub.f32 %v715, %v330
    %v1815 = vsub.f32 %v715, %v331
    %v1816 = vsub.f32 %v715, %v332
    %v1817 = vsub.f32 %v715, %v333
    %v1818 = vsub.f32 %v715, %v334
    %v1819 = vsub.f32 %v715, %v335
    %v1820 = vsub.f32 %v715, %v336
    %v1821 = vsub.f32 %v715, %v337
    %v1822 = vsub.f32 %v715, %v338
    %v1823 = vsub.f32 %v715, %v339
    %v1824 = vsub.f32 %v715, %v340
    %v1825 = vsub.f32 %v715, %v341
    %v1826 = vsub.f32 %v715, %v342
    %v1827 = vsub.f32 %v715, %v343
    %v1828 = vsub.f32 %v715, %v344
    %v1829 = vsub.f32 %v715, %v345
    %v1830 = vsub.f32 %v715, %v346
    %v1831 = vsub.f32 %v715, %v347
    %v1832 = vsub.f32 %v715, %v348
    %v1833 = vsub.f32 %v715, %v349
    %v1834 = vsub.f32 %v715, %v350
    %v1835 = vsub.f32 %v715, %v351
    %v1836 = vsub.f32 %v715, %v352
    %v1837 = vsub.f32 %v715, %v353
    %v1838 = vsub.f32 %v715, %v354
    %v1839 = vsub.f32 %v715, %v355
    %v1840 = vsub.f32 %v715, %v356
    %v1841 = vsub.f32 %v716, %v325
    %v1842 = vsub.f32 %v716, %v326
    %v1843 = vsub.f32 %v716, %v327
    %v1844 = vsub.f32 %v716, %v328
    %v1845 = vsub.f32 %v716, %v329
    %v1846 = vsub.f32 %v716, %v330
    %v1847 = vsub.f32 %v716, %v331
    %v1848 = vsub.f32 %v716, %v332
    %v1849 = vsub.f32 %v716, %v333
    %v1850 = vsub.f32 %v716, %v334
    %v1851 = vsub.f32 %v716, %v335
    %v1852 = vsub.f32 %v716, %v336
    %v1853 = vsub.f32 %v716, %v337
    %v1854 = vsub.f32 %v716, %v338
    %v1855 = vsub.f32 %v716, %v339
    %v1856 = vsub.f32 %v716, %v340
    %v1857 = vsub.f32 %v716, %v341
    %v1858 = vsub.f32 %v716, %v342
    %v1859 = vsub.f32 %v716, %v343
    %v1860 = vsub.f32 %v716, %v344
    %v1861 = vsub.f32 %v716, %v345
    %v1862 = vsub.f32 %v716, %v346
    %v1863 = vsub.f32 %v716, %v347
    %v1864 = vsub.f32 %v716, %v348
    %v1865 = vsub.f32 %v716, %v349
    %v1866 = vsub.f32 %v716, %v350
    %v1867 = vsub.f32 %v716, %v351
    %v1868 = vsub.f32 %v716, %v352
    %v1869 = vsub.f32 %v716, %v353
    %v1870 = vsub.f32 %v716, %v354
    %v1871 = vsub.f32 %v716, %v355
    %v1872 = vsub.f32 %v716, %v356
    %v1873 = vsub.f32 %v717, %v325
    %v1874 = vsub.f32 %v717, %v326
    %v1875 = vsub.f32 %v717, %v327
    %v1876 = vsub.f32 %v717, %v328
    %v1877 = vsub.f32 %v717, %v329
    %v1878 = vsub.f32 %v717, %v330
    %v1879 = vsub.f32 %v717, %v331
    %v1880 = vsub.f32 %v717, %v332
    %v1881 = vsub.f32 %v717, %v333
    %v1882 = vsub.f32 %v717, %v334
    %v1883 = vsub.f32 %v717, %v335
    %v1884 = vsub.f32 %v717, %v336
    %v1885 = vsub.f32 %v717, %v337
    %v1886 = vsub.f32 %v717, %v338
    %v1887 = vsub.f32 %v717, %v339
    %v1888 = vsub.f32 %v717, %v340
    %v1889 = vsub.f32 %v717, %v341
    %v1890 = vsub.f32 %v717, %v342
    %v1891 = vsub.f32 %v717, %v343
    %v1892 = vsub.f32 %v717, %v344
    %v1893 = vsub.f32 %v717, %v345
    %v1894 = vsub.f32 %v717, %v346
    %v1895 = vsub.f32 %v717, %v347
    %v1896 = vsub.f32 %v717, %v348
    %v1897 = vsub.f32 %v717, %v349
    %v1898 = vsub.f32 %v717, %v350
    %v1899 = vsub.f32 %v717, %v351
    %v1900 = vsub.f32 %v717, %v352
    %v1901 = vsub.f32 %v717, %v353
    %v1902 = vsub.f32 %v717, %v354
    %v1903 = vsub.f32 %v717, %v355
    %v1904 = vsub.f32 %v717, %v356
    %v1905 = vsub.f32 %v718, %v325
    %v1906 = vsub.f32 %v718, %v326
    %v1907 = vsub.f32 %v718, %v327
    %v1908 = vsub.f32 %v718, %v328
    %v1909 = vsub.f32 %v718, %v329
    %v1910 = vsub.f32 %v718, %v330
    %v1911 = vsub.f32 %v718, %v331
    %v1912 = vsub.f32 %v718, %v332
    %v1913 = vsub.f32 %v718, %v333
    %v1914 = vsub.f32 %v718, %v334
    %v1915 = vsub.f32 %v718, %v335
    %v1916 = vsub.f32 %v718, %v336
    %v1917 = vsub.f32 %v718, %v337
    %v1918 = vsub.f32 %v718, %v338
    %v1919 = vsub.f32 %v718, %v339
    %v1920 = vsub.f32 %v718, %v340
    %v1921 = vsub.f32 %v718, %v341
    %v1922 = vsub.f32 %v718, %v342
    %v1923 = vsub.f32 %v718, %v343
    %v1924 = vsub.f32 %v718, %v344
    %v1925 = vsub.f32 %v718, %v345
    %v1926 = vsub.f32 %v718, %v346
    %v1927 = vsub.f32 %v718, %v347
    %v1928 = vsub.f32 %v718, %v348
    %v1929 = vsub.f32 %v718, %v349
    %v1930 = vsub.f32 %v718, %v350
    %v1931 = vsub.f32 %v718, %v351
    %v1932 = vsub.f32 %v718, %v352
    %v1933 = vsub.f32 %v718, %v353
    %v1934 = vsub.f32 %v718, %v354
    %v1935 = vsub.f32 %v718, %v355
    %v1936 = vsub.f32 %v718, %v356
    %v1937 = vsub.f32 %v719, %v325
    %v1938 = vsub.f32 %v719, %v326
    %v1939 = vsub.f32 %v719, %v327
    %v1940 = vsub.f32 %v719, %v328
    %v1941 = vsub.f32 %v719, %v329
    %v1942 = vsub.f32 %v719, %v330
    %v1943 = vsub.f32 %v719, %v331
    %v1944 = vsub.f32 %v719, %v332
    %v1945 = vsub.f32 %v719, %v333
    %v1946 = vsub.f32 %v719, %v334
    %v1947 = vsub.f32 %v719, %v335
    %v1948 = vsub.f32 %v719, %v336
    %v1949 = vsub.f32 %v719, %v337
    %v1950 = vsub.f32 %v719, %v338
    %v1951 = vsub.f32 %v719, %v339
    %v1952 = vsub.f32 %v719, %v340
    %v1953 = vsub.f32 %v719, %v341
    %v1954 = vsub.f32 %v719, %v342
    %v1955 = vsub.f32 %v719, %v343
    %v1956 = vsub.f32 %v719, %v344
    %v1957 = vsub.f32 %v719, %v345
    %v1958 = vsub.f32 %v719, %v346
    %v1959 = vsub.f32 %v719, %v347
    %v1960 = vsub.f32 %v719, %v348
    %v1961 = vsub.f32 %v719, %v349
    %v1962 = vsub.f32 %v719, %v350
    %v1963 = vsub.f32 %v719, %v351
    %v1964 = vsub.f32 %v719, %v352
    %v1965 = vsub.f32 %v719, %v353
    %v1966 = vsub.f32 %v719, %v354
    %v1967 = vsub.f32 %v719, %v355
    %v1968 = vsub.f32 %v719, %v356
    %v1969 = vsub.f32 %v720, %v325
    %v1970 = vsub.f32 %v720, %v326
    %v1971 = vsub.f32 %v720, %v327
    %v1972 = vsub.f32 %v720, %v328
    %v1973 = vsub.f32 %v720, %v329
    %v1974 = vsub.f32 %v720, %v330
    %v1975 = vsub.f32 %v720, %v331
    %v1976 = vsub.f32 %v720, %v332
    %v1977 = vsub.f32 %v720, %v333
    %v1978 = vsub.f32 %v720, %v334
    %v1979 = vsub.f32 %v720, %v335
    %v1980 = vsub.f32 %v720, %v336
    %v1981 = vsub.f32 %v720, %v337
    %v1982 = vsub.f32 %v720, %v338
    %v1983 = vsub.f32 %v720, %v339
    %v1984 = vsub.f32 %v720, %v340
    %v1985 = vsub.f32 %v720, %v341
    %v1986 = vsub.f32 %v720, %v342
    %v1987 = vsub.f32 %v720, %v343
    %v1988 = vsub.f32 %v720, %v344
    %v1989 = vsub.f32 %v720, %v345
    %v1990 = vsub.f32 %v720, %v346
    %v1991 = vsub.f32 %v720, %v347
    %v1992 = vsub.f32 %v720, %v348
    %v1993 = vsub.f32 %v720, %v349
    %v1994 = vsub.f32 %v720, %v350
    %v1995 = vsub.f32 %v720, %v351
    %v1996 = vsub.f32 %v720, %v352
    %v1997 = vsub.f32 %v720, %v353
    %v1998 = vsub.f32 %v720, %v354
    %v1999 = vsub.f32 %v720, %v355
    %v2000 = vsub.f32 %v720, %v356
    %v2001 = vand.u32 2147483647, %v1745
    %v2002 = vand.u32 2147483647, %v1746
    %v2003 = vand.u32 2147483647, %v1747
    %v2004 = vand.u32 2147483647, %v1748
    %v2005 = vand.u32 2147483647, %v1749
    %v2006 = vand.u32 2147483647, %v1750
    %v2007 = vand.u32 2147483647, %v1751
    %v2008 = vand.u32 2147483647, %v1752
    %v2009 = vand.u32 2147483647, %v1753
    %v2010 = vand.u32 2147483647, %v1754
    %v2011 = vand.u32 2147483647, %v1755
    %v2012 = vand.u32 2147483647, %v1756
    %v2013 = vand.u32 2147483647, %v1757
    %v2014 = vand.u32 2147483647, %v1758
    %v2015 = vand.u32 2147483647, %v1759
    %v2016 = vand.u32 2147483647, %v1760
    %v2017 = vand.u32 2147483647, %v1761
    %v2018 = vand.u32 2147483647, %v1762
    %v2019 = vand.u32 2147483647, %v1763
    %v2020 = vand.u32 2147483647, %v1764
    %v2021 = vand.u32 2147483647, %v1765
    %v2022 = vand.u32 2147483647, %v1766
    %v2023 = vand.u32 2147483647, %v1767
    %v2024 = vand.u32 2147483647, %v1768
    %v2025 = vand.u32 2147483647, %v1769
    %v2026 = vand.u32 2147483647, %v1770
    %v2027 = vand.u32 2147483647, %v1771
    %v2028 = vand.u32 2147483647, %v1772
    %v2029 = vand.u32 2147483647, %v1773
    %v2030 = vand.u32 2147483647, %v1774
    %v2031 = vand.u32 2147483647, %v1775
    %v2032 = vand.u32 2147483647, %v1776
    %v2033 = vand.u32 2147483647, %v1777
    %v2034 = vand.u32 2147483647, %v1778
    %v2035 = vand.u32 2147483647, %v1779
    %v2036 = vand.u32 2147483647, %v1780
    %v2037 = vand.u32 2147483647, %v1781
    %v2038 = vand.u32 2147483647, %v1782
    %v2039 = vand.u32 2147483647, %v1783
    %v2040 = vand.u32 2147483647, %v1784
    %v2041 = vand.u32 2147483647, %v1785
    %v2042 = vand.u32 2147483647, %v1786
    %v2043 = vand.u32 2147483647, %v1787
    %v2044 = vand.u32 2147483647, %v1788
    %v2045 = vand.u32 2147483647, %v1789
    %v2046 = vand.u32 2147483647, %v1790
    %v2047 = vand.u32 2147483647, %v1791
    %v2048 = vand.u32 2147483647, %v1792
    %v2049 = vand.u32 2147483647, %v1793
    %v2050 = vand.u32 2147483647, %v1794
    %v2051 = vand.u32 2147483647, %v1795
    %v2052 = vand.u32 2147483647, %v1796
    %v2053 = vand.u32 2147483647, %v1797
    %v2054 = vand.u32 2147483647, %v1798
    %v2055 = vand.u32 2147483647, %v1799
    %v2056 = vand.u32 2147483647, %v1800
    %v2057 = vand.u32 2147483647, %v1801
    %v2058 = vand.u32 2147483647, %v1802
    %v2059 = vand.u32 2147483647, %v1803
    %v2060 = vand.u32 2147483647, %v1804
    %v2061 = vand.u32 2147483647, %v1805
    %v2062 = vand.u32 2147483647, %v1806
    %v2063 = vand.u32 2147483647, %v1807
    %v2064 = vand.u32 2147483647, %v1808
    %v2065 = vand.u32 2147483647, %v1809
    %v2066 = vand.u32 2147483647, %v1810
    %v2067 = vand.u32 2147483647, %v1811
    %v2068 = vand.u32 2147483647, %v1812
    %v2069 = vand.u32 2147483647, %v1813
    %v2070 = vand.u32 2147483647, %v1814
    %v2071 = vand.u32 2147483647, %v1815
    %v2072 = vand.u32 2147483647, %v1816
    %v2073 = vand.u32 2147483647, %v1817
    %v2074 = vand.u32 2147483647, %v1818
    %v2075 = vand.u32 2147483647, %v1819
    %v2076 = vand.u32 2147483647, %v1820
    %v2077 = vand.u32 2147483647, %v1821
    %v2078 = vand.u32 2147483647, %v1822
    %v2079 = vand.u32 2147483647, %v1823
    %v2080 = vand.u32 2147483647, %v1824
    %v2081 = vand.u32 2147483647, %v1825
    %v2082 = vand.u32 2147483647, %v1826
    %v2083 = vand.u32 2147483647, %v1827
    %v2084 = vand.u32 2147483647, %v1828
    %v2085 = vand.u32 2147483647, %v1829
    %v2086 = vand.u32 2147483647, %v1830
    %v2087 = vand.u32 2147483647, %v1831
    %v2088 = vand.u32 2147483647, %v1832
    %v2089 = vand.u32 2147483647, %v1833
    %v2090 = vand.u32 2147483647, %v1834
    %v2091 = vand.u32 2147483647, %v1835
    %v2092 = vand.u32 2147483647, %v1836
    %v2093 = vand.u32 2147483647, %v1837
    %v2094 = vand.u32 2147483647, %v1838
    %v2095 = vand.u32 2147483647, %v1839
    %v2096 = vand.u32 2147483647, %v1840
    %v2097 = vand.u32 2147483647, %v1841
    %v2098 = vand.u32 2147483647, %v1842
    %v2099 = vand.u32 2147483647, %v1843
    %v2100 = vand.u32 2147483647, %v1844
    %v2101 = vand.u32 2147483647, %v1845
    %v2102 = vand.u32 2147483647, %v1846
    %v2103 = vand.u32 2147483647, %v1847
    %v2104 = vand.u32 2147483647, %v1848
    %v2105 = vand.u32 2147483647, %v1849
    %v2106 = vand.u32 2147483647, %v1850
    %v2107 = vand.u32 2147483647, %v1851
    %v2108 = vand.u32 2147483647, %v1852
    %v2109 = vand.u32 2147483647, %v1853
    %v2110 = vand.u32 2147483647, %v1854
    %v2111 = vand.u32 2147483647, %v1855
    %v2112 = vand.u32 2147483647, %v1856
    %v2113 = vand.u32 2147483647, %v1857
    %v2114 = vand.u32 2147483647, %v1858
    %v2115 = vand.u32 2147483647, %v1859
    %v2116 = vand.u32 2147483647, %v1860
    %v2117 = vand.u32 2147483647, %v1861
    %v2118 = vand.u32 2147483647, %v1862
    %v2119 = vand.u32 2147483647, %v1863
    %v2120 = vand.u32 2147483647, %v1864
    %v2121 = vand.u32 2147483647, %v1865
    %v2122 = vand.u32 2147483647, %v1866
    %v2123 = vand.u32 2147483647, %v1867
    %v2124 = vand.u32 2147483647, %v1868
    %v2125 = vand.u32 2147483647, %v1869
    %v2126 = vand.u32 2147483647, %v1870
    %v2127 = vand.u32 2147483647, %v1871
    %v2128 = vand.u32 2147483647, %v1872
    %v2129 = vand.u32 2147483647, %v1873
    %v2130 = vand.u32 2147483647, %v1874
    %v2131 = vand.u32 2147483647, %v1875
    %v2132 = vand.u32 2147483647, %v1876
    %v2133 = vand.u32 2147483647, %v1877
    %v2134 = vand.u32 2147483647, %v1878
    %v2135 = vand.u32 2147483647, %v1879
    %v2136 = vand.u32 2147483647, %v1880
    %v2137 = vand.u32 2147483647, %v1881
    %v2138 = vand.u32 2147483647, %v1882
    %v2139 = vand.u32 2147483647, %v1883
    %v2140 = vand.u32 2147483647, %v1884
    %v2141 = vand.u32 2147483647, %v1885
    %v2142 = vand.u32 2147483647, %v1886
    %v2143 = vand.u32 2147483647, %v1887
    %v2144 = vand.u32 2147483647, %v1888
    %v2145 = vand.u32 2147483647, %v1889
    %v2146 = vand.u32 2147483647, %v1890
    %v2147 = vand.u32 2147483647, %v1891
    %v2148 = vand.u32 2147483647, %v1892
    %v2149 = vand.u32 2147483647, %v1893
    %v2150 = vand.u32 2147483647, %v1894
    %v2151 = vand.u32 2147483647, %v1895
    %v2152 = vand.u32 2147483647, %v1896
    %v2153 = vand.u32 2147483647, %v1897
    %v2154 = vand.u32 2147483647, %v1898
    %v2155 = vand.u32 2147483647, %v1899
    %v2156 = vand.u32 2147483647, %v1900
    %v2157 = vand.u32 2147483647, %v1901
    %v2158 = vand.u32 2147483647, %v1902
    %v2159 = vand.u32 2147483647, %v1903
    %v2160 = vand.u32 2147483647, %v1904
    %v2161 = vand.u32 2147483647, %v1905
    %v2162 = vand.u32 2147483647, %v1906
    %v2163 = vand.u32 2147483647, %v1907
    %v2164 = vand.u32 2147483647, %v1908
    %v2165 = vand.u32 2147483647, %v1909
    %v2166 = vand.u32 2147483647, %v1910
    %v2167 = vand.u32 2147483647, %v1911
    %v2168 = vand.u32 2147483647, %v1912
    %v2169 = vand.u32 2147483647, %v1913
    %v2170 = vand.u32 2147483647, %v1914
    %v2171 = vand.u32 2147483647, %v1915
    %v2172 = vand.u32 2147483647, %v1916
    %v2173 = vand.u32 2147483647, %v1917
    %v2174 = vand.u32 2147483647, %v1918
    %v2175 = vand.u32 2147483647, %v1919
    %v2176 = vand.u32 2147483647, %v1920
    %v2177 = vand.u32 2147483647, %v1921
    %v2178 = vand.u32 2147483647, %v1922
    %v2179 = vand.u32 2147483647, %v1923
    %v2180 = vand.u32 2147483647, %v1924
    %v2181 = vand.u32 2147483647, %v1925
    %v2182 = vand.u32 2147483647, %v1926
    %v2183 = vand.u32 2147483647, %v1927
    %v2184 = vand.u32 2147483647, %v1928
    %v2185 = vand.u32 2147483647, %v1929
    %v2186 = vand.u32 2147483647, %v1930
    %v2187 = vand.u32 2147483647, %v1931
    %v2188 = vand.u32 2147483647, %v1932
    %v2189 = vand.u32 2147483647, %v1933
    %v2190 = vand.u32 2147483647, %v1934
    %v2191 = vand.u32 2147483647, %v1935
    %v2192 = vand.u32 2147483647, %v1936
    %v2193 = vand.u32 2147483647, %v1937
    %v2194 = vand.u32 2147483647, %v1938
    %v2195 = vand.u32 2147483647, %v1939
    %v2196 = vand.u32 2147483647, %v1940
    %v2197 = vand.u32 2147483647, %v1941
    %v2198 = vand.u32 2147483647, %v1942
    %v2199 = vand.u32 2147483647, %v1943
    %v2200 = vand.u32 2147483647, %v1944
    %v2201 = vand.u32 2147483647, %v1945
    %v2202 = vand.u32 2147483647, %v1946
    %v2203 = vand.u32 2147483647, %v1947
    %v2204 = vand.u32 2147483647, %v1948
    %v2205 = vand.u32 2147483647, %v1949
    %v2206 = vand.u32 2147483647, %v1950
    %v2207 = vand.u32 2147483647, %v1951
    %v2208 = vand.u32 2147483647, %v1952
    %v2209 = vand.u32 2147483647, %v1953
    %v2210 = vand.u32 2147483647, %v1954
    %v2211 = vand.u32 2147483647, %v1955
    %v2212 = vand.u32 2147483647, %v1956
    %v2213 = vand.u32 2147483647, %v1957
    %v2214 = vand.u32 2147483647, %v1958
    %v2215 = vand.u32 2147483647, %v1959
    %v2216 = vand.u32 2147483647, %v1960
    %v2217 = vand.u32 2147483647, %v1961
    %v2218 = vand.u32 2147483647, %v1962
    %v2219 = vand.u32 2147483647, %v1963
    %v2220 = vand.u32 2147483647, %v1964
    %v2221 = vand.u32 2147483647, %v1965
    %v2222 = vand.u32 2147483647, %v1966
    %v2223 = vand.u32 2147483647, %v1967
    %v2224 = vand.u32 2147483647, %v1968
    %v2225 = vand.u32 2147483647, %v1969
    %v2226 = vand.u32 2147483647, %v1970
    %v2227 = vand.u32 2147483647, %v1971
    %v2228 = vand.u32 2147483647, %v1972
    %v2229 = vand.u32 2147483647, %v1973
    %v2230 = vand.u32 2147483647, %v1974
    %v2231 = vand.u32 2147483647, %v1975
    %v2232 = vand.u32 2147483647, %v1976
    %v2233 = vand.u32 2147483647, %v1977
    %v2234 = vand.u32 2147483647, %v1978
    %v2235 = vand.u32 2147483647, %v1979
    %v2236 = vand.u32 2147483647, %v1980
    %v2237 = vand.u32 2147483647, %v1981
    %v2238 = vand.u32 2147483647, %v1982
    %v2239 = vand.u32 2147483647, %v1983
    %v2240 = vand.u32 2147483647, %v1984
    %v2241 = vand.u32 2147483647, %v1985
    %v2242 = vand.u32 2147483647, %v1986
    %v2243 = vand.u32 2147483647, %v1987
    %v2244 = vand.u32 2147483647, %v1988
    %v2245 = vand.u32 2147483647, %v1989
    %v2246 = vand.u32 2147483647, %v1990
    %v2247 = vand.u32 2147483647, %v1991
    %v2248 = vand.u32 2147483647, %v1992
    %v2249 = vand.u32 2147483647, %v1993
    %v2250 = vand.u32 2147483647, %v1994
    %v2251 = vand.u32 2147483647, %v1995
    %v2252 = vand.u32 2147483647, %v1996
    %v2253 = vand.u32 2147483647, %v1997
    %v2254 = vand.u32 2147483647, %v1998
    %v2255 = vand.u32 2147483647, %v1999
    %v2256 = vand.u32 2147483647, %v2000
    %v2257 = vsub.f32 1.0, %v2001
    %v2258 = vsub.f32 1.0, %v2002
    %v2259 = vsub.f32 1.0, %v2003
    %v2260 = vsub.f32 1.0, %v2004
    %v2261 = vsub.f32 1.0, %v2005
    %v2262 = vsub.f32 1.0, %v2006
    %v2263 = vsub.f32 1.0, %v2007
    %v2264 = vsub.f32 1.0, %v2008
    %v2265 = vsub.f32 1.0, %v2009
    %v2266 = vsub.f32 1.0, %v2010
    %v2267 = vsub.f32 1.0, %v2011
    %v2268 = vsub.f32 1.0, %v2012
    %v2269 = vsub.f32 1.0, %v2013
    %v2270 = vsub.f32 1.0, %v2014
    %v2271 = vsub.f32 1.0, %v2015
    %v2272 = vsub.f32 1.0, %v2016
    %v2273 = vsub.f32 1.0, %v2017
    %v2274 = vsub.f32 1.0, %v2018
    %v2275 = vsub.f32 1.0, %v2019
    %v2276 = vsub.f32 1.0, %v2020
    %v2277 = vsub.f32 1.0, %v2021
    %v2278 = vsub.f32 1.0, %v2022
    %v2279 = vsub.f32 1.0, %v2023
    %v2280 = vsub.f32 1.0, %v2024
    %v2281 = vsub.f32 1.0, %v2025
    %v2282 = vsub.f32 1.0, %v2026
    %v2283 = vsub.f32 1.0, %v2027
    %v2284 = vsub.f32 1.0, %v2028
    %v2285 = vsub.f32 1.0, %v2029
    %v2286 = vsub.f32 1.0, %v2030
    %v2287 = vsub.f32 1.0, %v2031
    %v2288 = vsub.f32 1.0, %v2032
    %v2289 = vsub.f32 1.0, %v2033
    %v2290 = vsub.f32 1.0, %v2034
    %v2291 = vsub.f32 1.0, %v2035
    %v2292 = vsub.f32 1.0, %v2036
    %v2293 = vsub.f32 1.0, %v2037
    %v2294 = vsub.f32 1.0, %v2038
    %v2295 = vsub.f32 1.0, %v2039
    %v2296 = vsub.f32 1.0, %v2040
    %v2297 = vsub.f32 1.0, %v2041
    %v2298 = vsub.f32 1.0, %v2042
    %v2299 = vsub.f32 1.0, %v2043
    %v2300 = vsub.f32 1.0, %v2044
    %v2301 = vsub.f32 1.0, %v2045
    %v2302 = vsub.f32 1.0, %v2046
    %v2303 = vsub.f32 1.0, %v2047
    %v2304 = vsub.f32 1.0, %v2048
    %v2305 = vsub.f32 1.0, %v2049
    %v2306 = vsub.f32 1.0, %v2050
    %v2307 = vsub.f32 1.0, %v2051
    %v2308 = vsub.f32 1.0, %v2052
    %v2309 = vsub.f32 1.0, %v2053
    %v2310 = vsub.f32 1.0, %v2054
    %v2311 = vsub.f32 1.0, %v2055
    %v2312 = vsub.f32 1.0, %v2056
    %v2313 = vsub.f32 1.0, %v2057
    %v2314 = vsub.f32 1.0, %v2058
    %v2315 = vsub.f32 1.0, %v2059
    %v2316 = vsub.f32 1.0, %v2060
    %v2317 = vsub.f32 1.0, %v2061
    %v2318 = vsub.f32 1.0, %v2062
    %v2319 = vsub.f32 1.0, %v2063
    %v2320 = vsub.f32 1.0, %v2064
    %v2321 = vsub.f32 1.0, %v2065
    %v2322 = vsub.f32 1.0, %v2066
    %v2323 = vsub.f32 1.0, %v2067
    %v2324 = vsub.f32 1.0, %v2068
    %v2325 = vsub.f32 1.0, %v2069
    %v2326 = vsub.f32 1.0, %v2070
    %v2327 = vsub.f32 1.0, %v2071
    %v2328 = vsub.f32 1.0, %v2072
    %v2329 = vsub.f32 1.0, %v2073
    %v2330 = vsub.f32 1.0, %v2074
    %v2331 = vsub.f32 1.0, %v2075
    %v2332 = vsub.f32 1.0, %v2076
    %v2333 = vsub.f32 1.0, %v2077
    %v2334 = vsub.f32 1.0, %v2078
    %v2335 = vsub.f32 1.0, %v2079
    %v2336 = vsub.f32 1.0, %v2080
    %v2337 = vsub.f32 1.0, %v2081
    %v2338 = vsub.f32 1.0, %v2082
    %v2339 = vsub.f32 1.0, %v2083
    %v2340 = vsub.f32 1.0, %v2084
    %v2341 = vsub.f32 1.0, %v2085
    %v2342 = vsub.f32 1.0, %v2086
    %v2343 = vsub.f32 1.0, %v2087
    %v2344 = vsub.f32 1.0, %v2088
    %v2345 = vsub.f32 1.0, %v2089
    %v2346 = vsub.f32 1.0, %v2090
    %v2347 = vsub.f32 1.0, %v2091
    %v2348 = vsub.f32 1.0, %v2092
    %v2349 = vsub.f32 1.0, %v2093
    %v2350 = vsub.f32 1.0, %v2094
    %v2351 = vsub.f32 1.0, %v2095
    %v2352 = vsub.f32 1.0, %v2096
    %v2353 = vsub.f32 1.0, %v2097
    %v2354 = vsub.f32 1.0, %v2098
    %v2355 = vsub.f32 1.0, %v2099
    %v2356 = vsub.f32 1.0, %v2100
    %v2357 = vsub.f32 1.0, %v2101
    %v2358 = vsub.f32 1.0, %v2102
    %v2359 = vsub.f32 1.0, %v2103
    %v2360 = vsub.f32 1.0, %v2104
    %v2361 = vsub.f32 1.0, %v2105
    %v2362 = vsub.f32 1.0, %v2106
    %v2363 = vsub.f32 1.0, %v2107
    %v2364 = vsub.f32 1.0, %v2108
    %v2365 = vsub.f32 1.0, %v2109
    %v2366 = vsub.f32 1.0, %v2110
    %v2367 = vsub.f32 1.0, %v2111
    %v2368 = vsub.f32 1.0, %v2112
    %v2369 = vsub.f32 1.0, %v2113
    %v2370 = vsub.f32 1.0, %v2114
    %v2371 = vsub.f32 1.0, %v2115
    %v2372 = vsub.f32 1.0, %v2116
    %v2373 = vsub.f32 1.0, %v2117
    %v2374 = vsub.f32 1.0, %v2118
    %v2375 = vsub.f32 1.0, %v2119
    %v2376 = vsub.f32 1.0, %v2120
    %v2377 = vsub.f32 1.0, %v2121
    %v2378 = vsub.f32 1.0, %v2122
    %v2379 = vsub.f32 1.0, %v2123
    %v2380 = vsub.f32 1.0, %v2124
    %v2381 = vsub.f32 1.0, %v2125
    %v2382 = vsub.f32 1.0, %v2126
    %v2383 = vsub.f32 1.0, %v2127
    %v2384 = vsub.f32 1.0, %v2128
    %v2385 = vsub.f32 1.0, %v2129
    %v2386 = vsub.f32 1.0, %v2130
    %v2387 = vsub.f32 1.0, %v2131
    %v2388 = vsub.f32 1.0, %v2132
    %v2389 = vsub.f32 1.0, %v2133
    %v2390 = vsub.f32 1.0, %v2134
    %v2391 = vsub.f32 1.0, %v2135
    %v2392 = vsub.f32 1.0, %v2136
    %v2393 = vsub.f32 1.0, %v2137
    %v2394 = vsub.f32 1.0, %v2138
    %v2395 = vsub.f32 1.0, %v2139
    %v2396 = vsub.f32 1.0, %v2140
    %v2397 = vsub.f32 1.0, %v2141
    %v2398 = vsub.f32 1.0, %v2142
    %v2399 = vsub.f32 1.0, %v2143
    %v2400 = vsub.f32 1.0, %v2144
    %v2401 = vsub.f32 1.0, %v2145
    %v2402 = vsub.f32 1.0, %v2146
    %v2403 = vsub.f32 1.0, %v2147
    %v2404 = vsub.f32 1.0, %v2148
    %v2405 = vsub.f32 1.0, %v2149
    %v2406 = vsub.f32 1.0, %v2150
    %v2407 = vsub.f32 1.0, %v2151
    %v2408 = vsub.f32 1.0, %v2152
    %v2409 = vsub.f32 1.0, %v2153
    %v2410 = vsub.f32 1.0, %v2154
    %v2411 = vsub.f32 1.0, %v2155
    %v2412 = vsub.f32 1.0, %v2156
    %v2413 = vsub.f32 1.0, %v2157
    %v2414 = vsub.f32 1.0, %v2158
    %v2415 = vsub.f32 1.0, %v2159
    %v2416 = vsub.f32 1.0, %v2160
    %v2417 = vsub.f32 1.0, %v2161
    %v2418 = vsub.f32 1.0, %v2162
    %v2419 = vsub.f32 1.0, %v2163
    %v2420 = vsub.f32 1.0, %v2164
    %v2421 = vsub.f32 1.0, %v2165
    %v2422 = vsub.f32 1.0, %v2166
    %v2423 = vsub.f32 1.0, %v2167
    %v2424 = vsub.f32 1.0, %v2168
    %v2425 = vsub.f32 1.0, %v2169
    %v2426 = vsub.f32 1.0, %v2170
    %v2427 = vsub.f32 1.0, %v2171
    %v2428 = vsub.f32 1.0, %v2172
    %v2429 = vsub.f32 1.0, %v2173
    %v2430 = vsub.f32 1.0, %v2174
    %v2431 = vsub.f32 1.0, %v2175
    %v2432 = vsub.f32 1.0, %v2176
    %v2433 = vsub.f32 1.0, %v2177
    %v2434 = vsub.f32 1.0, %v2178
    %v2435 = vsub.f32 1.0, %v2179
    %v2436 = vsub.f32 1.0, %v2180
    %v2437 = vsub.f32 1.0, %v2181
    %v2438 = vsub.f32 1.0, %v2182
    %v2439 = vsub.f32 1.0, %v2183
    %v2440 = vsub.f32 1.0, %v2184
    %v2441 = vsub.f32 1.0, %v2185
    %v2442 = vsub.f32 1.0, %v2186
    %v2443 = vsub.f32 1.0, %v2187
    %v2444 = vsub.f32 1.0, %v2188
    %v2445 = vsub.f32 1.0, %v2189
    %v2446 = vsub.f32 1.0, %v2190
    %v2447 = vsub.f32 1.0, %v2191
    %v2448 = vsub.f32 1.0, %v2192
    %v2449 = vsub.f32 1.0, %v2193
    %v2450 = vsub.f32 1.0, %v2194
    %v2451 = vsub.f32 1.0, %v2195
    %v2452 = vsub.f32 1.0, %v2196
    %v2453 = vsub.f32 1.0, %v2197
    %v2454 = vsub.f32 1.0, %v2198
    %v2455 = vsub.f32 1.0, %v2199
    %v2456 = vsub.f32 1.0, %v2200
    %v2457 = vsub.f32 1.0, %v2201
    %v2458 = vsub.f32 1.0, %v2202
    %v2459 = vsub.f32 1.0, %v2203
    %v2460 = vsub.f32 1.0, %v2204
    %v2461 = vsub.f32 1.0, %v2205
    %v2462 = vsub.f32 1.0, %v2206
    %v2463 = vsub.f32 1.0, %v2207
    %v2464 = vsub.f32 1.0, %v2208
    %v2465 = vsub.f32 1.0, %v2209
    %v2466 = vsub.f32 1.0, %v2210
    %v2467 = vsub.f32 1.0, %v2211
    %v2468 = vsub.f32 1.0, %v2212
    %v2469 = vsub.f32 1.0, %v2213
    %v2470 = vsub.f32 1.0, %v2214
    %v2471 = vsub.f32 1.0, %v2215
    %v2472 = vsub.f32 1.0, %v2216
    %v2473 = vsub.f32 1.0, %v2217
    %v2474 = vsub.f32 1.0, %v2218
    %v2475 = vsub.f32 1.0, %v2219
    %v2476 = vsub.f32 1.0, %v2220
    %v2477 = vsub.f32 1.0, %v2221
    %v2478 = vsub.f32 1.0, %v2222
    %v2479 = vsub.f32 1.0, %v2223
    %v2480 = vsub.f32 1.0, %v2224
    %v2481 = vsub.f32 1.0, %v2225
    %v2482 = vsub.f32 1.0, %v2226
    %v2483 = vsub.f32 1.0, %v2227
    %v2484 = vsub.f32 1.0, %v2228
    %v2485 = vsub.f32 1.0, %v2229
    %v2486 = vsub.f32 1.0, %v2230
    %v2487 = vsub.f32 1.0, %v2231
    %v2488 = vsub.f32 1.0, %v2232
    %v2489 = vsub.f32 1.0, %v2233
    %v2490 = vsub.f32 1.0, %v2234
    %v2491 = vsub.f32 1.0, %v2235
    %v2492 = vsub.f32 1.0, %v2236
    %v2493 = vsub.f32 1.0, %v2237
    %v2494 = vsub.f32 1.0, %v2238
    %v2495 = vsub.f32 1.0, %v2239
    %v2496 = vsub.f32 1.0, %v2240
    %v2497 = vsub.f32 1.0, %v2241
    %v2498 = vsub.f32 1.0, %v2242
    %v2499 = vsub.f32 1.0, %v2243
    %v2500 = vsub.f32 1.0, %v2244
    %v2501 = vsub.f32 1.0, %v2245
    %v2502 = vsub.f32 1.0, %v2246
    %v2503 = vsub.f32 1.0, %v2247
    %v2504 = vsub.f32 1.0, %v2248
    %v2505 = vsub.f32 1.0, %v2249
    %v2506 = vsub.f32 1.0, %v2250
    %v2507 = vsub.f32 1.0, %v2251
    %v2508 = vsub.f32 1.0, %v2252
    %v2509 = vsub.f32 1.0, %v2253
    %v2510 = vsub.f32 1.0, %v2254
    %v2511 = vsub.f32 1.0, %v2255
    %v2512 = vsub.f32 1.0, %v2256
    %v2513 = vmax.f32 %v2257, 0.0
    %v2514 = vmax.f32 %v2258, 0.0
    %v2515 = vmax.f32 %v2259, 0.0
    %v2516 = vmax.f32 %v2260, 0.0
    %v2517 = vmax.f32 %v2261, 0.0
    %v2518 = vmax.f32 %v2262, 0.0
    %v2519 = vmax.f32 %v2263, 0.0
    %v2520 = vmax.f32 %v2264, 0.0
    %v2521 = vmax.f32 %v2265, 0.0
    %v2522 = vmax.f32 %v2266, 0.0
    %v2523 = vmax.f32 %v2267, 0.0
    %v2524 = vmax.f32 %v2268, 0.0
    %v2525 = vmax.f32 %v2269, 0.0
    %v2526 = vmax.f32 %v2270, 0.0
    %v2527 = vmax.f32 %v2271, 0.0
    %v2528 = vmax.f32 %v2272, 0.0
    %v2529 = vmax.f32 %v2273, 0.0
    %v2530 = vmax.f32 %v2274, 0.0
    %v2531 = vmax.f32 %v2275, 0.0
    %v2532 = vmax.f32 %v2276, 0.0
    %v2533 = vmax.f32 %v2277, 0.0
    %v2534 = vmax.f32 %v2278, 0.0
    %v2535 = vmax.f32 %v2279, 0.0
    %v2536 = vmax.f32 %v2280, 0.0
    %v2537 = vmax.f32 %v2281, 0.0
    %v2538 = vmax.f32 %v2282, 0.0
    %v2539 = vmax.f32 %v2283, 0.0
    %v2540 = vmax.f32 %v2284, 0.0
    %v2541 = vmax.f32 %v2285, 0.0
    %v2542 = vmax.f32 %v2286, 0.0
    %v2543 = vmax.f32 %v2287, 0.0
    %v2544 = vmax.f32 %v2288, 0.0
    %v2545 = vmax.f32 %v2289, 0.0
    %v2546 = vmax.f32 %v2290, 0.0
    %v2547 = vmax.f32 %v2291, 0.0
    %v2548 = vmax.f32 %v2292, 0.0
    %v2549 = vmax.f32 %v2293, 0.0
    %v2550 = vmax.f32 %v2294, 0.0
    %v2551 = vmax.f32 %v2295, 0.0
    %v2552 = vmax.f32 %v2296, 0.0
    %v2553 = vmax.f32 %v2297, 0.0
    %v2554 = vmax.f32 %v2298, 0.0
    %v2555 = vmax.f32 %v2299, 0.0
    %v2556 = vmax.f32 %v2300, 0.0
    %v2557 = vmax.f32 %v2301, 0.0
    %v2558 = vmax.f32 %v2302, 0.0
    %v2559 = vmax.f32 %v2303, 0.0
    %v2560 = vmax.f32 %v2304, 0.0
    %v2561 = vmax.f32 %v2305, 0.0
    %v2562 = vmax.f32 %v2306, 0.0
    %v2563 = vmax.f32 %v2307, 0.0
    %v2564 = vmax.f32 %v2308, 0.0
    %v2565 = vmax.f32 %v2309, 0.0
    %v2566 = vmax.f32 %v2310, 0.0
    %v2567 = vmax.f32 %v2311, 0.0
    %v2568 = vmax.f32 %v2312, 0.0
    %v2569 = vmax.f32 %v2313, 0.0
    %v2570 = vmax.f32 %v2314, 0.0
    %v2571 = vmax.f32 %v2315, 0.0
    %v2572 = vmax.f32 %v2316, 0.0
    %v2573 = vmax.f32 %v2317, 0.0
    %v2574 = vmax.f32 %v2318, 0.0
    %v2575 = vmax.f32 %v2319, 0.0
    %v2576 = vmax.f32 %v2320, 0.0
    %v2577 = vmax.f32 %v2321, 0.0
    %v2578 = vmax.f32 %v2322, 0.0
    %v2579 = vmax.f32 %v2323, 0.0
    %v2580 = vmax.f32 %v2324, 0.0
    %v2581 = vmax.f32 %v2325, 0.0
    %v2582 = vmax.f32 %v2326, 0.0
    %v2583 = vmax.f32 %v2327, 0.0
    %v2584 = vmax.f32 %v2328, 0.0
    %v2585 = vmax.f32 %v2329, 0.0
    %v2586 = vmax.f32 %v2330, 0.0
    %v2587 = vmax.f32 %v2331, 0.0
    %v2588 = vmax.f32 %v2332, 0.0
    %v2589 = vmax.f32 %v2333, 0.0
    %v2590 = vmax.f32 %v2334, 0.0
    %v2591 = vmax.f32 %v2335, 0.0
    %v2592 = vmax.f32 %v2336, 0.0
    %v2593 = vmax.f32 %v2337, 0.0
    %v2594 = vmax.f32 %v2338, 0.0
    %v2595 = vmax.f32 %v2339, 0.0
    %v2596 = vmax.f32 %v2340, 0.0
    %v2597 = vmax.f32 %v2341, 0.0
    %v2598 = vmax.f32 %v2342, 0.0
    %v2599 = vmax.f32 %v2343, 0.0
    %v2600 = vmax.f32 %v2344, 0.0
    %v2601 = vmax.f32 %v2345, 0.0
    %v2602 = vmax.f32 %v2346, 0.0
    %v2603 = vmax.f32 %v2347, 0.0
    %v2604 = vmax.f32 %v2348, 0.0
    %v2605 = vmax.f32 %v2349, 0.0
    %v2606 = vmax.f32 %v2350, 0.0
    %v2607 = vmax.f32 %v2351, 0.0
    %v2608 = vmax.f32 %v2352, 0.0
    %v2609 = vmax.f32 %v2353, 0.0
    %v2610 = vmax.f32 %v2354, 0.0
    %v2611 = vmax.f32 %v2355, 0.0
    %v2612 = vmax.f32 %v2356, 0.0
    %v2613 = vmax.f32 %v2357, 0.0
    %v2614 = vmax.f32 %v2358, 0.0
    %v2615 = vmax.f32 %v2359, 0.0
    %v2616 = vmax.f32 %v2360, 0.0
    %v2617 = vmax.f32 %v2361, 0.0
    %v2618 = vmax.f32 %v2362, 0.0
    %v2619 = vmax.f32 %v2363, 0.0
    %v2620 = vmax.f32 %v2364, 0.0
    %v2621 = vmax.f32 %v2365, 0.0
    %v2622 = vmax.f32 %v2366, 0.0
    %v2623 = vmax.f32 %v2367, 0.0
    %v2624 = vmax.f32 %v2368, 0.0
    %v2625 = vmax.f32 %v2369, 0.0
    %v2626 = vmax.f32 %v2370, 0.0
    %v2627 = vmax.f32 %v2371, 0.0
    %v2628 = vmax.f32 %v2372, 0.0
    %v2629 = vmax.f32 %v2373, 0.0
    %v2630 = vmax.f32 %v2374, 0.0
    %v2631 = vmax.f32 %v2375, 0.0
    %v2632 = vmax.f32 %v2376, 0.0
    %v2633 = vmax.f32 %v2377, 0.0
    %v2634 = vmax.f32 %v2378, 0.0
    %v2635 = vmax.f32 %v2379, 0.0
    %v2636 = vmax.f32 %v2380, 0.0
    %v2637 = vmax.f32 %v2381, 0.0
    %v2638 = vmax.f32 %v2382, 0.0
    %v2639 = vmax.f32 %v2383, 0.0
    %v2640 = vmax.f32 %v2384, 0.0
    %v2641 = vmax.f32 %v2385, 0.0
    %v2642 = vmax.f32 %v2386, 0.0
    %v2643 = vmax.f32 %v2387, 0.0
    %v2644 = vmax.f32 %v2388, 0.0
    %v2645 = vmax.f32 %v2389, 0.0
    %v2646 = vmax.f32 %v2390, 0.0
    %v2647 = vmax.f32 %v2391, 0.0
    %v2648 = vmax.f32 %v2392, 0.0
    %v2649 = vmax.f32 %v2393, 0.0
    %v2650 = vmax.f32 %v2394, 0.0
    %v2651 = vmax.f32 %v2395, 0.0
    %v2652 = vmax.f32 %v2396, 0.0
    %v2653 = vmax.f32 %v2397, 0.0
    %v2654 = vmax.f32 %v2398, 0.0
    %v2655 = vmax.f32 %v2399, 0.0
    %v2656 = vmax.f32 %v2400, 0.0
    %v2657 = vmax.f32 %v2401, 0.0
    %v2658 = vmax.f32 %v2402, 0.0
    %v2659 = vmax.f32 %v2403, 0.0
    %v2660 = vmax.f32 %v2404, 0.0
    %v2661 = vmax.f32 %v2405, 0.0
    %v2662 = vmax.f32 %v2406, 0.0
    %v2663 = vmax.f32 %v2407, 0.0
    %v2664 = vmax.f32 %v2408, 0.0
    %v2665 = vmax.f32 %v2409, 0.0
    %v2666 = vmax.f32 %v2410, 0.0
    %v2667 = vmax.f32 %v2411, 0.0
    %v2668 = vmax.f32 %v2412, 0.0
    %v2669 = vmax.f32 %v2413, 0.0
    %v2670 = vmax.f32 %v2414, 0.0
    %v2671 = vmax.f32 %v2415, 0.0
    %v2672 = vmax.f32 %v2416, 0.0
    %v2673 = vmax.f32 %v2417, 0.0
    %v2674 = vmax.f32 %v2418, 0.0
    %v2675 = vmax.f32 %v2419, 0.0
    %v2676 = vmax.f32 %v2420, 0.0
    %v2677 = vmax.f32 %v2421, 0.0
    %v2678 = vmax.f32 %v2422, 0.0
    %v2679 = vmax.f32 %v2423, 0.0
    %v2680 = vmax.f32 %v2424, 0.0
    %v2681 = vmax.f32 %v2425, 0.0
    %v2682 = vmax.f32 %v2426, 0.0
    %v2683 = vmax.f32 %v2427, 0.0
    %v2684 = vmax.f32 %v2428, 0.0
    %v2685 = vmax.f32 %v2429, 0.0
    %v2686 = vmax.f32 %v2430, 0.0
    %v2687 = vmax.f32 %v2431, 0.0
    %v2688 = vmax.f32 %v2432, 0.0
    %v2689 = vmax.f32 %v2433, 0.0
    %v2690 = vmax.f32 %v2434, 0.0
    %v2691 = vmax.f32 %v2435, 0.0
    %v2692 = vmax.f32 %v2436, 0.0
    %v2693 = vmax.f32 %v2437, 0.0
    %v2694 = vmax.f32 %v2438, 0.0
    %v2695 = vmax.f32 %v2439, 0.0
    %v2696 = vmax.f32 %v2440, 0.0
    %v2697 = vmax.f32 %v2441, 0.0
    %v2698 = vmax.f32 %v2442, 0.0
    %v2699 = vmax.f32 %v2443, 0.0
    %v2700 = vmax.f32 %v2444, 0.0
    %v2701 = vmax.f32 %v2445, 0.0
    %v2702 = vmax.f32 %v2446, 0.0
    %v2703 = vmax.f32 %v2447, 0.0
    %v2704 = vmax.f32 %v2448, 0.0
    %v2705 = vmax.f32 %v2449, 0.0
    %v2706 = vmax.f32 %v2450, 0.0
    %v2707 = vmax.f32 %v2451, 0.0
    %v2708 = vmax.f32 %v2452, 0.0
    %v2709 = vmax.f32 %v2453, 0.0
    %v2710 = vmax.f32 %v2454, 0.0
    %v2711 = vmax.f32 %v2455, 0.0
    %v2712 = vmax.f32 %v2456, 0.0
    %v2713 = vmax.f32 %v2457, 0.0
    %v2714 = vmax.f32 %v2458, 0.0
    %v2715 = vmax.f32 %v2459, 0.0
    %v2716 = vmax.f32 %v2460, 0.0
    %v2717 = vmax.f32 %v2461, 0.0
    %v2718 = vmax.f32 %v2462, 0.0
    %v2719 = vmax.f32 %v2463, 0.0
    %v2720 = vmax.f32 %v2464, 0.0
    %v2721 = vmax.f32 %v2465, 0.0
    %v2722 = vmax.f32 %v2466, 0.0
    %v2723 = vmax.f32 %v2467, 0.0
    %v2724 = vmax.f32 %v2468, 0.0
    %v2725 = vmax.f32 %v2469, 0.0
    %v2726 = vmax.f32 %v2470, 0.0
    %v2727 = vmax.f32 %v2471, 0.0
    %v2728 = vmax.f32 %v2472, 0.0
    %v2729 = vmax.f32 %v2473, 0.0
    %v2730 = vmax.f32 %v2474, 0.0
    %v2731 = vmax.f32 %v2475, 0.0
    %v2732 = vmax.f32 %v2476, 0.0
    %v2733 = vmax.f32 %v2477, 0.0
    %v2734 = vmax.f32 %v2478, 0.0
    %v2735 = vmax.f32 %v2479, 0.0
    %v2736 = vmax.f32 %v2480, 0.0
    %v2737 = vmax.f32 %v2481, 0.0
    %v2738 = vmax.f32 %v2482, 0.0
    %v2739 = vmax.f32 %v2483, 0.0
    %v2740 = vmax.f32 %v2484, 0.0
    %v2741 = vmax.f32 %v2485, 0.0
    %v2742 = vmax.f32 %v2486, 0.0
    %v2743 = vmax.f32 %v2487, 0.0
    %v2744 = vmax.f32 %v2488, 0.0
    %v2745 = vmax.f32 %v2489, 0.0
    %v2746 = vmax.f32 %v2490, 0.0
    %v2747 = vmax.f32 %v2491, 0.0
    %v2748 = vmax.f32 %v2492, 0.0
    %v2749 = vmax.f32 %v2493, 0.0
    %v2750 = vmax.f32 %v2494, 0.0
    %v2751 = vmax.f32 %v2495, 0.0
    %v2752 = vmax.f32 %v2496, 0.0
    %v2753 = vmax.f32 %v2497, 0.0
    %v2754 = vmax.f32 %v2498, 0.0
    %v2755 = vmax.f32 %v2499, 0.0
    %v2756 = vmax.f32 %v2500, 0.0
    %v2757 = vmax.f32 %v2501, 0.0
    %v2758 = vmax.f32 %v2502, 0.0
    %v2759 = vmax.f32 %v2503, 0.0
    %v2760 = vmax.f32 %v2504, 0.0
    %v2761 = vmax.f32 %v2505, 0.0
    %v2762 = vmax.f32 %v2506, 0.0
    %v2763 = vmax.f32 %v2507, 0.0
    %v2764 = vmax.f32 %v2508, 0.0
    %v2765 = vmax.f32 %v2509, 0.0
    %v2766 = vmax.f32 %v2510, 0.0
    %v2767 = vmax.f32 %v2511, 0.0
    %v2768 = vmax.f32 %v2512, 0.0
    %v2769 = vmul.f32 %v1489, %v2513
    %v2770 = vmul.f32 %v1490, %v2514
    %v2771 = vmul.f32 %v1491, %v2515
    %v2772 = vmul.f32 %v1492, %v2516
    %v2773 = vmul.f32 %v1493, %v2517
    %v2774 = vmul.f32 %v1494, %v2518
    %v2775 = vmul.f32 %v1495, %v2519
    %v2776 = vmul.f32 %v1496, %v2520
    %v2777 = vmul.f32 %v1497, %v2521
    %v2778 = vmul.f32 %v1498, %v2522
    %v2779 = vmul.f32 %v1499, %v2523
    %v2780 = vmul.f32 %v1500, %v2524
    %v2781 = vmul.f32 %v1501, %v2525
    %v2782 = vmul.f32 %v1502, %v2526
    %v2783 = vmul.f32 %v1503, %v2527
    %v2784 = vmul.f32 %v1504, %v2528
    %v2785 = vmul.f32 %v1505, %v2529
    %v2786 = vmul.f32 %v1506, %v2530
    %v2787 = vmul.f32 %v1507, %v2531
    %v2788 = vmul.f32 %v1508, %v2532
    %v2789 = vmul.f32 %v1509, %v2533
    %v2790 = vmul.f32 %v1510, %v2534
    %v2791 = vmul.f32 %v1511, %v2535
    %v2792 = vmul.f32 %v1512, %v2536
    %v2793 = vmul.f32 %v1513, %v2537
    %v2794 = vmul.f32 %v1514, %v2538
    %v2795 = vmul.f32 %v1515, %v2539
    %v2796 = vmul.f32 %v1516, %v2540
    %v2797 = vmul.f32 %v1517, %v2541
    %v2798 = vmul.f32 %v1518, %v2542
    %v2799 = vmul.f32 %v1519, %v2543
    %v2800 = vmul.f32 %v1520, %v2544
    %v2801 = vmul.f32 %v1521, %v2545
    %v2802 = vmul.f32 %v1522, %v2546
    %v2803 = vmul.f32 %v1523, %v2547
    %v2804 = vmul.f32 %v1524, %v2548
    %v2805 = vmul.f32 %v1525, %v2549
    %v2806 = vmul.f32 %v1526, %v2550
    %v2807 = vmul.f32 %v1527, %v2551
    %v2808 = vmul.f32 %v1528, %v2552
    %v2809 = vmul.f32 %v1529, %v2553
    %v2810 = vmul.f32 %v1530, %v2554
    %v2811 = vmul.f32 %v1531, %v2555
    %v2812 = vmul.f32 %v1532, %v2556
    %v2813 = vmul.f32 %v1533, %v2557
    %v2814 = vmul.f32 %v1534, %v2558
    %v2815 = vmul.f32 %v1535, %v2559
    %v2816 = vmul.f32 %v1536, %v2560
    %v2817 = vmul.f32 %v1537, %v2561
    %v2818 = vmul.f32 %v1538, %v2562
    %v2819 = vmul.f32 %v1539, %v2563
    %v2820 = vmul.f32 %v1540, %v2564
    %v2821 = vmul.f32 %v1541, %v2565
    %v2822 = vmul.f32 %v1542, %v2566
    %v2823 = vmul.f32 %v1543, %v2567
    %v2824 = vmul.f32 %v1544, %v2568
    %v2825 = vmul.f32 %v1545, %v2569
    %v2826 = vmul.f32 %v1546, %v2570
    %v2827 = vmul.f32 %v1547, %v2571
    %v2828 = vmul.f32 %v1548, %v2572
    %v2829 = vmul.f32 %v1549, %v2573
    %v2830 = vmul.f32 %v1550, %v2574
    %v2831 = vmul.f32 %v1551, %v2575
    %v2832 = vmul.f32 %v1552, %v2576
    %v2833 = vmul.f32 %v1553, %v2577
    %v2834 = vmul.f32 %v1554, %v2578
    %v2835 = vmul.f32 %v1555, %v2579
    %v2836 = vmul.f32 %v1556, %v2580
    %v2837 = vmul.f32 %v1557, %v2581
    %v2838 = vmul.f32 %v1558, %v2582
    %v2839 = vmul.f32 %v1559, %v2583
    %v2840 = vmul.f32 %v1560, %v2584
    %v2841 = vmul.f32 %v1561, %v2585
    %v2842 = vmul.f32 %v1562, %v2586
    %v2843 = vmul.f32 %v1563, %v2587
    %v2844 = vmul.f32 %v1564, %v2588
    %v2845 = vmul.f32 %v1565, %v2589
    %v2846 = vmul.f32 %v1566, %v2590
    %v2847 = vmul.f32 %v1567, %v2591
    %v2848 = vmul.f32 %v1568, %v2592
    %v2849 = vmul.f32 %v1569, %v2593
    %v2850 = vmul.f32 %v1570, %v2594
    %v2851 = vmul.f32 %v1571, %v2595
    %v2852 = vmul.f32 %v1572, %v2596
    %v2853 = vmul.f32 %v1573, %v2597
    %v2854 = vmul.f32 %v1574, %v2598
    %v2855 = vmul.f32 %v1575, %v2599
    %v2856 = vmul.f32 %v1576, %v2600
    %v2857 = vmul.f32 %v1577, %v2601
    %v2858 = vmul.f32 %v1578, %v2602
    %v2859 = vmul.f32 %v1579, %v2603
    %v2860 = vmul.f32 %v1580, %v2604
    %v2861 = vmul.f32 %v1581, %v2605
    %v2862 = vmul.f32 %v1582, %v2606
    %v2863 = vmul.f32 %v1583, %v2607
    %v2864 = vmul.f32 %v1584, %v2608
    %v2865 = vmul.f32 %v1585, %v2609
    %v2866 = vmul.f32 %v1586, %v2610
    %v2867 = vmul.f32 %v1587, %v2611
    %v2868 = vmul.f32 %v1588, %v2612
    %v2869 = vmul.f32 %v1589, %v2613
    %v2870 = vmul.f32 %v1590, %v2614
    %v2871 = vmul.f32 %v1591, %v2615
    %v2872 = vmul.f32 %v1592, %v2616
    %v2873 = vmul.f32 %v1593, %v2617
    %v2874 = vmul.f32 %v1594, %v2618
    %v2875 = vmul.f32 %v1595, %v2619
    %v2876 = vmul.f32 %v1596, %v2620
    %v2877 = vmul.f32 %v1597, %v2621
    %v2878 = vmul.f32 %v1598, %v2622
    %v2879 = vmul.f32 %v1599, %v2623
    %v2880 = vmul.f32 %v1600, %v2624
    %v2881 = vmul.f32 %v1601, %v2625
    %v2882 = vmul.f32 %v1602, %v2626
    %v2883 = vmul.f32 %v1603, %v2627
    %v2884 = vmul.f32 %v1604, %v2628
    %v2885 = vmul.f32 %v1605, %v2629
    %v2886 = vmul.f32 %v1606, %v2630
    %v2887 = vmul.f32 %v1607, %v2631
    %v2888 = vmul.f32 %v1608, %v2632
    %v2889 = vmul.f32 %v1609, %v2633
    %v2890 = vmul.f32 %v1610, %v2634
    %v2891 = vmul.f32 %v1611, %v2635
    %v2892 = vmul.f32 %v1612, %v2636
    %v2893 = vmul.f32 %v1613, %v2637
    %v2894 = vmul.f32 %v1614, %v2638
    %v2895 = vmul.f32 %v1615, %v2639
    %v2896 = vmul.f32 %v1616, %v2640
    %v2897 = vmul.f32 %v1617, %v2641
    %v2898 = vmul.f32 %v1618, %v2642
    %v2899 = vmul.f32 %v1619, %v2643
    %v2900 = vmul.f32 %v1620, %v2644
    %v2901 = vmul.f32 %v1621, %v2645
    %v2902 = vmul.f32 %v1622, %v2646
    %v2903 = vmul.f32 %v1623, %v2647
    %v2904 = vmul.f32 %v1624, %v2648
    %v2905 = vmul.f32 %v1625, %v2649
    %v2906 = vmul.f32 %v1626, %v2650
    %v2907 = vmul.f32 %v1627, %v2651
    %v2908 = vmul.f32 %v1628, %v2652
    %v2909 = vmul.f32 %v1629, %v2653
    %v2910 = vmul.f32 %v1630, %v2654
    %v2911 = vmul.f32 %v1631, %v2655
    %v2912 = vmul.f32 %v1632, %v2656
    %v2913 = vmul.f32 %v1633, %v2657
    %v2914 = vmul.f32 %v1634, %v2658
    %v2915 = vmul.f32 %v1635, %v2659
    %v2916 = vmul.f32 %v1636, %v2660
    %v2917 = vmul.f32 %v1637, %v2661
    %v2918 = vmul.f32 %v1638, %v2662
    %v2919 = vmul.f32 %v1639, %v2663
    %v2920 = vmul.f32 %v1640, %v2664
    %v2921 = vmul.f32 %v1641, %v2665
    %v2922 = vmul.f32 %v1642, %v2666
    %v2923 = vmul.f32 %v1643, %v2667
    %v2924 = vmul.f32 %v1644, %v2668
    %v2925 = vmul.f32 %v1645, %v2669
    %v2926 = vmul.f32 %v1646, %v2670
    %v2927 = vmul.f32 %v1647, %v2671
    %v2928 = vmul.f32 %v1648, %v2672
    %v2929 = vmul.f32 %v1649, %v2673
    %v2930 = vmul.f32 %v1650, %v2674
    %v2931 = vmul.f32 %v1651, %v2675
    %v2932 = vmul.f32 %v1652, %v2676
    %v2933 = vmul.f32 %v1653, %v2677
    %v2934 = vmul.f32 %v1654, %v2678
    %v2935 = vmul.f32 %v1655, %v2679
    %v2936 = vmul.f32 %v1656, %v2680
    %v2937 = vmul.f32 %v1657, %v2681
    %v2938 = vmul.f32 %v1658, %v2682
    %v2939 = vmul.f32 %v1659, %v2683
    %v2940 = vmul.f32 %v1660, %v2684
    %v2941 = vmul.f32 %v1661, %v2685
    %v2942 = vmul.f32 %v1662, %v2686
    %v2943 = vmul.f32 %v1663, %v2687
    %v2944 = vmul.f32 %v1664, %v2688
    %v2945 = vmul.f32 %v1665, %v2689
    %v2946 = vmul.f32 %v1666, %v2690
    %v2947 = vmul.f32 %v1667, %v2691
    %v2948 = vmul.f32 %v1668, %v2692
    %v2949 = vmul.f32 %v1669, %v2693
    %v2950 = vmul.f32 %v1670, %v2694
    %v2951 = vmul.f32 %v1671, %v2695
    %v2952 = vmul.f32 %v1672, %v2696
    %v2953 = vmul.f32 %v1673, %v2697
    %v2954 = vmul.f32 %v1674, %v2698
    %v2955 = vmul.f32 %v1675, %v2699
    %v2956 = vmul.f32 %v1676, %v2700
    %v2957 = vmul.f32 %v1677, %v2701
    %v2958 = vmul.f32 %v1678, %v2702
    %v2959 = vmul.f32 %v1679, %v2703
    %v2960 = vmul.f32 %v1680, %v2704
    %v2961 = vmul.f32 %v1681, %v2705
    %v2962 = vmul.f32 %v1682, %v2706
    %v2963 = vmul.f32 %v1683, %v2707
    %v2964 = vmul.f32 %v1684, %v2708
    %v2965 = vmul.f32 %v1685, %v2709
    %v2966 = vmul.f32 %v1686, %v2710
    %v2967 = vmul.f32 %v1687, %v2711
    %v2968 = vmul.f32 %v1688, %v2712
    %v2969 = vmul.f32 %v1689, %v2713
    %v2970 = vmul.f32 %v1690, %v2714
    %v2971 = vmul.f32 %v1691, %v2715
    %v2972 = vmul.f32 %v1692, %v2716
    %v2973 = vmul.f32 %v1693, %v2717
    %v2974 = vmul.f32 %v1694, %v2718
    %v2975 = vmul.f32 %v1695, %v2719
    %v2976 = vmul.f32 %v1696, %v2720
    %v2977 = vmul.f32 %v1697, %v2721
    %v2978 = vmul.f32 %v1698, %v2722
    %v2979 = vmul.f32 %v1699, %v2723
    %v2980 = vmul.f32 %v1700, %v2724
    %v2981 = vmul.f32 %v1701, %v2725
    %v2982 = vmul.f32 %v1702, %v2726
    %v2983 = vmul.f32 %v1703, %v2727
    %v2984 = vmul.f32 %v1704, %v2728
    %v2985 = vmul.f32 %v1705, %v2729
    %v2986 = vmul.f32 %v1706, %v2730
    %v2987 = vmul.f32 %v1707, %v2731
    %v2988 = vmul.f32 %v1708, %v2732
    %v2989 = vmul.f32 %v1709, %v2733
    %v2990 = vmul.f32 %v1710, %v2734
    %v2991 = vmul.f32 %v1711, %v2735
    %v2992 = vmul.f32 %v1712, %v2736
    %v2993 = vmul.f32 %v1713, %v2737
    %v2994 = vmul.f32 %v1714, %v2738
    %v2995 = vmul.f32 %v1715, %v2739
    %v2996 = vmul.f32 %v1716, %v2740
    %v2997 = vmul.f32 %v1717, %v2741
    %v2998 = vmul.f32 %v1718, %v2742
    %v2999 = vmul.f32 %v1719, %v2743
    %v3000 = vmul.f32 %v1720, %v2744
    %v3001 = vmul.f32 %v1721, %v2745
    %v3002 = vmul.f32 %v1722, %v2746
    %v3003 = vmul.f32 %v1723, %v2747
    %v3004 = vmul.f32 %v1724, %v2748
    %v3005 = vmul.f32 %v1725, %v2749
    %v3006 = vmul.f32 %v1726, %v2750
    %v3007 = vmul.f32 %v1727, %v2751
    %v3008 = vmul.f32 %v1728, %v2752
    %v3009 = vmul.f32 %v1729, %v2753
    %v3010 = vmul.f32 %v1730, %v2754
    %v3011 = vmul.f32 %v1731, %v2755
    %v3012 = vmul.f32 %v1732, %v2756
    %v3013 = vmul.f32 %v1733, %v2757
    %v3014 = vmul.f32 %v1734, %v2758
    %v3015 = vmul.f32 %v1735, %v2759
    %v3016 = vmul.f32 %v1736, %v2760
    %v3017 = vmul.f32 %v1737, %v2761
    %v3018 = vmul.f32 %v1738, %v2762
    %v3019 = vmul.f32 %v1739, %v2763
    %v3020 = vmul.f32 %v1740, %v2764
    %v3021 = vmul.f32 %v1741, %v2765
    %v3022 = vmul.f32 %v1742, %v2766
    %v3023 = vmul.f32 %v1743, %v2767
    %v3024 = vmul.f32 %v1744, %v2768
    %v3025 = vld [vmem:[#allocation2] sm:$0xff]
    %v3026 = vld [vmem:[#allocation2 + $0x8] sm:$0xff]
    %v3027 = vld [vmem:[#allocation2 + $0x10] sm:$0xff]
    %v3028 = vld [vmem:[#allocation2 + $0x18] sm:$0xff]
    %v3029 = vld [vmem:[#allocation2 + $0x20] sm:$0xff]
    %v3030 = vld [vmem:[#allocation2 + $0x28] sm:$0xff]
    %v3031 = vld [vmem:[#allocation2 + $0x30] sm:$0xff]
    %v3032 = vld [vmem:[#allocation2 + $0x38] sm:$0xff]
    %v3034 = vcombine.high %v3025, %v3025
    %3036 = vmatprep.subr.mxu0 0.0
    %3037 = vmatpush1.msra.mxu0 %v2769
    %3038 = vmatprep.subr.mxu0 0.0
    %3039 = vmatpush1.msra.mxu0 %v2770
    %3040 = vmatprep.subr.mxu0 0.0
    %3041 = vmatpush1.msra.mxu0 %v2771
    %3042 = vmatprep.subr.mxu0 0.0
    %3043 = vmatpush1.msra.mxu0 %v2772
    %3044 = vmatprep.subr.mxu0 0.0
    %3045 = vmatpush1.msra.mxu0 %v2773
    %3046 = vmatprep.subr.mxu0 0.0
    %3047 = vmatpush1.msra.mxu0 %v2774
    %3048 = vmatprep.subr.mxu0 0.0
    %3049 = vmatpush1.msra.mxu0 %v2775
    %3050 = vmatprep.subr.mxu0 0.0
    %3051 = vmatpush1.msra.mxu0 %v2776
    %3052 = vmatprep.subr.mxu0 0.0
    %3053 = vmatpush1.msra.mxu0 %v2777
    %3054 = vmatprep.subr.mxu0 0.0
    %3055 = vmatpush1.msra.mxu0 %v2778
    %3056 = vmatprep.subr.mxu0 0.0
    %3057 = vmatpush1.msra.mxu0 %v2779
    %3058 = vmatprep.subr.mxu0 0.0
    %3059 = vmatpush1.msra.mxu0 %v2780
    %3060 = vmatprep.subr.mxu0 0.0
    %3061 = vmatpush1.msra.mxu0 %v2781
    %3062 = vmatprep.subr.mxu0 0.0
    %3063 = vmatpush1.msra.mxu0 %v2782
    %3064 = vmatprep.subr.mxu0 0.0
    %3065 = vmatpush1.msra.mxu0 %v2783
    %3066 = vmatprep.subr.mxu0 0.0
    %3067 = vmatpush1.msra.mxu0 %v2784
    %3068 = vmatprep.subr.mxu0 0.0
    %3069 = vmatpush1.msra.mxu0 %v2785
    %3070 = vmatprep.subr.mxu0 0.0
    %3071 = vmatpush1.msra.mxu0 %v2786
    %3072 = vmatprep.subr.mxu0 0.0
    %3073 = vmatpush1.msra.mxu0 %v2787
    %3074 = vmatprep.subr.mxu0 0.0
    %3075 = vmatpush1.msra.mxu0 %v2788
    %3076 = vmatprep.subr.mxu0 0.0
    %3077 = vmatpush1.msra.mxu0 %v2789
    %3078 = vmatprep.subr.mxu0 0.0
    %3079 = vmatpush1.msra.mxu0 %v2790
    %3080 = vmatprep.subr.mxu0 0.0
    %3081 = vmatpush1.msra.mxu0 %v2791
    %3082 = vmatprep.subr.mxu0 0.0
    %3083 = vmatpush1.msra.mxu0 %v2792
    %3084 = vmatprep.subr.mxu0 0.0
    %3085 = vmatpush1.msra.mxu0 %v2793
    %3086 = vmatprep.subr.mxu0 0.0
    %3087 = vmatpush1.msra.mxu0 %v2794
    %3088 = vmatprep.subr.mxu0 0.0
    %3089 = vmatpush1.msra.mxu0 %v2795
    %3090 = vmatprep.subr.mxu0 0.0
    %3091 = vmatpush1.msra.mxu0 %v2796
    %3092 = vmatprep.subr.mxu0 0.0
    %3093 = vmatpush1.msra.mxu0 %v2797
    %3094 = vmatprep.subr.mxu0 0.0
    %3095 = vmatpush1.msra.mxu0 %v2798
    %3096 = vmatprep.subr.mxu0 0.0
    %3097 = vmatpush1.msra.mxu0 %v2799
    %3098 = vmatprep.subr.mxu0 0.0
    %3099 = vmatpush1.msra.mxu0 %v2800
    %3100 = vmatprep.mubr.f32.mxu0 %v3034
    %3101 = vmatmul.mubr.f32.gmra.mrb[0].mxu0 %v3025
    %v3102 = vpop.f32.mrb[0].mxu0
    %v3103 = vadd.f32 0.0, %v3102
    %v3104 = vpop.f32.mrb[0].mxu0
    %3105 = vdwg.mxu0
    %v3107 = vcombine.high %v3026, %v3026
    %3109 = vmatprep.subr.mxu0 0.0
    %3110 = vmatpush1.msra.mxu0 %v2801
    %3111 = vmatprep.subr.mxu0 0.0
    %3112 = vmatpush1.msra.mxu0 %v2802
    %3113 = vmatprep.subr.mxu0 0.0
    %3114 = vmatpush1.msra.mxu0 %v2803
    %3115 = vmatprep.subr.mxu0 0.0
    %3116 = vmatpush1.msra.mxu0 %v2804
    %3117 = vmatprep.subr.mxu0 0.0
    %3118 = vmatpush1.msra.mxu0 %v2805
    %3119 = vmatprep.subr.mxu0 0.0
    %3120 = vmatpush1.msra.mxu0 %v2806
    %3121 = vmatprep.subr.mxu0 0.0
    %3122 = vmatpush1.msra.mxu0 %v2807
    %3123 = vmatprep.subr.mxu0 0.0
    %3124 = vmatpush1.msra.mxu0 %v2808
    %3125 = vmatprep.subr.mxu0 0.0
    %3126 = vmatpush1.msra.mxu0 %v2809
    %3127 = vmatprep.subr.mxu0 0.0
    %3128 = vmatpush1.msra.mxu0 %v2810
    %3129 = vmatprep.subr.mxu0 0.0
    %3130 = vmatpush1.msra.mxu0 %v2811
    %3131 = vmatprep.subr.mxu0 0.0
    %3132 = vmatpush1.msra.mxu0 %v2812
    %3133 = vmatprep.subr.mxu0 0.0
    %3134 = vmatpush1.msra.mxu0 %v2813
    %3135 = vmatprep.subr.mxu0 0.0
    %3136 = vmatpush1.msra.mxu0 %v2814
    %3137 = vmatprep.subr.mxu0 0.0
    %3138 = vmatpush1.msra.mxu0 %v2815
    %3139 = vmatprep.subr.mxu0 0.0
    %3140 = vmatpush1.msra.mxu0 %v2816
    %3141 = vmatprep.subr.mxu0 0.0
    %3142 = vmatpush1.msra.mxu0 %v2817
    %3143 = vmatprep.subr.mxu0 0.0
    %3144 = vmatpush1.msra.mxu0 %v2818
    %3145 = vmatprep.subr.mxu0 0.0
    %3146 = vmatpush1.msra.mxu0 %v2819
    %3147 = vmatprep.subr.mxu0 0.0
    %3148 = vmatpush1.msra.mxu0 %v2820
    %3149 = vmatprep.subr.mxu0 0.0
    %3150 = vmatpush1.msra.mxu0 %v2821
    %3151 = vmatprep.subr.mxu0 0.0
    %3152 = vmatpush1.msra.mxu0 %v2822
    %3153 = vmatprep.subr.mxu0 0.0
    %3154 = vmatpush1.msra.mxu0 %v2823
    %3155 = vmatprep.subr.mxu0 0.0
    %3156 = vmatpush1.msra.mxu0 %v2824
    %3157 = vmatprep.subr.mxu0 0.0
    %3158 = vmatpush1.msra.mxu0 %v2825
    %3159 = vmatprep.subr.mxu0 0.0
    %3160 = vmatpush1.msra.mxu0 %v2826
    %3161 = vmatprep.subr.mxu0 0.0
    %3162 = vmatpush1.msra.mxu0 %v2827
    %3163 = vmatprep.subr.mxu0 0.0
    %3164 = vmatpush1.msra.mxu0 %v2828
    %3165 = vmatprep.subr.mxu0 0.0
    %3166 = vmatpush1.msra.mxu0 %v2829
    %3167 = vmatprep.subr.mxu0 0.0
    %3168 = vmatpush1.msra.mxu0 %v2830
    %3169 = vmatprep.subr.mxu0 0.0
    %3170 = vmatpush1.msra.mxu0 %v2831
    %3171 = vmatprep.subr.mxu0 0.0
    %3172 = vmatpush1.msra.mxu0 %v2832
    %3173 = vmatprep.mubr.f32.mxu0 %v3107
    %3174 = vmatmul.mubr.f32.gmra.mrb[0].mxu0 %v3026
    %v3175 = vpop.f32.mrb[0].mxu0
    %v3176 = vadd.f32 0.0, %v3175
    %v3177 = vpop.f32.mrb[0].mxu0
    %3178 = vdwg.mxu0
    %v3180 = vcombine.high %v3027, %v3027
    %3182 = vmatprep.subr.mxu0 0.0
    %3183 = vmatpush1.msra.mxu0 %v2833
    %3184 = vmatprep.subr.mxu0 0.0
    %3185 = vmatpush1.msra.mxu0 %v2834
    %3186 = vmatprep.subr.mxu0 0.0
    %3187 = vmatpush1.msra.mxu0 %v2835
    %3188 = vmatprep.subr.mxu0 0.0
    %3189 = vmatpush1.msra.mxu0 %v2836
    %3190 = vmatprep.subr.mxu0 0.0
    %3191 = vmatpush1.msra.mxu0 %v2837
    %3192 = vmatprep.subr.mxu0 0.0
    %3193 = vmatpush1.msra.mxu0 %v2838
    %3194 = vmatprep.subr.mxu0 0.0
    %3195 = vmatpush1.msra.mxu0 %v2839
    %3196 = vmatprep.subr.mxu0 0.0
    %3197 = vmatpush1.msra.mxu0 %v2840
    %3198 = vmatprep.subr.mxu0 0.0
    %3199 = vmatpush1.msra.mxu0 %v2841
    %3200 = vmatprep.subr.mxu0 0.0
    %3201 = vmatpush1.msra.mxu0 %v2842
    %3202 = vmatprep.subr.mxu0 0.0
    %3203 = vmatpush1.msra.mxu0 %v2843
    %3204 = vmatprep.subr.mxu0 0.0
    %3205 = vmatpush1.msra.mxu0 %v2844
    %3206 = vmatprep.subr.mxu0 0.0
    %3207 = vmatpush1.msra.mxu0 %v2845
    %3208 = vmatprep.subr.mxu0 0.0
    %3209 = vmatpush1.msra.mxu0 %v2846
    %3210 = vmatprep.subr.mxu0 0.0
    %3211 = vmatpush1.msra.mxu0 %v2847
    %3212 = vmatprep.subr.mxu0 0.0
    %3213 = vmatpush1.msra.mxu0 %v2848
    %3214 = vmatprep.subr.mxu0 0.0
    %3215 = vmatpush1.msra.mxu0 %v2849
    %3216 = vmatprep.subr.mxu0 0.0
    %3217 = vmatpush1.msra.mxu0 %v2850
    %3218 = vmatprep.subr.mxu0 0.0
    %3219 = vmatpush1.msra.mxu0 %v2851
    %3220 = vmatprep.subr.mxu0 0.0
    %3221 = vmatpush1.msra.mxu0 %v2852
    %3222 = vmatprep.subr.mxu0 0.0
    %3223 = vmatpush1.msra.mxu0 %v2853
    %3224 = vmatprep.subr.mxu0 0.0
    %3225 = vmatpush1.msra.mxu0 %v2854
    %3226 = vmatprep.subr.mxu0 0.0
    %3227 = vmatpush1.msra.mxu0 %v2855
    %3228 = vmatprep.subr.mxu0 0.0
    %3229 = vmatpush1.msra.mxu0 %v2856
    %3230 = vmatprep.subr.mxu0 0.0
    %3231 = vmatpush1.msra.mxu0 %v2857
    %3232 = vmatprep.subr.mxu0 0.0
    %3233 = vmatpush1.msra.mxu0 %v2858
    %3234 = vmatprep.subr.mxu0 0.0
    %3235 = vmatpush1.msra.mxu0 %v2859
    %3236 = vmatprep.subr.mxu0 0.0
    %3237 = vmatpush1.msra.mxu0 %v2860
    %3238 = vmatprep.subr.mxu0 0.0
    %3239 = vmatpush1.msra.mxu0 %v2861
    %3240 = vmatprep.subr.mxu0 0.0
    %3241 = vmatpush1.msra.mxu0 %v2862
    %3242 = vmatprep.subr.mxu0 0.0
    %3243 = vmatpush1.msra.mxu0 %v2863
    %3244 = vmatprep.subr.mxu0 0.0
    %3245 = vmatpush1.msra.mxu0 %v2864
    %3246 = vmatprep.mubr.f32.mxu0 %v3180
    %3247 = vmatmul.mubr.f32.gmra.mrb[0].mxu0 %v3027
    %v3248 = vpop.f32.mrb[0].mxu0
    %v3249 = vadd.f32 0.0, %v3248
    %v3250 = vpop.f32.mrb[0].mxu0
    %3251 = vdwg.mxu0
    %v3253 = vcombine.high %v3028, %v3028
    %3255 = vmatprep.subr.mxu0 0.0
    %3256 = vmatpush1.msra.mxu0 %v2865
    %3257 = vmatprep.subr.mxu0 0.0
    %3258 = vmatpush1.msra.mxu0 %v2866
    %3259 = vmatprep.subr.mxu0 0.0
    %3260 = vmatpush1.msra.mxu0 %v2867
    %3261 = vmatprep.subr.mxu0 0.0
    %3262 = vmatpush1.msra.mxu0 %v2868
    %3263 = vmatprep.subr.mxu0 0.0
    %3264 = vmatpush1.msra.mxu0 %v2869
    %3265 = vmatprep.subr.mxu0 0.0
    %3266 = vmatpush1.msra.mxu0 %v2870
    %3267 = vmatprep.subr.mxu0 0.0
    %3268 = vmatpush1.msra.mxu0 %v2871
    %3269 = vmatprep.subr.mxu0 0.0
    %3270 = vmatpush1.msra.mxu0 %v2872
    %3271 = vmatprep.subr.mxu0 0.0
    %3272 = vmatpush1.msra.mxu0 %v2873
    %3273 = vmatprep.subr.mxu0 0.0
    %3274 = vmatpush1.msra.mxu0 %v2874
    %3275 = vmatprep.subr.mxu0 0.0
    %3276 = vmatpush1.msra.mxu0 %v2875
    %3277 = vmatprep.subr.mxu0 0.0
    %3278 = vmatpush1.msra.mxu0 %v2876
    %3279 = vmatprep.subr.mxu0 0.0
    %3280 = vmatpush1.msra.mxu0 %v2877
    %3281 = vmatprep.subr.mxu0 0.0
    %3282 = vmatpush1.msra.mxu0 %v2878
    %3283 = vmatprep.subr.mxu0 0.0
    %3284 = vmatpush1.msra.mxu0 %v2879
    %3285 = vmatprep.subr.mxu0 0.0
    %3286 = vmatpush1.msra.mxu0 %v2880
    %3287 = vmatprep.subr.mxu0 0.0
    %3288 = vmatpush1.msra.mxu0 %v2881
    %3289 = vmatprep.subr.mxu0 0.0
    %3290 = vmatpush1.msra.mxu0 %v2882
    %3291 = vmatprep.subr.mxu0 0.0
    %3292 = vmatpush1.msra.mxu0 %v2883
    %3293 = vmatprep.subr.mxu0 0.0
    %3294 = vmatpush1.msra.mxu0 %v2884
    %3295 = vmatprep.subr.mxu0 0.0
    %3296 = vmatpush1.msra.mxu0 %v2885
    %3297 = vmatprep.subr.mxu0 0.0
    %3298 = vmatpush1.msra.mxu0 %v2886
    %3299 = vmatprep.subr.mxu0 0.0
    %3300 = vmatpush1.msra.mxu0 %v2887
    %3301 = vmatprep.subr.mxu0 0.0
    %3302 = vmatpush1.msra.mxu0 %v2888
    %3303 = vmatprep.subr.mxu0 0.0
    %3304 = vmatpush1.msra.mxu0 %v2889
    %3305 = vmatprep.subr.mxu0 0.0
    %3306 = vmatpush1.msra.mxu0 %v2890
    %3307 = vmatprep.subr.mxu0 0.0
    %3308 = vmatpush1.msra.mxu0 %v2891
    %3309 = vmatprep.subr.mxu0 0.0
    %3310 = vmatpush1.msra.mxu0 %v2892
    %3311 = vmatprep.subr.mxu0 0.0
    %3312 = vmatpush1.msra.mxu0 %v2893
    %3313 = vmatprep.subr.mxu0 0.0
    %3314 = vmatpush1.msra.mxu0 %v2894
    %3315 = vmatprep.subr.mxu0 0.0
    %3316 = vmatpush1.msra.mxu0 %v2895
    %3317 = vmatprep.subr.mxu0 0.0
    %3318 = vmatpush1.msra.mxu0 %v2896
    %3319 = vmatprep.mubr.f32.mxu0 %v3253
    %3320 = vmatmul.mubr.f32.gmra.mrb[0].mxu0 %v3028
    %v3321 = vpop.f32.mrb[0].mxu0
    %v3322 = vadd.f32 0.0, %v3321
    %v3323 = vpop.f32.mrb[0].mxu0
    %3324 = vdwg.mxu0
    %v3326 = vcombine.high %v3029, %v3029
    %3328 = vmatprep.subr.mxu0 0.0
    %3329 = vmatpush1.msra.mxu0 %v2897
    %3330 = vmatprep.subr.mxu0 0.0
    %3331 = vmatpush1.msra.mxu0 %v2898
    %3332 = vmatprep.subr.mxu0 0.0
    %3333 = vmatpush1.msra.mxu0 %v2899
    %3334 = vmatprep.subr.mxu0 0.0
    %3335 = vmatpush1.msra.mxu0 %v2900
    %3336 = vmatprep.subr.mxu0 0.0
    %3337 = vmatpush1.msra.mxu0 %v2901
    %3338 = vmatprep.subr.mxu0 0.0
    %3339 = vmatpush1.msra.mxu0 %v2902
    %3340 = vmatprep.subr.mxu0 0.0
    %3341 = vmatpush1.msra.mxu0 %v2903
    %3342 = vmatprep.subr.mxu0 0.0
    %3343 = vmatpush1.msra.mxu0 %v2904
    %3344 = vmatprep.subr.mxu0 0.0
    %3345 = vmatpush1.msra.mxu0 %v2905
    %3346 = vmatprep.subr.mxu0 0.0
    %3347 = vmatpush1.msra.mxu0 %v2906
    %3348 = vmatprep.subr.mxu0 0.0
    %3349 = vmatpush1.msra.mxu0 %v2907
    %3350 = vmatprep.subr.mxu0 0.0
    %3351 = vmatpush1.msra.mxu0 %v2908
    %3352 = vmatprep.subr.mxu0 0.0
    %3353 = vmatpush1.msra.mxu0 %v2909
    %3354 = vmatprep.subr.mxu0 0.0
    %3355 = vmatpush1.msra.mxu0 %v2910
    %3356 = vmatprep.subr.mxu0 0.0
    %3357 = vmatpush1.msra.mxu0 %v2911
    %3358 = vmatprep.subr.mxu0 0.0
    %3359 = vmatpush1.msra.mxu0 %v2912
    %3360 = vmatprep.subr.mxu0 0.0
    %3361 = vmatpush1.msra.mxu0 %v2913
    %3362 = vmatprep.subr.mxu0 0.0
    %3363 = vmatpush1.msra.mxu0 %v2914
    %3364 = vmatprep.subr.mxu0 0.0
    %3365 = vmatpush1.msra.mxu0 %v2915
    %3366 = vmatprep.subr.mxu0 0.0
    %3367 = vmatpush1.msra.mxu0 %v2916
    %3368 = vmatprep.subr.mxu0 0.0
    %3369 = vmatpush1.msra.mxu0 %v2917
    %3370 = vmatprep.subr.mxu0 0.0
    %3371 = vmatpush1.msra.mxu0 %v2918
    %3372 = vmatprep.subr.mxu0 0.0
    %3373 = vmatpush1.msra.mxu0 %v2919
    %3374 = vmatprep.subr.mxu0 0.0
    %3375 = vmatpush1.msra.mxu0 %v2920
    %3376 = vmatprep.subr.mxu0 0.0
    %3377 = vmatpush1.msra.mxu0 %v2921
    %3378 = vmatprep.subr.mxu0 0.0
    %3379 = vmatpush1.msra.mxu0 %v2922
    %3380 = vmatprep.subr.mxu0 0.0
    %3381 = vmatpush1.msra.mxu0 %v2923
    %3382 = vmatprep.subr.mxu0 0.0
    %3383 = vmatpush1.msra.mxu0 %v2924
    %3384 = vmatprep.subr.mxu0 0.0
    %3385 = vmatpush1.msra.mxu0 %v2925
    %3386 = vmatprep.subr.mxu0 0.0
    %3387 = vmatpush1.msra.mxu0 %v2926
    %3388 = vmatprep.subr.mxu0 0.0
    %3389 = vmatpush1.msra.mxu0 %v2927
    %3390 = vmatprep.subr.mxu0 0.0
    %3391 = vmatpush1.msra.mxu0 %v2928
    %3392 = vmatprep.mubr.f32.mxu0 %v3326
    %3393 = vmatmul.mubr.f32.gmra.mrb[0].mxu0 %v3029
    %v3394 = vpop.f32.mrb[0].mxu0
    %v3395 = vadd.f32 0.0, %v3394
    %v3396 = vpop.f32.mrb[0].mxu0
    %3397 = vdwg.mxu0
    %v3399 = vcombine.high %v3030, %v3030
    %3401 = vmatprep.subr.mxu0 0.0
    %3402 = vmatpush1.msra.mxu0 %v2929
    %3403 = vmatprep.subr.mxu0 0.0
    %3404 = vmatpush1.msra.mxu0 %v2930
    %3405 = vmatprep.subr.mxu0 0.0
    %3406 = vmatpush1.msra.mxu0 %v2931
    %3407 = vmatprep.subr.mxu0 0.0
    %3408 = vmatpush1.msra.mxu0 %v2932
    %3409 = vmatprep.subr.mxu0 0.0
    %3410 = vmatpush1.msra.mxu0 %v2933
    %3411 = vmatprep.subr.mxu0 0.0
    %3412 = vmatpush1.msra.mxu0 %v2934
    %3413 = vmatprep.subr.mxu0 0.0
    %3414 = vmatpush1.msra.mxu0 %v2935
    %3415 = vmatprep.subr.mxu0 0.0
    %3416 = vmatpush1.msra.mxu0 %v2936
    %3417 = vmatprep.subr.mxu0 0.0
    %3418 = vmatpush1.msra.mxu0 %v2937
    %3419 = vmatprep.subr.mxu0 0.0
    %3420 = vmatpush1.msra.mxu0 %v2938
    %3421 = vmatprep.subr.mxu0 0.0
    %3422 = vmatpush1.msra.mxu0 %v2939
    %3423 = vmatprep.subr.mxu0 0.0
    %3424 = vmatpush1.msra.mxu0 %v2940
    %3425 = vmatprep.subr.mxu0 0.0
    %3426 = vmatpush1.msra.mxu0 %v2941
    %3427 = vmatprep.subr.mxu0 0.0
    %3428 = vmatpush1.msra.mxu0 %v2942
    %3429 = vmatprep.subr.mxu0 0.0
    %3430 = vmatpush1.msra.mxu0 %v2943
    %3431 = vmatprep.subr.mxu0 0.0
    %3432 = vmatpush1.msra.mxu0 %v2944
    %3433 = vmatprep.subr.mxu0 0.0
    %3434 = vmatpush1.msra.mxu0 %v2945
    %3435 = vmatprep.subr.mxu0 0.0
    %3436 = vmatpush1.msra.mxu0 %v2946
    %3437 = vmatprep.subr.mxu0 0.0
    %3438 = vmatpush1.msra.mxu0 %v2947
    %3439 = vmatprep.subr.mxu0 0.0
    %3440 = vmatpush1.msra.mxu0 %v2948
    %3441 = vmatprep.subr.mxu0 0.0
    %3442 = vmatpush1.msra.mxu0 %v2949
    %3443 = vmatprep.subr.mxu0 0.0
    %3444 = vmatpush1.msra.mxu0 %v2950
    %3445 = vmatprep.subr.mxu0 0.0
    %3446 = vmatpush1.msra.mxu0 %v2951
    %3447 = vmatprep.subr.mxu0 0.0
    %3448 = vmatpush1.msra.mxu0 %v2952
    %3449 = vmatprep.subr.mxu0 0.0
    %3450 = vmatpush1.msra.mxu0 %v2953
    %3451 = vmatprep.subr.mxu0 0.0
    %3452 = vmatpush1.msra.mxu0 %v2954
    %3453 = vmatprep.subr.mxu0 0.0
    %3454 = vmatpush1.msra.mxu0 %v2955
    %3455 = vmatprep.subr.mxu0 0.0
    %3456 = vmatpush1.msra.mxu0 %v2956
    %3457 = vmatprep.subr.mxu0 0.0
    %3458 = vmatpush1.msra.mxu0 %v2957
    %3459 = vmatprep.subr.mxu0 0.0
    %3460 = vmatpush1.msra.mxu0 %v2958
    %3461 = vmatprep.subr.mxu0 0.0
    %3462 = vmatpush1.msra.mxu0 %v2959
    %3463 = vmatprep.subr.mxu0 0.0
    %3464 = vmatpush1.msra.mxu0 %v2960
    %3465 = vmatprep.mubr.f32.mxu0 %v3399
    %3466 = vmatmul.mubr.f32.gmra.mrb[0].mxu0 %v3030
    %v3467 = vpop.f32.mrb[0].mxu0
    %v3468 = vadd.f32 0.0, %v3467
    %v3469 = vpop.f32.mrb[0].mxu0
    %3470 = vdwg.mxu0
    %v3472 = vcombine.high %v3031, %v3031
    %3474 = vmatprep.subr.mxu0 0.0
    %3475 = vmatpush1.msra.mxu0 %v2961
    %3476 = vmatprep.subr.mxu0 0.0
    %3477 = vmatpush1.msra.mxu0 %v2962
    %3478 = vmatprep.subr.mxu0 0.0
    %3479 = vmatpush1.msra.mxu0 %v2963
    %3480 = vmatprep.subr.mxu0 0.0
    %3481 = vmatpush1.msra.mxu0 %v2964
    %3482 = vmatprep.subr.mxu0 0.0
    %3483 = vmatpush1.msra.mxu0 %v2965
    %3484 = vmatprep.subr.mxu0 0.0
    %3485 = vmatpush1.msra.mxu0 %v2966
    %3486 = vmatprep.subr.mxu0 0.0
    %3487 = vmatpush1.msra.mxu0 %v2967
    %3488 = vmatprep.subr.mxu0 0.0
    %3489 = vmatpush1.msra.mxu0 %v2968
    %3490 = vmatprep.subr.mxu0 0.0
    %3491 = vmatpush1.msra.mxu0 %v2969
    %3492 = vmatprep.subr.mxu0 0.0
    %3493 = vmatpush1.msra.mxu0 %v2970
    %3494 = vmatprep.subr.mxu0 0.0
    %3495 = vmatpush1.msra.mxu0 %v2971
    %3496 = vmatprep.subr.mxu0 0.0
    %3497 = vmatpush1.msra.mxu0 %v2972
    %3498 = vmatprep.subr.mxu0 0.0
    %3499 = vmatpush1.msra.mxu0 %v2973
    %3500 = vmatprep.subr.mxu0 0.0
    %3501 = vmatpush1.msra.mxu0 %v2974
    %3502 = vmatprep.subr.mxu0 0.0
    %3503 = vmatpush1.msra.mxu0 %v2975
    %3504 = vmatprep.subr.mxu0 0.0
    %3505 = vmatpush1.msra.mxu0 %v2976
    %3506 = vmatprep.subr.mxu0 0.0
    %3507 = vmatpush1.msra.mxu0 %v2977
    %3508 = vmatprep.subr.mxu0 0.0
    %3509 = vmatpush1.msra.mxu0 %v2978
    %3510 = vmatprep.subr.mxu0 0.0
    %3511 = vmatpush1.msra.mxu0 %v2979
    %3512 = vmatprep.subr.mxu0 0.0
    %3513 = vmatpush1.msra.mxu0 %v2980
    %3514 = vmatprep.subr.mxu0 0.0
    %3515 = vmatpush1.msra.mxu0 %v2981
    %3516 = vmatprep.subr.mxu0 0.0
    %3517 = vmatpush1.msra.mxu0 %v2982
    %3518 = vmatprep.subr.mxu0 0.0
    %3519 = vmatpush1.msra.mxu0 %v2983
    %3520 = vmatprep.subr.mxu0 0.0
    %3521 = vmatpush1.msra.mxu0 %v2984
    %3522 = vmatprep.subr.mxu0 0.0
    %3523 = vmatpush1.msra.mxu0 %v2985
    %3524 = vmatprep.subr.mxu0 0.0
    %3525 = vmatpush1.msra.mxu0 %v2986
    %3526 = vmatprep.subr.mxu0 0.0
    %3527 = vmatpush1.msra.mxu0 %v2987
    %3528 = vmatprep.subr.mxu0 0.0
    %3529 = vmatpush1.msra.mxu0 %v2988
    %3530 = vmatprep.subr.mxu0 0.0
    %3531 = vmatpush1.msra.mxu0 %v2989
    %3532 = vmatprep.subr.mxu0 0.0
    %3533 = vmatpush1.msra.mxu0 %v2990
    %3534 = vmatprep.subr.mxu0 0.0
    %3535 = vmatpush1.msra.mxu0 %v2991
    %3536 = vmatprep.subr.mxu0 0.0
    %3537 = vmatpush1.msra.mxu0 %v2992
    %3538 = vmatprep.mubr.f32.mxu0 %v3472
    %3539 = vmatmul.mubr.f32.gmra.mrb[0].mxu0 %v3031
    %v3540 = vpop.f32.mrb[0].mxu0
    %v3541 = vadd.f32 0.0, %v3540
    %v3542 = vpop.f32.mrb[0].mxu0
    %3543 = vdwg.mxu0
    %v3545 = vcombine.high %v3032, %v3032
    %3547 = vmatprep.subr.mxu0 0.0
    %3548 = vmatpush1.msra.mxu0 %v2993
    %3549 = vmatprep.subr.mxu0 0.0
    %3550 = vmatpush1.msra.mxu0 %v2994
    %3551 = vmatprep.subr.mxu0 0.0
    %3552 = vmatpush1.msra.mxu0 %v2995
    %3553 = vmatprep.subr.mxu0 0.0
    %3554 = vmatpush1.msra.mxu0 %v2996
    %3555 = vmatprep.subr.mxu0 0.0
    %3556 = vmatpush1.msra.mxu0 %v2997
    %3557 = vmatprep.subr.mxu0 0.0
    %3558 = vmatpush1.msra.mxu0 %v2998
    %3559 = vmatprep.subr.mxu0 0.0
    %3560 = vmatpush1.msra.mxu0 %v2999
    %3561 = vmatprep.subr.mxu0 0.0
    %3562 = vmatpush1.msra.mxu0 %v3000
    %3563 = vmatprep.subr.mxu0 0.0
    %3564 = vmatpush1.msra.mxu0 %v3001
    %3565 = vmatprep.subr.mxu0 0.0
    %3566 = vmatpush1.msra.mxu0 %v3002
    %3567 = vmatprep.subr.mxu0 0.0
    %3568 = vmatpush1.msra.mxu0 %v3003
    %3569 = vmatprep.subr.mxu0 0.0
    %3570 = vmatpush1.msra.mxu0 %v3004
    %3571 = vmatprep.subr.mxu0 0.0
    %3572 = vmatpush1.msra.mxu0 %v3005
    %3573 = vmatprep.subr.mxu0 0.0
    %3574 = vmatpush1.msra.mxu0 %v3006
    %3575 = vmatprep.subr.mxu0 0.0
    %3576 = vmatpush1.msra.mxu0 %v3007
    %3577 = vmatprep.subr.mxu0 0.0
    %3578 = vmatpush1.msra.mxu0 %v3008
    %3579 = vmatprep.subr.mxu0 0.0
    %3580 = vmatpush1.msra.mxu0 %v3009
    %3581 = vmatprep.subr.mxu0 0.0
    %3582 = vmatpush1.msra.mxu0 %v3010
    %3583 = vmatprep.subr.mxu0 0.0
    %3584 = vmatpush1.msra.mxu0 %v3011
    %3585 = vmatprep.subr.mxu0 0.0
    %3586 = vmatpush1.msra.mxu0 %v3012
    %3587 = vmatprep.subr.mxu0 0.0
    %3588 = vmatpush1.msra.mxu0 %v3013
    %3589 = vmatprep.subr.mxu0 0.0
    %3590 = vmatpush1.msra.mxu0 %v3014
    %3591 = vmatprep.subr.mxu0 0.0
    %3592 = vmatpush1.msra.mxu0 %v3015
    %3593 = vmatprep.subr.mxu0 0.0
    %3594 = vmatpush1.msra.mxu0 %v3016
    %3595 = vmatprep.subr.mxu0 0.0
    %3596 = vmatpush1.msra.mxu0 %v3017
    %3597 = vmatprep.subr.mxu0 0.0
    %3598 = vmatpush1.msra.mxu0 %v3018
    %3599 = vmatprep.subr.mxu0 0.0
    %3600 = vmatpush1.msra.mxu0 %v3019
    %3601 = vmatprep.subr.mxu0 0.0
    %3602 = vmatpush1.msra.mxu0 %v3020
    %3603 = vmatprep.subr.mxu0 0.0
    %3604 = vmatpush1.msra.mxu0 %v3021
    %3605 = vmatprep.subr.mxu0 0.0
    %3606 = vmatpush1.msra.mxu0 %v3022
    %3607 = vmatprep.subr.mxu0 0.0
    %3608 = vmatpush1.msra.mxu0 %v3023
    %3609 = vmatprep.subr.mxu0 0.0
    %3610 = vmatpush1.msra.mxu0 %v3024
    %3611 = vmatprep.mubr.f32.mxu0 %v3545
    %3612 = vmatmul.mubr.f32.gmra.mrb[0].mxu0 %v3032
    %v3613 = vpop.f32.mrb[0].mxu0
    %v3614 = vadd.f32 0.0, %v3613
    %v3615 = vpop.f32.mrb[0].mxu0
    %3616 = vdwg.mxu0
    %vm3617 = vcmask 519168
    %3618 = vst.msk [vmem:[#allocation5] sm:$0xf] %vm3617, %v3103
    %3619 = vst.msk [vmem:[#allocation5 + $0x4] sm:$0xf] %vm3617, %v3176
    %3620 = vst.msk [vmem:[#allocation5 + $0x8] sm:$0xf] %vm3617, %v3249
    %3621 = vst.msk [vmem:[#allocation5 + $0xc] sm:$0xf] %vm3617, %v3322
    %3622 = vst.msk [vmem:[#allocation5 + $0x10] sm:$0xf] %vm3617, %v3395
    %3623 = vst.msk [vmem:[#allocation5 + $0x14] sm:$0xf] %vm3617, %v3468
    %3624 = vst.msk [vmem:[#allocation5 + $0x18] sm:$0xf] %vm3617, %v3541
    %3625 = vst.msk [vmem:[#allocation5 + $0x1c] sm:$0xf] %vm3617, %v3614
    // Predicated region
    $region14: #{tpu_custom_call.1} parent=1 // pred_check
      _
    $region15: #{tpu_custom_call.1} parent=1 // pred_check_branch
      %3627 = sbr.rel (0) target = $region17
    $region16: #{tpu_custom_call.1} parent=1 // pred_region
      %s3629 = ssub.s32 512, 512
      %3630 = vsyncadd [#allocation4], %s3629
      %s3631 = sshll.u32 [#allocation5], 4
      %s3632 = int_to_ptr.vmem [resolvable:$true] %s3631
      %3637 = dma.vmem_to_hbm [thread:$0]  %s3632, 512, %s2, [#allocation4], 64, 64, 4
    $region17: #{tpu_custom_call.1} parent=1 // pred_fallthru
      _
    // Predicated region
    $region18: #{tpu_custom_call.1} parent=1 // pred_check
      _
    $region19: #{tpu_custom_call.1} parent=1 // pred_check_branch
      %3639 = sbr.rel (0) target = $region21
    $region20: #{tpu_custom_call.1} parent=1 // pred_region
      %3640 = dma.done [#allocation4], 512
    $region21: #{tpu_custom_call.1} parent=1 // pred_fallthru
      _
    %3641 = vsyncpa [#allocation3], 1
    %3642 = vsyncpa [#allocation4], 1

</llo_original>
